<compile_context>
chip_gen: v7x
topology: tpu7x:2x2x1
jax: 0.10.0
libtpu: 0.0.40
codegen_flags: <defaults>
</compile_context>

<pallas_src>
import functools

import jax
import jax.numpy as jnp
from jax.experimental import pallas as pl
from jax.experimental.pallas import tpu as pltpu


# ----------------------------------------------------------------------------
# Fused kernel: stacked LSTM over the full sequence + classifier
# ----------------------------------------------------------------------------
def fused_olstm_kernel(x_ref, wcat_ref, b_ref, wcls_ref, bcls_ref, out_ref):
    """Single-invocation fused oLSTM forward.

    x_ref    : (seq, Bp, D)      padded time-major input (real data in [:batch, :ninp])
    wcat_ref : (L, 2D, 4D)       per-layer [Wih^T ; Whh^T], gate k at cols [k*D, k*D+H)
    b_ref    : (L, 1, 4D)        per-layer (b_ih + b_hh), padded gates get 0 bias
    wcls_ref : (D, D)            classifier W^T, real block at [0:H, 0:nout]
    bcls_ref : (1, D)            classifier bias, real part at [0:nout]
    out_ref  : (Bp, D)           padded logits; real result in [:batch, :nout]
    """
    seq = x_ref.shape[0]
    L = wcat_ref.shape[0]
    Bp, D = out_ref.shape

    # Weights / biases resident once (hoisted out of the unrolled loops).
    wcats = [wcat_ref[l] for l in range(L)]     # each (2D, 4D)
    biases = [b_ref[l] for l in range(L)]       # each (1, 4D)

    # Recurrent state kept as values (vreg/VMEM resident), f32.
    h = [jnp.zeros((Bp, D), jnp.float32) for _ in range(L)]
    c = [jnp.zeros((Bp, D), jnp.float32) for _ in range(L)]

    # Fully unrolled time loop (seq is small and static) -> LLO sees everything.
    for t in range(seq):
        inp = x_ref[t]                          # (Bp, D)
        for l in range(L):
            # Merged gate matmul: concat is lane-aligned (two full 128-lane vregs).
            xh = jnp.concatenate([inp, h[l]], axis=-1)          # (Bp, 2D)
            gates = (
                jnp.dot(xh, wcats[l], preferred_element_type=jnp.float32)
                + biases[l]
            )                                                   # (Bp, 4D)

            # PyTorch gate order: input, forget, cell(g), output.
            # Each slice is a full 128-lane-aligned block -> no masked ops.
            i_g = jax.nn.sigmoid(gates[:, 0 * D:1 * D])
            f_g = jax.nn.sigmoid(gates[:, 1 * D:2 * D])
            g_g = jnp.tanh(gates[:, 2 * D:3 * D])
            o_g = jax.nn.sigmoid(gates[:, 3 * D:4 * D])

            c[l] = f_g * c[l] + i_g * g_g
            h[l] = o_g * jnp.tanh(c[l])
            inp = h[l]

    # Classifier on the last timestep of the top layer (already resident).
    out_ref[...] = (
        jnp.dot(h[L - 1], wcls_ref[...], preferred_element_type=jnp.float32)
        + bcls_ref[...]
    ).astype(out_ref.dtype)


# ----------------------------------------------------------------------------
# Host-side parameter packing (padding + gate-matmul merge)
# ----------------------------------------------------------------------------
def prepare_params(lstm_params, cls_w, cls_b, D=128):
    """Pack PyTorch-layout LSTM + Linear params into padded fused-kernel params."""
    L = len(lstm_params)
    nhid = lstm_params[0][1].shape[1]           # whh: (4H, H)
    nout = cls_w.shape[0]
    assert nhid <= D and nout <= D

    wcat = jnp.zeros((L, 2 * D, 4 * D), jnp.float32)
    bias = jnp.zeros((L, 1, 4 * D), jnp.float32)
    for l, (wih, whh, bih, bhh) in enumerate(lstm_params):
        in_size = wih.shape[1]
        assert in_size <= D
        wih_t = wih.T                            # (in_size, 4H)
        whh_t = whh.T                            # (H, 4H)
        bsum = bih + bhh
        for k in range(4):                       # gate k -> columns [k*D, k*D+H)
            wcat = wcat.at[l, 0:in_size, k * D:k * D + nhid].set(
                wih_t[:, k * nhid:(k + 1) * nhid])
            wcat = wcat.at[l, D:D + nhid, k * D:k * D + nhid].set(
                whh_t[:, k * nhid:(k + 1) * nhid])
            bias = bias.at[l, 0, k * D:k * D + nhid].set(
                bsum[k * nhid:(k + 1) * nhid])

    wcls_t = jnp.zeros((D, D), jnp.float32).at[0:nhid, 0:nout].set(cls_w.T)
    bcls = jnp.zeros((1, D), jnp.float32).at[0, 0:nout].set(cls_b)
    return wcat, bias, wcls_t, bcls


# ----------------------------------------------------------------------------
# Forward wrapper
# ----------------------------------------------------------------------------
@functools.partial(jax.jit, static_argnames=("nout",))
def olstm_forward(x, wcat, bias, wcls_t, bcls, *, nout):
    """x: (seq, batch, ninp) time-major -> (batch, nout) logits."""
    seq, batch, ninp = x.shape
    L = wcat.shape[0]
    D = wcls_t.shape[0]
    Bp = max(8, ((batch + 7) // 8) * 8)          # sublane-aligned batch

    x_pad = jnp.zeros((seq, Bp, D), jnp.float32).at[:, :batch, :ninp].set(x)

    out_pad = pl.pallas_call(
        fused_olstm_kernel,
        out_shape=jax.ShapeDtypeStruct((Bp, D), jnp.float32),
        grid=(1,),
        in_specs=[
            pl.BlockSpec((seq, Bp, D), lambda i: (0, 0, 0)),
            pl.BlockSpec((L, 2 * D, 4 * D), lambda i: (0, 0, 0)),
            pl.BlockSpec((L, 1, 4 * D), lambda i: (0, 0, 0)),
            pl.BlockSpec((D, D), lambda i: (0, 0)),
            pl.BlockSpec((1, D), lambda i: (0, 0)),
        ],
        out_specs=pl.BlockSpec((Bp, D), lambda i: (0, 0)),
        compiler_params=pltpu.CompilerParams(
            dimension_semantics=("arbitrary",),
        ),
    )(x_pad, wcat, bias, wcls_t, bcls)

    return out_pad[:batch, :nout]


# ----------------------------------------------------------------------------
# Pure-JAX reference (for verification)
# ----------------------------------------------------------------------------
def olstm_reference(x, lstm_params, cls_w, cls_b):
    h_seq = x
    for (wih, whh, bih, bhh) in lstm_params:
        seq, B, _ = h_seq.shape
        H = wih.shape[0] // 4
        h = jnp.zeros((B, H), jnp.float32)
        c = jnp.zeros((B, H), jnp.float32)
        outs = []
        for t in range(seq):
            gates = h_seq[t] @ wih.T + bih + h @ whh.T + bhh
            i = jax.nn.sigmoid(gates[:, 0 * H:1 * H])
            f = jax.nn.sigmoid(gates[:, 1 * H:2 * H])
            g = jnp.tanh(gates[:, 2 * H:3 * H])
            o = jax.nn.sigmoid(gates[:, 3 * H:4 * H])
            c = f * c + i * g
            h = o * jnp.tanh(c)
            outs.append(h)
        h_seq = jnp.stack(outs, axis=0)
    return h_seq[-1] @ cls_w.T + cls_b


# ----------------------------------------------------------------------------
# Main
# ----------------------------------------------------------------------------
if __name__ == "__main__":
    # Shapes consistent with the module: input (seq, batch, ninp) -> (batch, nout)
    ninp, nhid, nlayers, nout = 16, 32, 2, 10
    seq, batch = 8, 4

    key = jax.random.PRNGKey(0)
    keys = iter(jax.random.split(key, 4 * nlayers + 3))

    k = 1.0 / jnp.sqrt(nhid)
    lstm_params = []
    for layer in range(nlayers):
        in_size = ninp if layer == 0 else nhid
        wih = jax.random.uniform(next(keys), (4 * nhid, in_size), jnp.float32, -k, k)
        whh = jax.random.uniform(next(keys), (4 * nhid, nhid), jnp.float32, -k, k)
        bih = jax.random.uniform(next(keys), (4 * nhid,), jnp.float32, -k, k)
        bhh = jax.random.uniform(next(keys), (4 * nhid,), jnp.float32, -k, k)
        lstm_params.append((wih, whh, bih, bhh))

    # classifier weight: kaiming_normal_ (fan_in = nhid, gain = sqrt(2))
    cls_w = jax.random.normal(next(keys), (nout, nhid), jnp.float32) * jnp.sqrt(2.0 / nhid)
    cls_b = jax.random.uniform(next(keys), (nout,), jnp.float32, -k, k)

    x = jax.random.normal(next(keys), (seq, batch, ninp), jnp.float32)

    wcat, bias, wcls_t, bcls = prepare_params(lstm_params, cls_w, cls_b)

    out = olstm_forward(x, wcat, bias, wcls_t, bcls, nout=nout)
    out = jax.block_until_ready(out)

    ref = olstm_reference(x, lstm_params, cls_w, cls_b)
    assert out.shape == (batch, nout), out.shape
    assert jnp.allclose(out, ref, atol=1e-4, rtol=1e-4), (
        float(jnp.max(jnp.abs(out - ref)))
    )

    print("KERNEL_OK")
</pallas_src>

<mosaic_0001>
module attributes {stable_mosaic.version = 11 : i64} {
  func.func @fused_olstm_kernel(%arg0: i32, %arg1: memref<8x8x128xf32, #tpu.memory_space<vmem>>, %arg2: memref<2x256x512xf32, #tpu.memory_space<vmem>>, %arg3: memref<2x1x512xf32, #tpu.memory_space<vmem>>, %arg4: memref<128x128xf32, #tpu.memory_space<vmem>>, %arg5: memref<1x128xf32, #tpu.memory_space<vmem>>, %arg6: memref<8x128xf32, #tpu.memory_space<vmem>>) attributes {dimension_semantics = [#tpu.dimension_semantics<arbitrary>], iteration_bounds = array<i64: 1>, scalar_prefetch = 0 : i64, scratch_operands = 0 : i64, tpu.core_type = #tpu.core_type<tc>, window_params = [{pipeline_mode = #tpu.pipeline_mode<synchronous>, transform_indices = @transform_0, window_bounds = array<i64: 8, 8, 128>}, {pipeline_mode = #tpu.pipeline_mode<synchronous>, transform_indices = @transform_1, window_bounds = array<i64: 2, 256, 512>}, {pipeline_mode = #tpu.pipeline_mode<synchronous>, transform_indices = @transform_2, window_bounds = array<i64: 2, 1, 512>}, {pipeline_mode = #tpu.pipeline_mode<synchronous>, transform_indices = @transform_3, window_bounds = array<i64: 128, 128>}, {pipeline_mode = #tpu.pipeline_mode<synchronous>, transform_indices = @transform_4, window_bounds = array<i64: 1, 128>}, {pipeline_mode = #tpu.pipeline_mode<synchronous>, transform_indices = @transform_5, window_bounds = array<i64: 8, 128>}]} {
    %c0 = arith.constant 0 : index
    %c0_0 = arith.constant 0 : index
    %c0_1 = arith.constant 0 : index
    %0 = vector.load %arg2[%c0, %c0_0, %c0_1] : memref<2x256x512xf32, #tpu.memory_space<vmem>>, vector<1x256x512xf32>
    %1 = vector.shape_cast %0 : vector<1x256x512xf32> to vector<256x512xf32>
    %c1 = arith.constant 1 : index
    %c0_2 = arith.constant 0 : index
    %c0_3 = arith.constant 0 : index
    %2 = vector.load %arg2[%c1, %c0_2, %c0_3] : memref<2x256x512xf32, #tpu.memory_space<vmem>>, vector<1x256x512xf32>
    %3 = vector.shape_cast %2 : vector<1x256x512xf32> to vector<256x512xf32>
    %c0_4 = arith.constant 0 : index
    %c0_5 = arith.constant 0 : index
    %c0_6 = arith.constant 0 : index
    %4 = vector.load %arg3[%c0_4, %c0_5, %c0_6] : memref<2x1x512xf32, #tpu.memory_space<vmem>>, vector<1x1x512xf32>
    %5 = vector.shape_cast %4 : vector<1x1x512xf32> to vector<1x512xf32>
    %c1_7 = arith.constant 1 : index
    %c0_8 = arith.constant 0 : index
    %c0_9 = arith.constant 0 : index
    %6 = vector.load %arg3[%c1_7, %c0_8, %c0_9] : memref<2x1x512xf32, #tpu.memory_space<vmem>>, vector<1x1x512xf32>
    %7 = vector.shape_cast %6 : vector<1x1x512xf32> to vector<1x512xf32>
    %cst = arith.constant 0.000000e+00 : f32
    %8 = vector.broadcast %cst : f32 to vector<8x128xf32>
    %cst_10 = arith.constant 0.000000e+00 : f32
    %9 = vector.broadcast %cst_10 : f32 to vector<8x128xf32>
    %cst_11 = arith.constant 0.000000e+00 : f32
    %10 = vector.broadcast %cst_11 : f32 to vector<8x128xf32>
    %cst_12 = arith.constant 0.000000e+00 : f32
    %11 = vector.broadcast %cst_12 : f32 to vector<8x128xf32>
    %c0_13 = arith.constant 0 : index
    %c0_14 = arith.constant 0 : index
    %c0_15 = arith.constant 0 : index
    %12 = vector.load %arg1[%c0_13, %c0_14, %c0_15] : memref<8x8x128xf32, #tpu.memory_space<vmem>>, vector<1x8x128xf32>
    %13 = vector.shape_cast %12 : vector<1x8x128xf32> to vector<8x128xf32>
    %14 = tpu.concatenate %13, %8 in 1 : vector<8x128xf32>, vector<8x128xf32> -> vector<8x256xf32>
    %cst_16 = arith.constant dense<0.000000e+00> : vector<8x512xf32>
    %15 = tpu.matmul %14, %1, %cst_16 {dimension_numbers = #tpu.dot_dimension_numbers<[1], [0], [0], [1], [0, 0, 1, 1], [], []>} : vector<8x256xf32>, vector<256x512xf32>, vector<8x512xf32> -> vector<8x512xf32>
    %16 = vector.broadcast %5 : vector<1x512xf32> to vector<8x512xf32>
    %17 = arith.addf %15, %16 : vector<8x512xf32>
    %18 = vector.extract_strided_slice %17 {offsets = [0, 0], sizes = [8, 128], strides = [1, 1]} : vector<8x512xf32> to vector<8x128xf32>
    %19 = arith.negf %18 : vector<8x128xf32>
    %20 = math.exp %19 : vector<8x128xf32>
    %cst_17 = arith.constant 1.000000e+00 : f32
    %21 = vector.broadcast %cst_17 : f32 to vector<8x128xf32>
    %22 = arith.addf %21, %20 : vector<8x128xf32>
    %23 = arith.divf %21, %22 : vector<8x128xf32>
    %24 = vector.extract_strided_slice %17 {offsets = [0, 128], sizes = [8, 128], strides = [1, 1]} : vector<8x512xf32> to vector<8x128xf32>
    %25 = arith.negf %24 : vector<8x128xf32>
    %26 = math.exp %25 : vector<8x128xf32>
    %cst_18 = arith.constant 1.000000e+00 : f32
    %27 = vector.broadcast %cst_18 : f32 to vector<8x128xf32>
    %28 = arith.addf %27, %26 : vector<8x128xf32>
    %29 = arith.divf %27, %28 : vector<8x128xf32>
    %30 = vector.extract_strided_slice %17 {offsets = [0, 256], sizes = [8, 128], strides = [1, 1]} : vector<8x512xf32> to vector<8x128xf32>
    %31 = math.tanh %30 : vector<8x128xf32>
    %32 = vector.extract_strided_slice %17 {offsets = [0, 384], sizes = [8, 128], strides = [1, 1]} : vector<8x512xf32> to vector<8x128xf32>
    %33 = arith.negf %32 : vector<8x128xf32>
    %34 = math.exp %33 : vector<8x128xf32>
    %cst_19 = arith.constant 1.000000e+00 : f32
    %35 = vector.broadcast %cst_19 : f32 to vector<8x128xf32>
    %36 = arith.addf %35, %34 : vector<8x128xf32>
    %37 = arith.divf %35, %36 : vector<8x128xf32>
    %38 = arith.mulf %29, %10 : vector<8x128xf32>
    %39 = arith.mulf %23, %31 : vector<8x128xf32>
    %40 = arith.addf %38, %39 : vector<8x128xf32>
    %41 = math.tanh %40 : vector<8x128xf32>
    %42 = arith.mulf %37, %41 : vector<8x128xf32>
    %43 = tpu.concatenate %42, %9 in 1 : vector<8x128xf32>, vector<8x128xf32> -> vector<8x256xf32>
    %cst_20 = arith.constant dense<0.000000e+00> : vector<8x512xf32>
    %44 = tpu.matmul %43, %3, %cst_20 {dimension_numbers = #tpu.dot_dimension_numbers<[1], [0], [0], [1], [0, 0, 1, 1], [], []>} : vector<8x256xf32>, vector<256x512xf32>, vector<8x512xf32> -> vector<8x512xf32>
    %45 = vector.broadcast %7 : vector<1x512xf32> to vector<8x512xf32>
    %46 = arith.addf %44, %45 : vector<8x512xf32>
    %47 = vector.extract_strided_slice %46 {offsets = [0, 0], sizes = [8, 128], strides = [1, 1]} : vector<8x512xf32> to vector<8x128xf32>
    %48 = arith.negf %47 : vector<8x128xf32>
    %49 = math.exp %48 : vector<8x128xf32>
    %cst_21 = arith.constant 1.000000e+00 : f32
    %50 = vector.broadcast %cst_21 : f32 to vector<8x128xf32>
    %51 = arith.addf %50, %49 : vector<8x128xf32>
    %52 = arith.divf %50, %51 : vector<8x128xf32>
    %53 = vector.extract_strided_slice %46 {offsets = [0, 128], sizes = [8, 128], strides = [1, 1]} : vector<8x512xf32> to vector<8x128xf32>
    %54 = arith.negf %53 : vector<8x128xf32>
    %55 = math.exp %54 : vector<8x128xf32>
    %cst_22 = arith.constant 1.000000e+00 : f32
    %56 = vector.broadcast %cst_22 : f32 to vector<8x128xf32>
    %57 = arith.addf %56, %55 : vector<8x128xf32>
    %58 = arith.divf %56, %57 : vector<8x128xf32>
    %59 = vector.extract_strided_slice %46 {offsets = [0, 256], sizes = [8, 128], strides = [1, 1]} : vector<8x512xf32> to vector<8x128xf32>
    %60 = math.tanh %59 : vector<8x128xf32>
    %61 = vector.extract_strided_slice %46 {offsets = [0, 384], sizes = [8, 128], strides = [1, 1]} : vector<8x512xf32> to vector<8x128xf32>
    %62 = arith.negf %61 : vector<8x128xf32>
    %63 = math.exp %62 : vector<8x128xf32>
    %cst_23 = arith.constant 1.000000e+00 : f32
    %64 = vector.broadcast %cst_23 : f32 to vector<8x128xf32>
    %65 = arith.addf %64, %63 : vector<8x128xf32>
    %66 = arith.divf %64, %65 : vector<8x128xf32>
    %67 = arith.mulf %58, %11 : vector<8x128xf32>
    %68 = arith.mulf %52, %60 : vector<8x128xf32>
    %69 = arith.addf %67, %68 : vector<8x128xf32>
    %70 = math.tanh %69 : vector<8x128xf32>
    %71 = arith.mulf %66, %70 : vector<8x128xf32>
    %c1_24 = arith.constant 1 : index
    %c0_25 = arith.constant 0 : index
    %c0_26 = arith.constant 0 : index
    %72 = vector.load %arg1[%c1_24, %c0_25, %c0_26] : memref<8x8x128xf32, #tpu.memory_space<vmem>>, vector<1x8x128xf32>
    %73 = vector.shape_cast %72 : vector<1x8x128xf32> to vector<8x128xf32>
    %74 = tpu.concatenate %73, %42 in 1 : vector<8x128xf32>, vector<8x128xf32> -> vector<8x256xf32>
    %cst_27 = arith.constant dense<0.000000e+00> : vector<8x512xf32>
    %75 = tpu.matmul %74, %1, %cst_27 {dimension_numbers = #tpu.dot_dimension_numbers<[1], [0], [0], [1], [0, 0, 1, 1], [], []>} : vector<8x256xf32>, vector<256x512xf32>, vector<8x512xf32> -> vector<8x512xf32>
    %76 = vector.broadcast %5 : vector<1x512xf32> to vector<8x512xf32>
    %77 = arith.addf %75, %76 : vector<8x512xf32>
    %78 = vector.extract_strided_slice %77 {offsets = [0, 0], sizes = [8, 128], strides = [1, 1]} : vector<8x512xf32> to vector<8x128xf32>
    %79 = arith.negf %78 : vector<8x128xf32>
    %80 = math.exp %79 : vector<8x128xf32>
    %cst_28 = arith.constant 1.000000e+00 : f32
    %81 = vector.broadcast %cst_28 : f32 to vector<8x128xf32>
    %82 = arith.addf %81, %80 : vector<8x128xf32>
    %83 = arith.divf %81, %82 : vector<8x128xf32>
    %84 = vector.extract_strided_slice %77 {offsets = [0, 128], sizes = [8, 128], strides = [1, 1]} : vector<8x512xf32> to vector<8x128xf32>
    %85 = arith.negf %84 : vector<8x128xf32>
    %86 = math.exp %85 : vector<8x128xf32>
    %cst_29 = arith.constant 1.000000e+00 : f32
    %87 = vector.broadcast %cst_29 : f32 to vector<8x128xf32>
    %88 = arith.addf %87, %86 : vector<8x128xf32>
    %89 = arith.divf %87, %88 : vector<8x128xf32>
    %90 = vector.extract_strided_slice %77 {offsets = [0, 256], sizes = [8, 128], strides = [1, 1]} : vector<8x512xf32> to vector<8x128xf32>
    %91 = math.tanh %90 : vector<8x128xf32>
    %92 = vector.extract_strided_slice %77 {offsets = [0, 384], sizes = [8, 128], strides = [1, 1]} : vector<8x512xf32> to vector<8x128xf32>
    %93 = arith.negf %92 : vector<8x128xf32>
    %94 = math.exp %93 : vector<8x128xf32>
    %cst_30 = arith.constant 1.000000e+00 : f32
    %95 = vector.broadcast %cst_30 : f32 to vector<8x128xf32>
    %96 = arith.addf %95, %94 : vector<8x128xf32>
    %97 = arith.divf %95, %96 : vector<8x128xf32>
    %98 = arith.mulf %89, %40 : vector<8x128xf32>
    %99 = arith.mulf %83, %91 : vector<8x128xf32>
    %100 = arith.addf %98, %99 : vector<8x128xf32>
    %101 = math.tanh %100 : vector<8x128xf32>
    %102 = arith.mulf %97, %101 : vector<8x128xf32>
    %103 = tpu.concatenate %102, %71 in 1 : vector<8x128xf32>, vector<8x128xf32> -> vector<8x256xf32>
    %cst_31 = arith.constant dense<0.000000e+00> : vector<8x512xf32>
    %104 = tpu.matmul %103, %3, %cst_31 {dimension_numbers = #tpu.dot_dimension_numbers<[1], [0], [0], [1], [0, 0, 1, 1], [], []>} : vector<8x256xf32>, vector<256x512xf32>, vector<8x512xf32> -> vector<8x512xf32>
    %105 = vector.broadcast %7 : vector<1x512xf32> to vector<8x512xf32>
    %106 = arith.addf %104, %105 : vector<8x512xf32>
    %107 = vector.extract_strided_slice %106 {offsets = [0, 0], sizes = [8, 128], strides = [1, 1]} : vector<8x512xf32> to vector<8x128xf32>
    %108 = arith.negf %107 : vector<8x128xf32>
    %109 = math.exp %108 : vector<8x128xf32>
    %cst_32 = arith.constant 1.000000e+00 : f32
    %110 = vector.broadcast %cst_32 : f32 to vector<8x128xf32>
    %111 = arith.addf %110, %109 : vector<8x128xf32>
    %112 = arith.divf %110, %111 : vector<8x128xf32>
    %113 = vector.extract_strided_slice %106 {offsets = [0, 128], sizes = [8, 128], strides = [1, 1]} : vector<8x512xf32> to vector<8x128xf32>
    %114 = arith.negf %113 : vector<8x128xf32>
    %115 = math.exp %114 : vector<8x128xf32>
    %cst_33 = arith.constant 1.000000e+00 : f32
    %116 = vector.broadcast %cst_33 : f32 to vector<8x128xf32>
    %117 = arith.addf %116, %115 : vector<8x128xf32>
    %118 = arith.divf %116, %117 : vector<8x128xf32>
    %119 = vector.extract_strided_slice %106 {offsets = [0, 256], sizes = [8, 128], strides = [1, 1]} : vector<8x512xf32> to vector<8x128xf32>
    %120 = math.tanh %119 : vector<8x128xf32>
    %121 = vector.extract_strided_slice %106 {offsets = [0, 384], sizes = [8, 128], strides = [1, 1]} : vector<8x512xf32> to vector<8x128xf32>
    %122 = arith.negf %121 : vector<8x128xf32>
    %123 = math.exp %122 : vector<8x128xf32>
    %cst_34 = arith.constant 1.000000e+00 : f32
    %124 = vector.broadcast %cst_34 : f32 to vector<8x128xf32>
    %125 = arith.addf %124, %123 : vector<8x128xf32>
    %126 = arith.divf %124, %125 : vector<8x128xf32>
    %127 = arith.mulf %118, %69 : vector<8x128xf32>
    %128 = arith.mulf %112, %120 : vector<8x128xf32>
    %129 = arith.addf %127, %128 : vector<8x128xf32>
    %130 = math.tanh %129 : vector<8x128xf32>
    %131 = arith.mulf %126, %130 : vector<8x128xf32>
    %c2 = arith.constant 2 : index
    %c0_35 = arith.constant 0 : index
    %c0_36 = arith.constant 0 : index
    %132 = vector.load %arg1[%c2, %c0_35, %c0_36] : memref<8x8x128xf32, #tpu.memory_space<vmem>>, vector<1x8x128xf32>
    %133 = vector.shape_cast %132 : vector<1x8x128xf32> to vector<8x128xf32>
    %134 = tpu.concatenate %133, %102 in 1 : vector<8x128xf32>, vector<8x128xf32> -> vector<8x256xf32>
    %cst_37 = arith.constant dense<0.000000e+00> : vector<8x512xf32>
    %135 = tpu.matmul %134, %1, %cst_37 {dimension_numbers = #tpu.dot_dimension_numbers<[1], [0], [0], [1], [0, 0, 1, 1], [], []>} : vector<8x256xf32>, vector<256x512xf32>, vector<8x512xf32> -> vector<8x512xf32>
    %136 = vector.broadcast %5 : vector<1x512xf32> to vector<8x512xf32>
    %137 = arith.addf %135, %136 : vector<8x512xf32>
    %138 = vector.extract_strided_slice %137 {offsets = [0, 0], sizes = [8, 128], strides = [1, 1]} : vector<8x512xf32> to vector<8x128xf32>
    %139 = arith.negf %138 : vector<8x128xf32>
    %140 = math.exp %139 : vector<8x128xf32>
    %cst_38 = arith.constant 1.000000e+00 : f32
    %141 = vector.broadcast %cst_38 : f32 to vector<8x128xf32>
    %142 = arith.addf %141, %140 : vector<8x128xf32>
    %143 = arith.divf %141, %142 : vector<8x128xf32>
    %144 = vector.extract_strided_slice %137 {offsets = [0, 128], sizes = [8, 128], strides = [1, 1]} : vector<8x512xf32> to vector<8x128xf32>
    %145 = arith.negf %144 : vector<8x128xf32>
    %146 = math.exp %145 : vector<8x128xf32>
    %cst_39 = arith.constant 1.000000e+00 : f32
    %147 = vector.broadcast %cst_39 : f32 to vector<8x128xf32>
    %148 = arith.addf %147, %146 : vector<8x128xf32>
    %149 = arith.divf %147, %148 : vector<8x128xf32>
    %150 = vector.extract_strided_slice %137 {offsets = [0, 256], sizes = [8, 128], strides = [1, 1]} : vector<8x512xf32> to vector<8x128xf32>
    %151 = math.tanh %150 : vector<8x128xf32>
    %152 = vector.extract_strided_slice %137 {offsets = [0, 384], sizes = [8, 128], strides = [1, 1]} : vector<8x512xf32> to vector<8x128xf32>
    %153 = arith.negf %152 : vector<8x128xf32>
    %154 = math.exp %153 : vector<8x128xf32>
    %cst_40 = arith.constant 1.000000e+00 : f32
    %155 = vector.broadcast %cst_40 : f32 to vector<8x128xf32>
    %156 = arith.addf %155, %154 : vector<8x128xf32>
    %157 = arith.divf %155, %156 : vector<8x128xf32>
    %158 = arith.mulf %149, %100 : vector<8x128xf32>
    %159 = arith.mulf %143, %151 : vector<8x128xf32>
    %160 = arith.addf %158, %159 : vector<8x128xf32>
    %161 = math.tanh %160 : vector<8x128xf32>
    %162 = arith.mulf %157, %161 : vector<8x128xf32>
    %163 = tpu.concatenate %162, %131 in 1 : vector<8x128xf32>, vector<8x128xf32> -> vector<8x256xf32>
    %cst_41 = arith.constant dense<0.000000e+00> : vector<8x512xf32>
    %164 = tpu.matmul %163, %3, %cst_41 {dimension_numbers = #tpu.dot_dimension_numbers<[1], [0], [0], [1], [0, 0, 1, 1], [], []>} : vector<8x256xf32>, vector<256x512xf32>, vector<8x512xf32> -> vector<8x512xf32>
    %165 = vector.broadcast %7 : vector<1x512xf32> to vector<8x512xf32>
    %166 = arith.addf %164, %165 : vector<8x512xf32>
    %167 = vector.extract_strided_slice %166 {offsets = [0, 0], sizes = [8, 128], strides = [1, 1]} : vector<8x512xf32> to vector<8x128xf32>
    %168 = arith.negf %167 : vector<8x128xf32>
    %169 = math.exp %168 : vector<8x128xf32>
    %cst_42 = arith.constant 1.000000e+00 : f32
    %170 = vector.broadcast %cst_42 : f32 to vector<8x128xf32>
    %171 = arith.addf %170, %169 : vector<8x128xf32>
    %172 = arith.divf %170, %171 : vector<8x128xf32>
    %173 = vector.extract_strided_slice %166 {offsets = [0, 128], sizes = [8, 128], strides = [1, 1]} : vector<8x512xf32> to vector<8x128xf32>
    %174 = arith.negf %173 : vector<8x128xf32>
    %175 = math.exp %174 : vector<8x128xf32>
    %cst_43 = arith.constant 1.000000e+00 : f32
    %176 = vector.broadcast %cst_43 : f32 to vector<8x128xf32>
    %177 = arith.addf %176, %175 : vector<8x128xf32>
    %178 = arith.divf %176, %177 : vector<8x128xf32>
    %179 = vector.extract_strided_slice %166 {offsets = [0, 256], sizes = [8, 128], strides = [1, 1]} : vector<8x512xf32> to vector<8x128xf32>
    %180 = math.tanh %179 : vector<8x128xf32>
    %181 = vector.extract_strided_slice %166 {offsets = [0, 384], sizes = [8, 128], strides = [1, 1]} : vector<8x512xf32> to vector<8x128xf32>
    %182 = arith.negf %181 : vector<8x128xf32>
    %183 = math.exp %182 : vector<8x128xf32>
    %cst_44 = arith.constant 1.000000e+00 : f32
    %184 = vector.broadcast %cst_44 : f32 to vector<8x128xf32>
    %185 = arith.addf %184, %183 : vector<8x128xf32>
    %186 = arith.divf %184, %185 : vector<8x128xf32>
    %187 = arith.mulf %178, %129 : vector<8x128xf32>
    %188 = arith.mulf %172, %180 : vector<8x128xf32>
    %189 = arith.addf %187, %188 : vector<8x128xf32>
    %190 = math.tanh %189 : vector<8x128xf32>
    %191 = arith.mulf %186, %190 : vector<8x128xf32>
    %c3 = arith.constant 3 : index
    %c0_45 = arith.constant 0 : index
    %c0_46 = arith.constant 0 : index
    %192 = vector.load %arg1[%c3, %c0_45, %c0_46] : memref<8x8x128xf32, #tpu.memory_space<vmem>>, vector<1x8x128xf32>
    %193 = vector.shape_cast %192 : vector<1x8x128xf32> to vector<8x128xf32>
    %194 = tpu.concatenate %193, %162 in 1 : vector<8x128xf32>, vector<8x128xf32> -> vector<8x256xf32>
    %cst_47 = arith.constant dense<0.000000e+00> : vector<8x512xf32>
    %195 = tpu.matmul %194, %1, %cst_47 {dimension_numbers = #tpu.dot_dimension_numbers<[1], [0], [0], [1], [0, 0, 1, 1], [], []>} : vector<8x256xf32>, vector<256x512xf32>, vector<8x512xf32> -> vector<8x512xf32>
    %196 = vector.broadcast %5 : vector<1x512xf32> to vector<8x512xf32>
    %197 = arith.addf %195, %196 : vector<8x512xf32>
    %198 = vector.extract_strided_slice %197 {offsets = [0, 0], sizes = [8, 128], strides = [1, 1]} : vector<8x512xf32> to vector<8x128xf32>
    %199 = arith.negf %198 : vector<8x128xf32>
    %200 = math.exp %199 : vector<8x128xf32>
    %cst_48 = arith.constant 1.000000e+00 : f32
    %201 = vector.broadcast %cst_48 : f32 to vector<8x128xf32>
    %202 = arith.addf %201, %200 : vector<8x128xf32>
    %203 = arith.divf %201, %202 : vector<8x128xf32>
    %204 = vector.extract_strided_slice %197 {offsets = [0, 128], sizes = [8, 128], strides = [1, 1]} : vector<8x512xf32> to vector<8x128xf32>
    %205 = arith.negf %204 : vector<8x128xf32>
    %206 = math.exp %205 : vector<8x128xf32>
    %cst_49 = arith.constant 1.000000e+00 : f32
    %207 = vector.broadcast %cst_49 : f32 to vector<8x128xf32>
    %208 = arith.addf %207, %206 : vector<8x128xf32>
    %209 = arith.divf %207, %208 : vector<8x128xf32>
    %210 = vector.extract_strided_slice %197 {offsets = [0, 256], sizes = [8, 128], strides = [1, 1]} : vector<8x512xf32> to vector<8x128xf32>
    %211 = math.tanh %210 : vector<8x128xf32>
    %212 = vector.extract_strided_slice %197 {offsets = [0, 384], sizes = [8, 128], strides = [1, 1]} : vector<8x512xf32> to vector<8x128xf32>
    %213 = arith.negf %212 : vector<8x128xf32>
    %214 = math.exp %213 : vector<8x128xf32>
    %cst_50 = arith.constant 1.000000e+00 : f32
    %215 = vector.broadcast %cst_50 : f32 to vector<8x128xf32>
    %216 = arith.addf %215, %214 : vector<8x128xf32>
    %217 = arith.divf %215, %216 : vector<8x128xf32>
    %218 = arith.mulf %209, %160 : vector<8x128xf32>
    %219 = arith.mulf %203, %211 : vector<8x128xf32>
    %220 = arith.addf %218, %219 : vector<8x128xf32>
    %221 = math.tanh %220 : vector<8x128xf32>
    %222 = arith.mulf %217, %221 : vector<8x128xf32>
    %223 = tpu.concatenate %222, %191 in 1 : vector<8x128xf32>, vector<8x128xf32> -> vector<8x256xf32>
    %cst_51 = arith.constant dense<0.000000e+00> : vector<8x512xf32>
    %224 = tpu.matmul %223, %3, %cst_51 {dimension_numbers = #tpu.dot_dimension_numbers<[1], [0], [0], [1], [0, 0, 1, 1], [], []>} : vector<8x256xf32>, vector<256x512xf32>, vector<8x512xf32> -> vector<8x512xf32>
    %225 = vector.broadcast %7 : vector<1x512xf32> to vector<8x512xf32>
    %226 = arith.addf %224, %225 : vector<8x512xf32>
    %227 = vector.extract_strided_slice %226 {offsets = [0, 0], sizes = [8, 128], strides = [1, 1]} : vector<8x512xf32> to vector<8x128xf32>
    %228 = arith.negf %227 : vector<8x128xf32>
    %229 = math.exp %228 : vector<8x128xf32>
    %cst_52 = arith.constant 1.000000e+00 : f32
    %230 = vector.broadcast %cst_52 : f32 to vector<8x128xf32>
    %231 = arith.addf %230, %229 : vector<8x128xf32>
    %232 = arith.divf %230, %231 : vector<8x128xf32>
    %233 = vector.extract_strided_slice %226 {offsets = [0, 128], sizes = [8, 128], strides = [1, 1]} : vector<8x512xf32> to vector<8x128xf32>
    %234 = arith.negf %233 : vector<8x128xf32>
    %235 = math.exp %234 : vector<8x128xf32>
    %cst_53 = arith.constant 1.000000e+00 : f32
    %236 = vector.broadcast %cst_53 : f32 to vector<8x128xf32>
    %237 = arith.addf %236, %235 : vector<8x128xf32>
    %238 = arith.divf %236, %237 : vector<8x128xf32>
    %239 = vector.extract_strided_slice %226 {offsets = [0, 256], sizes = [8, 128], strides = [1, 1]} : vector<8x512xf32> to vector<8x128xf32>
    %240 = math.tanh %239 : vector<8x128xf32>
    %241 = vector.extract_strided_slice %226 {offsets = [0, 384], sizes = [8, 128], strides = [1, 1]} : vector<8x512xf32> to vector<8x128xf32>
    %242 = arith.negf %241 : vector<8x128xf32>
    %243 = math.exp %242 : vector<8x128xf32>
    %cst_54 = arith.constant 1.000000e+00 : f32
    %244 = vector.broadcast %cst_54 : f32 to vector<8x128xf32>
    %245 = arith.addf %244, %243 : vector<8x128xf32>
    %246 = arith.divf %244, %245 : vector<8x128xf32>
    %247 = arith.mulf %238, %189 : vector<8x128xf32>
    %248 = arith.mulf %232, %240 : vector<8x128xf32>
    %249 = arith.addf %247, %248 : vector<8x128xf32>
    %250 = math.tanh %249 : vector<8x128xf32>
    %251 = arith.mulf %246, %250 : vector<8x128xf32>
    %c4 = arith.constant 4 : index
    %c0_55 = arith.constant 0 : index
    %c0_56 = arith.constant 0 : index
    %252 = vector.load %arg1[%c4, %c0_55, %c0_56] : memref<8x8x128xf32, #tpu.memory_space<vmem>>, vector<1x8x128xf32>
    %253 = vector.shape_cast %252 : vector<1x8x128xf32> to vector<8x128xf32>
    %254 = tpu.concatenate %253, %222 in 1 : vector<8x128xf32>, vector<8x128xf32> -> vector<8x256xf32>
    %cst_57 = arith.constant dense<0.000000e+00> : vector<8x512xf32>
    %255 = tpu.matmul %254, %1, %cst_57 {dimension_numbers = #tpu.dot_dimension_numbers<[1], [0], [0], [1], [0, 0, 1, 1], [], []>} : vector<8x256xf32>, vector<256x512xf32>, vector<8x512xf32> -> vector<8x512xf32>
    %256 = vector.broadcast %5 : vector<1x512xf32> to vector<8x512xf32>
    %257 = arith.addf %255, %256 : vector<8x512xf32>
    %258 = vector.extract_strided_slice %257 {offsets = [0, 0], sizes = [8, 128], strides = [1, 1]} : vector<8x512xf32> to vector<8x128xf32>
    %259 = arith.negf %258 : vector<8x128xf32>
    %260 = math.exp %259 : vector<8x128xf32>
    %cst_58 = arith.constant 1.000000e+00 : f32
    %261 = vector.broadcast %cst_58 : f32 to vector<8x128xf32>
    %262 = arith.addf %261, %260 : vector<8x128xf32>
    %263 = arith.divf %261, %262 : vector<8x128xf32>
    %264 = vector.extract_strided_slice %257 {offsets = [0, 128], sizes = [8, 128], strides = [1, 1]} : vector<8x512xf32> to vector<8x128xf32>
    %265 = arith.negf %264 : vector<8x128xf32>
    %266 = math.exp %265 : vector<8x128xf32>
    %cst_59 = arith.constant 1.000000e+00 : f32
    %267 = vector.broadcast %cst_59 : f32 to vector<8x128xf32>
    %268 = arith.addf %267, %266 : vector<8x128xf32>
    %269 = arith.divf %267, %268 : vector<8x128xf32>
    %270 = vector.extract_strided_slice %257 {offsets = [0, 256], sizes = [8, 128], strides = [1, 1]} : vector<8x512xf32> to vector<8x128xf32>
    %271 = math.tanh %270 : vector<8x128xf32>
    %272 = vector.extract_strided_slice %257 {offsets = [0, 384], sizes = [8, 128], strides = [1, 1]} : vector<8x512xf32> to vector<8x128xf32>
    %273 = arith.negf %272 : vector<8x128xf32>
    %274 = math.exp %273 : vector<8x128xf32>
    %cst_60 = arith.constant 1.000000e+00 : f32
    %275 = vector.broadcast %cst_60 : f32 to vector<8x128xf32>
    %276 = arith.addf %275, %274 : vector<8x128xf32>
    %277 = arith.divf %275, %276 : vector<8x128xf32>
    %278 = arith.mulf %269, %220 : vector<8x128xf32>
    %279 = arith.mulf %263, %271 : vector<8x128xf32>
    %280 = arith.addf %278, %279 : vector<8x128xf32>
    %281 = math.tanh %280 : vector<8x128xf32>
    %282 = arith.mulf %277, %281 : vector<8x128xf32>
    %283 = tpu.concatenate %282, %251 in 1 : vector<8x128xf32>, vector<8x128xf32> -> vector<8x256xf32>
    %cst_61 = arith.constant dense<0.000000e+00> : vector<8x512xf32>
    %284 = tpu.matmul %283, %3, %cst_61 {dimension_numbers = #tpu.dot_dimension_numbers<[1], [0], [0], [1], [0, 0, 1, 1], [], []>} : vector<8x256xf32>, vector<256x512xf32>, vector<8x512xf32> -> vector<8x512xf32>
    %285 = vector.broadcast %7 : vector<1x512xf32> to vector<8x512xf32>
    %286 = arith.addf %284, %285 : vector<8x512xf32>
    %287 = vector.extract_strided_slice %286 {offsets = [0, 0], sizes = [8, 128], strides = [1, 1]} : vector<8x512xf32> to vector<8x128xf32>
    %288 = arith.negf %287 : vector<8x128xf32>
    %289 = math.exp %288 : vector<8x128xf32>
    %cst_62 = arith.constant 1.000000e+00 : f32
    %290 = vector.broadcast %cst_62 : f32 to vector<8x128xf32>
    %291 = arith.addf %290, %289 : vector<8x128xf32>
    %292 = arith.divf %290, %291 : vector<8x128xf32>
    %293 = vector.extract_strided_slice %286 {offsets = [0, 128], sizes = [8, 128], strides = [1, 1]} : vector<8x512xf32> to vector<8x128xf32>
    %294 = arith.negf %293 : vector<8x128xf32>
    %295 = math.exp %294 : vector<8x128xf32>
    %cst_63 = arith.constant 1.000000e+00 : f32
    %296 = vector.broadcast %cst_63 : f32 to vector<8x128xf32>
    %297 = arith.addf %296, %295 : vector<8x128xf32>
    %298 = arith.divf %296, %297 : vector<8x128xf32>
    %299 = vector.extract_strided_slice %286 {offsets = [0, 256], sizes = [8, 128], strides = [1, 1]} : vector<8x512xf32> to vector<8x128xf32>
    %300 = math.tanh %299 : vector<8x128xf32>
    %301 = vector.extract_strided_slice %286 {offsets = [0, 384], sizes = [8, 128], strides = [1, 1]} : vector<8x512xf32> to vector<8x128xf32>
    %302 = arith.negf %301 : vector<8x128xf32>
    %303 = math.exp %302 : vector<8x128xf32>
    %cst_64 = arith.constant 1.000000e+00 : f32
    %304 = vector.broadcast %cst_64 : f32 to vector<8x128xf32>
    %305 = arith.addf %304, %303 : vector<8x128xf32>
    %306 = arith.divf %304, %305 : vector<8x128xf32>
    %307 = arith.mulf %298, %249 : vector<8x128xf32>
    %308 = arith.mulf %292, %300 : vector<8x128xf32>
    %309 = arith.addf %307, %308 : vector<8x128xf32>
    %310 = math.tanh %309 : vector<8x128xf32>
    %311 = arith.mulf %306, %310 : vector<8x128xf32>
    %c5 = arith.constant 5 : index
    %c0_65 = arith.constant 0 : index
    %c0_66 = arith.constant 0 : index
    %312 = vector.load %arg1[%c5, %c0_65, %c0_66] : memref<8x8x128xf32, #tpu.memory_space<vmem>>, vector<1x8x128xf32>
    %313 = vector.shape_cast %312 : vector<1x8x128xf32> to vector<8x128xf32>
    %314 = tpu.concatenate %313, %282 in 1 : vector<8x128xf32>, vector<8x128xf32> -> vector<8x256xf32>
    %cst_67 = arith.constant dense<0.000000e+00> : vector<8x512xf32>
    %315 = tpu.matmul %314, %1, %cst_67 {dimension_numbers = #tpu.dot_dimension_numbers<[1], [0], [0], [1], [0, 0, 1, 1], [], []>} : vector<8x256xf32>, vector<256x512xf32>, vector<8x512xf32> -> vector<8x512xf32>
    %316 = vector.broadcast %5 : vector<1x512xf32> to vector<8x512xf32>
    %317 = arith.addf %315, %316 : vector<8x512xf32>
    %318 = vector.extract_strided_slice %317 {offsets = [0, 0], sizes = [8, 128], strides = [1, 1]} : vector<8x512xf32> to vector<8x128xf32>
    %319 = arith.negf %318 : vector<8x128xf32>
    %320 = math.exp %319 : vector<8x128xf32>
    %cst_68 = arith.constant 1.000000e+00 : f32
    %321 = vector.broadcast %cst_68 : f32 to vector<8x128xf32>
    %322 = arith.addf %321, %320 : vector<8x128xf32>
    %323 = arith.divf %321, %322 : vector<8x128xf32>
    %324 = vector.extract_strided_slice %317 {offsets = [0, 128], sizes = [8, 128], strides = [1, 1]} : vector<8x512xf32> to vector<8x128xf32>
    %325 = arith.negf %324 : vector<8x128xf32>
    %326 = math.exp %325 : vector<8x128xf32>
    %cst_69 = arith.constant 1.000000e+00 : f32
    %327 = vector.broadcast %cst_69 : f32 to vector<8x128xf32>
    %328 = arith.addf %327, %326 : vector<8x128xf32>
    %329 = arith.divf %327, %328 : vector<8x128xf32>
    %330 = vector.extract_strided_slice %317 {offsets = [0, 256], sizes = [8, 128], strides = [1, 1]} : vector<8x512xf32> to vector<8x128xf32>
    %331 = math.tanh %330 : vector<8x128xf32>
    %332 = vector.extract_strided_slice %317 {offsets = [0, 384], sizes = [8, 128], strides = [1, 1]} : vector<8x512xf32> to vector<8x128xf32>
    %333 = arith.negf %332 : vector<8x128xf32>
    %334 = math.exp %333 : vector<8x128xf32>
    %cst_70 = arith.constant 1.000000e+00 : f32
    %335 = vector.broadcast %cst_70 : f32 to vector<8x128xf32>
    %336 = arith.addf %335, %334 : vector<8x128xf32>
    %337 = arith.divf %335, %336 : vector<8x128xf32>
    %338 = arith.mulf %329, %280 : vector<8x128xf32>
    %339 = arith.mulf %323, %331 : vector<8x128xf32>
    %340 = arith.addf %338, %339 : vector<8x128xf32>
    %341 = math.tanh %340 : vector<8x128xf32>
    %342 = arith.mulf %337, %341 : vector<8x128xf32>
    %343 = tpu.concatenate %342, %311 in 1 : vector<8x128xf32>, vector<8x128xf32> -> vector<8x256xf32>
    %cst_71 = arith.constant dense<0.000000e+00> : vector<8x512xf32>
    %344 = tpu.matmul %343, %3, %cst_71 {dimension_numbers = #tpu.dot_dimension_numbers<[1], [0], [0], [1], [0, 0, 1, 1], [], []>} : vector<8x256xf32>, vector<256x512xf32>, vector<8x512xf32> -> vector<8x512xf32>
    %345 = vector.broadcast %7 : vector<1x512xf32> to vector<8x512xf32>
    %346 = arith.addf %344, %345 : vector<8x512xf32>
    %347 = vector.extract_strided_slice %346 {offsets = [0, 0], sizes = [8, 128], strides = [1, 1]} : vector<8x512xf32> to vector<8x128xf32>
    %348 = arith.negf %347 : vector<8x128xf32>
    %349 = math.exp %348 : vector<8x128xf32>
    %cst_72 = arith.constant 1.000000e+00 : f32
    %350 = vector.broadcast %cst_72 : f32 to vector<8x128xf32>
    %351 = arith.addf %350, %349 : vector<8x128xf32>
    %352 = arith.divf %350, %351 : vector<8x128xf32>
    %353 = vector.extract_strided_slice %346 {offsets = [0, 128], sizes = [8, 128], strides = [1, 1]} : vector<8x512xf32> to vector<8x128xf32>
    %354 = arith.negf %353 : vector<8x128xf32>
    %355 = math.exp %354 : vector<8x128xf32>
    %cst_73 = arith.constant 1.000000e+00 : f32
    %356 = vector.broadcast %cst_73 : f32 to vector<8x128xf32>
    %357 = arith.addf %356, %355 : vector<8x128xf32>
    %358 = arith.divf %356, %357 : vector<8x128xf32>
    %359 = vector.extract_strided_slice %346 {offsets = [0, 256], sizes = [8, 128], strides = [1, 1]} : vector<8x512xf32> to vector<8x128xf32>
    %360 = math.tanh %359 : vector<8x128xf32>
    %361 = vector.extract_strided_slice %346 {offsets = [0, 384], sizes = [8, 128], strides = [1, 1]} : vector<8x512xf32> to vector<8x128xf32>
    %362 = arith.negf %361 : vector<8x128xf32>
    %363 = math.exp %362 : vector<8x128xf32>
    %cst_74 = arith.constant 1.000000e+00 : f32
    %364 = vector.broadcast %cst_74 : f32 to vector<8x128xf32>
    %365 = arith.addf %364, %363 : vector<8x128xf32>
    %366 = arith.divf %364, %365 : vector<8x128xf32>
    %367 = arith.mulf %358, %309 : vector<8x128xf32>
    %368 = arith.mulf %352, %360 : vector<8x128xf32>
    %369 = arith.addf %367, %368 : vector<8x128xf32>
    %370 = math.tanh %369 : vector<8x128xf32>
    %371 = arith.mulf %366, %370 : vector<8x128xf32>
    %c6 = arith.constant 6 : index
    %c0_75 = arith.constant 0 : index
    %c0_76 = arith.constant 0 : index
    %372 = vector.load %arg1[%c6, %c0_75, %c0_76] : memref<8x8x128xf32, #tpu.memory_space<vmem>>, vector<1x8x128xf32>
    %373 = vector.shape_cast %372 : vector<1x8x128xf32> to vector<8x128xf32>
    %374 = tpu.concatenate %373, %342 in 1 : vector<8x128xf32>, vector<8x128xf32> -> vector<8x256xf32>
    %cst_77 = arith.constant dense<0.000000e+00> : vector<8x512xf32>
    %375 = tpu.matmul %374, %1, %cst_77 {dimension_numbers = #tpu.dot_dimension_numbers<[1], [0], [0], [1], [0, 0, 1, 1], [], []>} : vector<8x256xf32>, vector<256x512xf32>, vector<8x512xf32> -> vector<8x512xf32>
    %376 = vector.broadcast %5 : vector<1x512xf32> to vector<8x512xf32>
    %377 = arith.addf %375, %376 : vector<8x512xf32>
    %378 = vector.extract_strided_slice %377 {offsets = [0, 0], sizes = [8, 128], strides = [1, 1]} : vector<8x512xf32> to vector<8x128xf32>
    %379 = arith.negf %378 : vector<8x128xf32>
    %380 = math.exp %379 : vector<8x128xf32>
    %cst_78 = arith.constant 1.000000e+00 : f32
    %381 = vector.broadcast %cst_78 : f32 to vector<8x128xf32>
    %382 = arith.addf %381, %380 : vector<8x128xf32>
    %383 = arith.divf %381, %382 : vector<8x128xf32>
    %384 = vector.extract_strided_slice %377 {offsets = [0, 128], sizes = [8, 128], strides = [1, 1]} : vector<8x512xf32> to vector<8x128xf32>
    %385 = arith.negf %384 : vector<8x128xf32>
    %386 = math.exp %385 : vector<8x128xf32>
    %cst_79 = arith.constant 1.000000e+00 : f32
    %387 = vector.broadcast %cst_79 : f32 to vector<8x128xf32>
    %388 = arith.addf %387, %386 : vector<8x128xf32>
    %389 = arith.divf %387, %388 : vector<8x128xf32>
    %390 = vector.extract_strided_slice %377 {offsets = [0, 256], sizes = [8, 128], strides = [1, 1]} : vector<8x512xf32> to vector<8x128xf32>
    %391 = math.tanh %390 : vector<8x128xf32>
    %392 = vector.extract_strided_slice %377 {offsets = [0, 384], sizes = [8, 128], strides = [1, 1]} : vector<8x512xf32> to vector<8x128xf32>
    %393 = arith.negf %392 : vector<8x128xf32>
    %394 = math.exp %393 : vector<8x128xf32>
    %cst_80 = arith.constant 1.000000e+00 : f32
    %395 = vector.broadcast %cst_80 : f32 to vector<8x128xf32>
    %396 = arith.addf %395, %394 : vector<8x128xf32>
    %397 = arith.divf %395, %396 : vector<8x128xf32>
    %398 = arith.mulf %389, %340 : vector<8x128xf32>
    %399 = arith.mulf %383, %391 : vector<8x128xf32>
    %400 = arith.addf %398, %399 : vector<8x128xf32>
    %401 = math.tanh %400 : vector<8x128xf32>
    %402 = arith.mulf %397, %401 : vector<8x128xf32>
    %403 = tpu.concatenate %402, %371 in 1 : vector<8x128xf32>, vector<8x128xf32> -> vector<8x256xf32>
    %cst_81 = arith.constant dense<0.000000e+00> : vector<8x512xf32>
    %404 = tpu.matmul %403, %3, %cst_81 {dimension_numbers = #tpu.dot_dimension_numbers<[1], [0], [0], [1], [0, 0, 1, 1], [], []>} : vector<8x256xf32>, vector<256x512xf32>, vector<8x512xf32> -> vector<8x512xf32>
    %405 = vector.broadcast %7 : vector<1x512xf32> to vector<8x512xf32>
    %406 = arith.addf %404, %405 : vector<8x512xf32>
    %407 = vector.extract_strided_slice %406 {offsets = [0, 0], sizes = [8, 128], strides = [1, 1]} : vector<8x512xf32> to vector<8x128xf32>
    %408 = arith.negf %407 : vector<8x128xf32>
    %409 = math.exp %408 : vector<8x128xf32>
    %cst_82 = arith.constant 1.000000e+00 : f32
    %410 = vector.broadcast %cst_82 : f32 to vector<8x128xf32>
    %411 = arith.addf %410, %409 : vector<8x128xf32>
    %412 = arith.divf %410, %411 : vector<8x128xf32>
    %413 = vector.extract_strided_slice %406 {offsets = [0, 128], sizes = [8, 128], strides = [1, 1]} : vector<8x512xf32> to vector<8x128xf32>
    %414 = arith.negf %413 : vector<8x128xf32>
    %415 = math.exp %414 : vector<8x128xf32>
    %cst_83 = arith.constant 1.000000e+00 : f32
    %416 = vector.broadcast %cst_83 : f32 to vector<8x128xf32>
    %417 = arith.addf %416, %415 : vector<8x128xf32>
    %418 = arith.divf %416, %417 : vector<8x128xf32>
    %419 = vector.extract_strided_slice %406 {offsets = [0, 256], sizes = [8, 128], strides = [1, 1]} : vector<8x512xf32> to vector<8x128xf32>
    %420 = math.tanh %419 : vector<8x128xf32>
    %421 = vector.extract_strided_slice %406 {offsets = [0, 384], sizes = [8, 128], strides = [1, 1]} : vector<8x512xf32> to vector<8x128xf32>
    %422 = arith.negf %421 : vector<8x128xf32>
    %423 = math.exp %422 : vector<8x128xf32>
    %cst_84 = arith.constant 1.000000e+00 : f32
    %424 = vector.broadcast %cst_84 : f32 to vector<8x128xf32>
    %425 = arith.addf %424, %423 : vector<8x128xf32>
    %426 = arith.divf %424, %425 : vector<8x128xf32>
    %427 = arith.mulf %418, %369 : vector<8x128xf32>
    %428 = arith.mulf %412, %420 : vector<8x128xf32>
    %429 = arith.addf %427, %428 : vector<8x128xf32>
    %430 = math.tanh %429 : vector<8x128xf32>
    %431 = arith.mulf %426, %430 : vector<8x128xf32>
    %c7 = arith.constant 7 : index
    %c0_85 = arith.constant 0 : index
    %c0_86 = arith.constant 0 : index
    %432 = vector.load %arg1[%c7, %c0_85, %c0_86] : memref<8x8x128xf32, #tpu.memory_space<vmem>>, vector<1x8x128xf32>
    %433 = vector.shape_cast %432 : vector<1x8x128xf32> to vector<8x128xf32>
    %434 = tpu.concatenate %433, %402 in 1 : vector<8x128xf32>, vector<8x128xf32> -> vector<8x256xf32>
    %cst_87 = arith.constant dense<0.000000e+00> : vector<8x512xf32>
    %435 = tpu.matmul %434, %1, %cst_87 {dimension_numbers = #tpu.dot_dimension_numbers<[1], [0], [0], [1], [0, 0, 1, 1], [], []>} : vector<8x256xf32>, vector<256x512xf32>, vector<8x512xf32> -> vector<8x512xf32>
    %436 = vector.broadcast %5 : vector<1x512xf32> to vector<8x512xf32>
    %437 = arith.addf %435, %436 : vector<8x512xf32>
    %438 = vector.extract_strided_slice %437 {offsets = [0, 0], sizes = [8, 128], strides = [1, 1]} : vector<8x512xf32> to vector<8x128xf32>
    %439 = arith.negf %438 : vector<8x128xf32>
    %440 = math.exp %439 : vector<8x128xf32>
    %cst_88 = arith.constant 1.000000e+00 : f32
    %441 = vector.broadcast %cst_88 : f32 to vector<8x128xf32>
    %442 = arith.addf %441, %440 : vector<8x128xf32>
    %443 = arith.divf %441, %442 : vector<8x128xf32>
    %444 = vector.extract_strided_slice %437 {offsets = [0, 128], sizes = [8, 128], strides = [1, 1]} : vector<8x512xf32> to vector<8x128xf32>
    %445 = arith.negf %444 : vector<8x128xf32>
    %446 = math.exp %445 : vector<8x128xf32>
    %cst_89 = arith.constant 1.000000e+00 : f32
    %447 = vector.broadcast %cst_89 : f32 to vector<8x128xf32>
    %448 = arith.addf %447, %446 : vector<8x128xf32>
    %449 = arith.divf %447, %448 : vector<8x128xf32>
    %450 = vector.extract_strided_slice %437 {offsets = [0, 256], sizes = [8, 128], strides = [1, 1]} : vector<8x512xf32> to vector<8x128xf32>
    %451 = math.tanh %450 : vector<8x128xf32>
    %452 = vector.extract_strided_slice %437 {offsets = [0, 384], sizes = [8, 128], strides = [1, 1]} : vector<8x512xf32> to vector<8x128xf32>
    %453 = arith.negf %452 : vector<8x128xf32>
    %454 = math.exp %453 : vector<8x128xf32>
    %cst_90 = arith.constant 1.000000e+00 : f32
    %455 = vector.broadcast %cst_90 : f32 to vector<8x128xf32>
    %456 = arith.addf %455, %454 : vector<8x128xf32>
    %457 = arith.divf %455, %456 : vector<8x128xf32>
    %458 = arith.mulf %449, %400 : vector<8x128xf32>
    %459 = arith.mulf %443, %451 : vector<8x128xf32>
    %460 = arith.addf %458, %459 : vector<8x128xf32>
    %461 = math.tanh %460 : vector<8x128xf32>
    %462 = arith.mulf %457, %461 : vector<8x128xf32>
    %463 = tpu.concatenate %462, %431 in 1 : vector<8x128xf32>, vector<8x128xf32> -> vector<8x256xf32>
    %cst_91 = arith.constant dense<0.000000e+00> : vector<8x512xf32>
    %464 = tpu.matmul %463, %3, %cst_91 {dimension_numbers = #tpu.dot_dimension_numbers<[1], [0], [0], [1], [0, 0, 1, 1], [], []>} : vector<8x256xf32>, vector<256x512xf32>, vector<8x512xf32> -> vector<8x512xf32>
    %465 = vector.broadcast %7 : vector<1x512xf32> to vector<8x512xf32>
    %466 = arith.addf %464, %465 : vector<8x512xf32>
    %467 = vector.extract_strided_slice %466 {offsets = [0, 0], sizes = [8, 128], strides = [1, 1]} : vector<8x512xf32> to vector<8x128xf32>
    %468 = arith.negf %467 : vector<8x128xf32>
    %469 = math.exp %468 : vector<8x128xf32>
    %cst_92 = arith.constant 1.000000e+00 : f32
    %470 = vector.broadcast %cst_92 : f32 to vector<8x128xf32>
    %471 = arith.addf %470, %469 : vector<8x128xf32>
    %472 = arith.divf %470, %471 : vector<8x128xf32>
    %473 = vector.extract_strided_slice %466 {offsets = [0, 128], sizes = [8, 128], strides = [1, 1]} : vector<8x512xf32> to vector<8x128xf32>
    %474 = arith.negf %473 : vector<8x128xf32>
    %475 = math.exp %474 : vector<8x128xf32>
    %cst_93 = arith.constant 1.000000e+00 : f32
    %476 = vector.broadcast %cst_93 : f32 to vector<8x128xf32>
    %477 = arith.addf %476, %475 : vector<8x128xf32>
    %478 = arith.divf %476, %477 : vector<8x128xf32>
    %479 = vector.extract_strided_slice %466 {offsets = [0, 256], sizes = [8, 128], strides = [1, 1]} : vector<8x512xf32> to vector<8x128xf32>
    %480 = math.tanh %479 : vector<8x128xf32>
    %481 = vector.extract_strided_slice %466 {offsets = [0, 384], sizes = [8, 128], strides = [1, 1]} : vector<8x512xf32> to vector<8x128xf32>
    %482 = arith.negf %481 : vector<8x128xf32>
    %483 = math.exp %482 : vector<8x128xf32>
    %cst_94 = arith.constant 1.000000e+00 : f32
    %484 = vector.broadcast %cst_94 : f32 to vector<8x128xf32>
    %485 = arith.addf %484, %483 : vector<8x128xf32>
    %486 = arith.divf %484, %485 : vector<8x128xf32>
    %487 = arith.mulf %478, %429 : vector<8x128xf32>
    %488 = arith.mulf %472, %480 : vector<8x128xf32>
    %489 = arith.addf %487, %488 : vector<8x128xf32>
    %490 = math.tanh %489 : vector<8x128xf32>
    %491 = arith.mulf %486, %490 : vector<8x128xf32>
    %c0_95 = arith.constant 0 : index
    %c0_96 = arith.constant 0 : index
    %492 = vector.load %arg4[%c0_95, %c0_96] : memref<128x128xf32, #tpu.memory_space<vmem>>, vector<128x128xf32>
    %cst_97 = arith.constant dense<0.000000e+00> : vector<8x128xf32>
    %493 = tpu.matmul %491, %492, %cst_97 {dimension_numbers = #tpu.dot_dimension_numbers<[1], [0], [0], [1], [0, 0, 1, 1], [], []>} : vector<8x128xf32>, vector<128x128xf32>, vector<8x128xf32> -> vector<8x128xf32>
    %c0_98 = arith.constant 0 : index
    %c0_99 = arith.constant 0 : index
    %494 = vector.load %arg5[%c0_98, %c0_99] : memref<1x128xf32, #tpu.memory_space<vmem>>, vector<1x128xf32>
    %495 = vector.broadcast %494 : vector<1x128xf32> to vector<8x128xf32>
    %496 = arith.addf %493, %495 : vector<8x128xf32>
    %c0_100 = arith.constant 0 : index
    %c0_101 = arith.constant 0 : index
    %497 = vector.load %arg6[%c0_100, %c0_101] : memref<8x128xf32, #tpu.memory_space<vmem>>, vector<8x128xf32>
    tpu.vector_store %arg6[%c0_100, %c0_101], %496 {strides = array<i32>} : memref<8x128xf32, #tpu.memory_space<vmem>>, vector<8x128xf32>,
    return
  }
  func.func @transform_0(%arg0: i32) -> (i32, i32, i32) {
    %c0_i32 = arith.constant 0 : i32
    %c0_i32_0 = arith.constant 0 : i32
    %c0_i32_1 = arith.constant 0 : i32
    %c0_i32_2 = arith.constant 0 : i32
    return %c0_i32, %c0_i32_0, %c0_i32_1 : i32, i32, i32
  }
  func.func @transform_1(%arg0: i32) -> (i32, i32, i32) {
    %c0_i32 = arith.constant 0 : i32
    %c0_i32_0 = arith.constant 0 : i32
    %c0_i32_1 = arith.constant 0 : i32
    %c0_i32_2 = arith.constant 0 : i32
    return %c0_i32, %c0_i32_0, %c0_i32_1 : i32, i32, i32
  }
  func.func @transform_2(%arg0: i32) -> (i32, i32, i32) {
    %c0_i32 = arith.constant 0 : i32
    %c0_i32_0 = arith.constant 0 : i32
    %c0_i32_1 = arith.constant 0 : i32
    %c0_i32_2 = arith.constant 0 : i32
    return %c0_i32, %c0_i32_0, %c0_i32_1 : i32, i32, i32
  }
  func.func @transform_3(%arg0: i32) -> (i32, i32) {
    %c0_i32 = arith.constant 0 : i32
    %c0_i32_0 = arith.constant 0 : i32
    %c0_i32_1 = arith.constant 0 : i32
    return %c0_i32, %c0_i32_0 : i32, i32
  }
  func.func @transform_4(%arg0: i32) -> (i32, i32) {
    %c0_i32 = arith.constant 0 : i32
    %c0_i32_0 = arith.constant 0 : i32
    %c0_i32_1 = arith.constant 0 : i32
    return %c0_i32, %c0_i32_0 : i32, i32
  }
  func.func @transform_5(%arg0: i32) -> (i32, i32) {
    %c0_i32 = arith.constant 0 : i32
    %c0_i32_0 = arith.constant 0 : i32
    %c0_i32_1 = arith.constant 0 : i32
    return %c0_i32, %c0_i32_0 : i32, i32
  }
}

</mosaic_0001>

<llo_original>
// kernel: olstm_forward.1
$region0: #{olstm_forward.1}
  #allocation0 [shape = 'u32[]', space=smem, size = 0x4, offset = 0x4, fixed_abs, tag = 'smem constant byte address 0x4 - core index']
  #allocation1 [shape = 'u32[144,128]{1,0:T(1,128)}', space=vmem, size = 0x12000, scoped, tag = 'internal scratch']
  %s0 = inlined_call_operand.vmem [shape: f32[8,8,128], index: 0, kind: input, shape index: {}]
  %s1 = inlined_call_operand.hbm [shape: f32[2,256,512], index: 1, kind: input, shape index: {}]
  %s2 = inlined_call_operand.vmem [shape: f32[2,1,512], index: 2, kind: input, shape index: {}]
  %s3 = inlined_call_operand.hbm [shape: f32[128,128], index: 3, kind: input, shape index: {}]
  %s4 = inlined_call_operand.vmem [shape: f32[1,128], index: 4, kind: input, shape index: {}]
  %s5 = inlined_call_operand.vmem [shape: f32[8,128], index: 5, kind: output, shape index: {}]
  %s6 = sld [smem:[#allocation0]]
  $region38: #{olstm_forward.1} parent=0
    _
  %s8 = ssub.s32 1, %s6
  %s9 = scalar_select 0, %s8, %s6
  $region1: #{olstm_forward.1} parent=0
    #allocation2 [shape = 'u8[1048576]{0}', space=vmem, size = 0x100000, scoped, tag = 'input window, operand 1, single buffered']
    #allocation3 [shape = 's32[1]{0}', space=sflag, size = 0x4, scoped, tag = 'scoped memory for olstm_forward.1']
    #allocation4 [shape = 'u8[65536]{0}', space=vmem, size = 0x10000, scoped, tag = 'input window, operand 3, single buffered']
    #allocation5 [shape = 's32[1]{0}', space=sflag, size = 0x4, scoped, tag = 'scoped memory for olstm_forward.1']
    %10 = vsyncpa [#allocation3], 0
    %11 = vsyncpa [#allocation5], 0
    // Predicated region
    $region2: #{olstm_forward.1} parent=1 // pred_check
      _
    $region3: #{olstm_forward.1} parent=1 // pred_check_branch
      %13 = sbr.rel (0) target = $region5
    $region4: #{olstm_forward.1} parent=1 // pred_region
      _
    $region5: #{olstm_forward.1} parent=1 // pred_fallthru
      _
    // Predicated region
    $region6: #{olstm_forward.1} parent=1 // pred_check
      _
    $region7: #{olstm_forward.1} parent=1 // pred_check_branch
      %15 = sbr.rel (0) target = $region9
    $region8: #{olstm_forward.1} parent=1 // pred_region
      %s17 = ssub.s32 32768, 32768
      %18 = vsyncadd [#allocation3], %s17
      %s19 = sshll.u32 [#allocation2], 4
      %s20 = int_to_ptr.vmem [resolvable:$true] %s19
      %25 = dma.hbm_to_vmem [thread:$0]  %s1, 32768, %s20, [#allocation3], 512, 512, 32
    $region9: #{olstm_forward.1} parent=1 // pred_fallthru
      _
    // Predicated region
    $region10: #{olstm_forward.1} parent=1 // pred_check
      _
    $region11: #{olstm_forward.1} parent=1 // pred_check_branch
      %27 = sbr.rel (0) target = $region13
    $region12: #{olstm_forward.1} parent=1 // pred_region
      _
    $region13: #{olstm_forward.1} parent=1 // pred_fallthru
      _
    // Predicated region
    $region14: #{olstm_forward.1} parent=1 // pred_check
      _
    $region15: #{olstm_forward.1} parent=1 // pred_check_branch
      %29 = sbr.rel (0) target = $region17
    $region16: #{olstm_forward.1} parent=1 // pred_region
      %s31 = ssub.s32 2048, 2048
      %32 = vsyncadd [#allocation5], %s31
      %s33 = sshll.u32 [#allocation4], 4
      %s34 = int_to_ptr.vmem [resolvable:$true] %s33
      %39 = dma.hbm_to_vmem [thread:$0]  %s3, 2048, %s34, [#allocation5], 128, 128, 8
    $region17: #{olstm_forward.1} parent=1 // pred_fallthru
      _
    // Predicated region
    $region18: #{olstm_forward.1} parent=1 // pred_check
      _
    $region19: #{olstm_forward.1} parent=1 // pred_check_branch
      %41 = sbr.rel (0) target = $region21
    $region20: #{olstm_forward.1} parent=1 // pred_region
      _
    $region21: #{olstm_forward.1} parent=1 // pred_fallthru
      _
    // Predicated region
    $region22: #{olstm_forward.1} parent=1 // pred_check
      _
    $region23: #{olstm_forward.1} parent=1 // pred_check_branch
      %43 = sbr.rel (0) target = $region25
    $region24: #{olstm_forward.1} parent=1 // pred_region
      %44 = dma.done [#allocation3], 32768
    $region25: #{olstm_forward.1} parent=1 // pred_fallthru
      _
    // Predicated region
    $region26: #{olstm_forward.1} parent=1 // pred_check
      _
    $region27: #{olstm_forward.1} parent=1 // pred_check_branch
      %46 = sbr.rel (0) target = $region29
    $region28: #{olstm_forward.1} parent=1 // pred_region
      %47 = dma.done [#allocation5], 2048
    $region29: #{olstm_forward.1} parent=1 // pred_fallthru
      _
    %v48 = vld [vmem:[#allocation2] sm:$0xff]
    %v49 = vld [vmem:[#allocation2 + $0x8] sm:$0xff]
    %v50 = vld [vmem:[#allocation2 + $0x10] sm:$0xff]
    %v51 = vld [vmem:[#allocation2 + $0x18] sm:$0xff]
    %v52 = vld [vmem:[#allocation2 + $0x20] sm:$0xff]
    %v53 = vld [vmem:[#allocation2 + $0x28] sm:$0xff]
    %v54 = vld [vmem:[#allocation2 + $0x30] sm:$0xff]
    %v55 = vld [vmem:[#allocation2 + $0x38] sm:$0xff]
    %v56 = vld [vmem:[#allocation2 + $0x40] sm:$0xff]
    %v57 = vld [vmem:[#allocation2 + $0x48] sm:$0xff]
    %v58 = vld [vmem:[#allocation2 + $0x50] sm:$0xff]
    %v59 = vld [vmem:[#allocation2 + $0x58] sm:$0xff]
    %v60 = vld [vmem:[#allocation2 + $0x60] sm:$0xff]
    %v61 = vld [vmem:[#allocation2 + $0x68] sm:$0xff]
    %v62 = vld [vmem:[#allocation2 + $0x70] sm:$0xff]
    %v63 = vld [vmem:[#allocation2 + $0x78] sm:$0xff]
    %v64 = vld [vmem:[#allocation2 + $0x80] sm:$0xff]
    %v65 = vld [vmem:[#allocation2 + $0x88] sm:$0xff]
    %v66 = vld [vmem:[#allocation2 + $0x90] sm:$0xff]
    %v67 = vld [vmem:[#allocation2 + $0x98] sm:$0xff]
    %v68 = vld [vmem:[#allocation2 + $0xa0] sm:$0xff]
    %v69 = vld [vmem:[#allocation2 + $0xa8] sm:$0xff]
    %v70 = vld [vmem:[#allocation2 + $0xb0] sm:$0xff]
    %v71 = vld [vmem:[#allocation2 + $0xb8] sm:$0xff]
    %v72 = vld [vmem:[#allocation2 + $0xc0] sm:$0xff]
    %v73 = vld [vmem:[#allocation2 + $0xc8] sm:$0xff]
    %v74 = vld [vmem:[#allocation2 + $0xd0] sm:$0xff]
    %v75 = vld [vmem:[#allocation2 + $0xd8] sm:$0xff]
    %v76 = vld [vmem:[#allocation2 + $0xe0] sm:$0xff]
    %v77 = vld [vmem:[#allocation2 + $0xe8] sm:$0xff]
    %v78 = vld [vmem:[#allocation2 + $0xf0] sm:$0xff]
    %v79 = vld [vmem:[#allocation2 + $0xf8] sm:$0xff]
    %v80 = vld [vmem:[#allocation2 + $0x100] sm:$0xff]
    %v81 = vld [vmem:[#allocation2 + $0x108] sm:$0xff]
    %v82 = vld [vmem:[#allocation2 + $0x110] sm:$0xff]
    %v83 = vld [vmem:[#allocation2 + $0x118] sm:$0xff]
    %v84 = vld [vmem:[#allocation2 + $0x120] sm:$0xff]
    %v85 = vld [vmem:[#allocation2 + $0x128] sm:$0xff]
    %v86 = vld [vmem:[#allocation2 + $0x130] sm:$0xff]
    %v87 = vld [vmem:[#allocation2 + $0x138] sm:$0xff]
    %v88 = vld [vmem:[#allocation2 + $0x140] sm:$0xff]
    %v89 = vld [vmem:[#allocation2 + $0x148] sm:$0xff]
    %v90 = vld [vmem:[#allocation2 + $0x150] sm:$0xff]
    %v91 = vld [vmem:[#allocation2 + $0x158] sm:$0xff]
    %v92 = vld [vmem:[#allocation2 + $0x160] sm:$0xff]
    %v93 = vld [vmem:[#allocation2 + $0x168] sm:$0xff]
    %v94 = vld [vmem:[#allocation2 + $0x170] sm:$0xff]
    %v95 = vld [vmem:[#allocation2 + $0x178] sm:$0xff]
    %v96 = vld [vmem:[#allocation2 + $0x180] sm:$0xff]
    %v97 = vld [vmem:[#allocation2 + $0x188] sm:$0xff]
    %v98 = vld [vmem:[#allocation2 + $0x190] sm:$0xff]
    %v99 = vld [vmem:[#allocation2 + $0x198] sm:$0xff]
    %v100 = vld [vmem:[#allocation2 + $0x1a0] sm:$0xff]
    %v101 = vld [vmem:[#allocation2 + $0x1a8] sm:$0xff]
    %v102 = vld [vmem:[#allocation2 + $0x1b0] sm:$0xff]
    %v103 = vld [vmem:[#allocation2 + $0x1b8] sm:$0xff]
    %v104 = vld [vmem:[#allocation2 + $0x1c0] sm:$0xff]
    %v105 = vld [vmem:[#allocation2 + $0x1c8] sm:$0xff]
    %v106 = vld [vmem:[#allocation2 + $0x1d0] sm:$0xff]
    %v107 = vld [vmem:[#allocation2 + $0x1d8] sm:$0xff]
    %v108 = vld [vmem:[#allocation2 + $0x1e0] sm:$0xff]
    %v109 = vld [vmem:[#allocation2 + $0x1e8] sm:$0xff]
    %v110 = vld [vmem:[#allocation2 + $0x1f0] sm:$0xff]
    %v111 = vld [vmem:[#allocation2 + $0x1f8] sm:$0xff]
    %v112 = vld [vmem:[#allocation2 + $0x200] sm:$0xff]
    %v113 = vld [vmem:[#allocation2 + $0x208] sm:$0xff]
    %v114 = vld [vmem:[#allocation2 + $0x210] sm:$0xff]
    %v115 = vld [vmem:[#allocation2 + $0x218] sm:$0xff]
    %v116 = vld [vmem:[#allocation2 + $0x220] sm:$0xff]
    %v117 = vld [vmem:[#allocation2 + $0x228] sm:$0xff]
    %v118 = vld [vmem:[#allocation2 + $0x230] sm:$0xff]
    %v119 = vld [vmem:[#allocation2 + $0x238] sm:$0xff]
    %v120 = vld [vmem:[#allocation2 + $0x240] sm:$0xff]
    %v121 = vld [vmem:[#allocation2 + $0x248] sm:$0xff]
    %v122 = vld [vmem:[#allocation2 + $0x250] sm:$0xff]
    %v123 = vld [vmem:[#allocation2 + $0x258] sm:$0xff]
    %v124 = vld [vmem:[#allocation2 + $0x260] sm:$0xff]
    %v125 = vld [vmem:[#allocation2 + $0x268] sm:$0xff]
    %v126 = vld [vmem:[#allocation2 + $0x270] sm:$0xff]
    %v127 = vld [vmem:[#allocation2 + $0x278] sm:$0xff]
    %v128 = vld [vmem:[#allocation2 + $0x280] sm:$0xff]
    %v129 = vld [vmem:[#allocation2 + $0x288] sm:$0xff]
    %v130 = vld [vmem:[#allocation2 + $0x290] sm:$0xff]
    %v131 = vld [vmem:[#allocation2 + $0x298] sm:$0xff]
    %v132 = vld [vmem:[#allocation2 + $0x2a0] sm:$0xff]
    %v133 = vld [vmem:[#allocation2 + $0x2a8] sm:$0xff]
    %v134 = vld [vmem:[#allocation2 + $0x2b0] sm:$0xff]
    %v135 = vld [vmem:[#allocation2 + $0x2b8] sm:$0xff]
    %v136 = vld [vmem:[#allocation2 + $0x2c0] sm:$0xff]
    %v137 = vld [vmem:[#allocation2 + $0x2c8] sm:$0xff]
    %v138 = vld [vmem:[#allocation2 + $0x2d0] sm:$0xff]
    %v139 = vld [vmem:[#allocation2 + $0x2d8] sm:$0xff]
    %v140 = vld [vmem:[#allocation2 + $0x2e0] sm:$0xff]
    %v141 = vld [vmem:[#allocation2 + $0x2e8] sm:$0xff]
    %v142 = vld [vmem:[#allocation2 + $0x2f0] sm:$0xff]
    %v143 = vld [vmem:[#allocation2 + $0x2f8] sm:$0xff]
    %v144 = vld [vmem:[#allocation2 + $0x300] sm:$0xff]
    %v145 = vld [vmem:[#allocation2 + $0x308] sm:$0xff]
    %v146 = vld [vmem:[#allocation2 + $0x310] sm:$0xff]
    %v147 = vld [vmem:[#allocation2 + $0x318] sm:$0xff]
    %v148 = vld [vmem:[#allocation2 + $0x320] sm:$0xff]
    %v149 = vld [vmem:[#allocation2 + $0x328] sm:$0xff]
    %v150 = vld [vmem:[#allocation2 + $0x330] sm:$0xff]
    %v151 = vld [vmem:[#allocation2 + $0x338] sm:$0xff]
    %v152 = vld [vmem:[#allocation2 + $0x340] sm:$0xff]
    %v153 = vld [vmem:[#allocation2 + $0x348] sm:$0xff]
    %v154 = vld [vmem:[#allocation2 + $0x350] sm:$0xff]
    %v155 = vld [vmem:[#allocation2 + $0x358] sm:$0xff]
    %v156 = vld [vmem:[#allocation2 + $0x360] sm:$0xff]
    %v157 = vld [vmem:[#allocation2 + $0x368] sm:$0xff]
    %v158 = vld [vmem:[#allocation2 + $0x370] sm:$0xff]
    %v159 = vld [vmem:[#allocation2 + $0x378] sm:$0xff]
    %v160 = vld [vmem:[#allocation2 + $0x380] sm:$0xff]
    %v161 = vld [vmem:[#allocation2 + $0x388] sm:$0xff]
    %v162 = vld [vmem:[#allocation2 + $0x390] sm:$0xff]
    %v163 = vld [vmem:[#allocation2 + $0x398] sm:$0xff]
    %v164 = vld [vmem:[#allocation2 + $0x3a0] sm:$0xff]
    %v165 = vld [vmem:[#allocation2 + $0x3a8] sm:$0xff]
    %v166 = vld [vmem:[#allocation2 + $0x3b0] sm:$0xff]
    %v167 = vld [vmem:[#allocation2 + $0x3b8] sm:$0xff]
    %v168 = vld [vmem:[#allocation2 + $0x3c0] sm:$0xff]
    %v169 = vld [vmem:[#allocation2 + $0x3c8] sm:$0xff]
    %v170 = vld [vmem:[#allocation2 + $0x3d0] sm:$0xff]
    %v171 = vld [vmem:[#allocation2 + $0x3d8] sm:$0xff]
    %v172 = vld [vmem:[#allocation2 + $0x3e0] sm:$0xff]
    %v173 = vld [vmem:[#allocation2 + $0x3e8] sm:$0xff]
    %v174 = vld [vmem:[#allocation2 + $0x3f0] sm:$0xff]
    %v175 = vld [vmem:[#allocation2 + $0x3f8] sm:$0xff]
    %s176 = scalar_lea.vmem [#allocation2], 1024
    %v177 = vld [vmem:[%s176] sm:$0xff]
    %v178 = vld [vmem:[%s176 + $0x8] sm:$0xff]
    %v179 = vld [vmem:[%s176 + $0x10] sm:$0xff]
    %v180 = vld [vmem:[%s176 + $0x18] sm:$0xff]
    %v181 = vld [vmem:[%s176 + $0x20] sm:$0xff]
    %v182 = vld [vmem:[%s176 + $0x28] sm:$0xff]
    %v183 = vld [vmem:[%s176 + $0x30] sm:$0xff]
    %v184 = vld [vmem:[%s176 + $0x38] sm:$0xff]
    %v185 = vld [vmem:[%s176 + $0x40] sm:$0xff]
    %v186 = vld [vmem:[%s176 + $0x48] sm:$0xff]
    %v187 = vld [vmem:[%s176 + $0x50] sm:$0xff]
    %v188 = vld [vmem:[%s176 + $0x58] sm:$0xff]
    %v189 = vld [vmem:[%s176 + $0x60] sm:$0xff]
    %v190 = vld [vmem:[%s176 + $0x68] sm:$0xff]
    %v191 = vld [vmem:[%s176 + $0x70] sm:$0xff]
    %v192 = vld [vmem:[%s176 + $0x78] sm:$0xff]
    %v193 = vld [vmem:[%s176 + $0x80] sm:$0xff]
    %v194 = vld [vmem:[%s176 + $0x88] sm:$0xff]
    %v195 = vld [vmem:[%s176 + $0x90] sm:$0xff]
    %v196 = vld [vmem:[%s176 + $0x98] sm:$0xff]
    %v197 = vld [vmem:[%s176 + $0xa0] sm:$0xff]
    %v198 = vld [vmem:[%s176 + $0xa8] sm:$0xff]
    %v199 = vld [vmem:[%s176 + $0xb0] sm:$0xff]
    %v200 = vld [vmem:[%s176 + $0xb8] sm:$0xff]
    %v201 = vld [vmem:[%s176 + $0xc0] sm:$0xff]
    %v202 = vld [vmem:[%s176 + $0xc8] sm:$0xff]
    %v203 = vld [vmem:[%s176 + $0xd0] sm:$0xff]
    %v204 = vld [vmem:[%s176 + $0xd8] sm:$0xff]
    %v205 = vld [vmem:[%s176 + $0xe0] sm:$0xff]
    %v206 = vld [vmem:[%s176 + $0xe8] sm:$0xff]
    %v207 = vld [vmem:[%s176 + $0xf0] sm:$0xff]
    %v208 = vld [vmem:[%s176 + $0xf8] sm:$0xff]
    %v209 = vld [vmem:[%s176 + $0x100] sm:$0xff]
    %v210 = vld [vmem:[%s176 + $0x108] sm:$0xff]
    %v211 = vld [vmem:[%s176 + $0x110] sm:$0xff]
    %v212 = vld [vmem:[%s176 + $0x118] sm:$0xff]
    %v213 = vld [vmem:[%s176 + $0x120] sm:$0xff]
    %v214 = vld [vmem:[%s176 + $0x128] sm:$0xff]
    %v215 = vld [vmem:[%s176 + $0x130] sm:$0xff]
    %v216 = vld [vmem:[%s176 + $0x138] sm:$0xff]
    %v217 = vld [vmem:[%s176 + $0x140] sm:$0xff]
    %v218 = vld [vmem:[%s176 + $0x148] sm:$0xff]
    %v219 = vld [vmem:[%s176 + $0x150] sm:$0xff]
    %v220 = vld [vmem:[%s176 + $0x158] sm:$0xff]
    %v221 = vld [vmem:[%s176 + $0x160] sm:$0xff]
    %v222 = vld [vmem:[%s176 + $0x168] sm:$0xff]
    %v223 = vld [vmem:[%s176 + $0x170] sm:$0xff]
    %v224 = vld [vmem:[%s176 + $0x178] sm:$0xff]
    %v225 = vld [vmem:[%s176 + $0x180] sm:$0xff]
    %v226 = vld [vmem:[%s176 + $0x188] sm:$0xff]
    %v227 = vld [vmem:[%s176 + $0x190] sm:$0xff]
    %v228 = vld [vmem:[%s176 + $0x198] sm:$0xff]
    %v229 = vld [vmem:[%s176 + $0x1a0] sm:$0xff]
    %v230 = vld [vmem:[%s176 + $0x1a8] sm:$0xff]
    %v231 = vld [vmem:[%s176 + $0x1b0] sm:$0xff]
    %v232 = vld [vmem:[%s176 + $0x1b8] sm:$0xff]
    %v233 = vld [vmem:[%s176 + $0x1c0] sm:$0xff]
    %v234 = vld [vmem:[%s176 + $0x1c8] sm:$0xff]
    %v235 = vld [vmem:[%s176 + $0x1d0] sm:$0xff]
    %v236 = vld [vmem:[%s176 + $0x1d8] sm:$0xff]
    %v237 = vld [vmem:[%s176 + $0x1e0] sm:$0xff]
    %v238 = vld [vmem:[%s176 + $0x1e8] sm:$0xff]
    %v239 = vld [vmem:[%s176 + $0x1f0] sm:$0xff]
    %v240 = vld [vmem:[%s176 + $0x1f8] sm:$0xff]
    %v241 = vld [vmem:[%s176 + $0x200] sm:$0xff]
    %v242 = vld [vmem:[%s176 + $0x208] sm:$0xff]
    %v243 = vld [vmem:[%s176 + $0x210] sm:$0xff]
    %v244 = vld [vmem:[%s176 + $0x218] sm:$0xff]
    %v245 = vld [vmem:[%s176 + $0x220] sm:$0xff]
    %v246 = vld [vmem:[%s176 + $0x228] sm:$0xff]
    %v247 = vld [vmem:[%s176 + $0x230] sm:$0xff]
    %v248 = vld [vmem:[%s176 + $0x238] sm:$0xff]
    %v249 = vld [vmem:[%s176 + $0x240] sm:$0xff]
    %v250 = vld [vmem:[%s176 + $0x248] sm:$0xff]
    %v251 = vld [vmem:[%s176 + $0x250] sm:$0xff]
    %v252 = vld [vmem:[%s176 + $0x258] sm:$0xff]
    %v253 = vld [vmem:[%s176 + $0x260] sm:$0xff]
    %v254 = vld [vmem:[%s176 + $0x268] sm:$0xff]
    %v255 = vld [vmem:[%s176 + $0x270] sm:$0xff]
    %v256 = vld [vmem:[%s176 + $0x278] sm:$0xff]
    %v257 = vld [vmem:[%s176 + $0x280] sm:$0xff]
    %v258 = vld [vmem:[%s176 + $0x288] sm:$0xff]
    %v259 = vld [vmem:[%s176 + $0x290] sm:$0xff]
    %v260 = vld [vmem:[%s176 + $0x298] sm:$0xff]
    %v261 = vld [vmem:[%s176 + $0x2a0] sm:$0xff]
    %v262 = vld [vmem:[%s176 + $0x2a8] sm:$0xff]
    %v263 = vld [vmem:[%s176 + $0x2b0] sm:$0xff]
    %v264 = vld [vmem:[%s176 + $0x2b8] sm:$0xff]
    %v265 = vld [vmem:[%s176 + $0x2c0] sm:$0xff]
    %v266 = vld [vmem:[%s176 + $0x2c8] sm:$0xff]
    %v267 = vld [vmem:[%s176 + $0x2d0] sm:$0xff]
    %v268 = vld [vmem:[%s176 + $0x2d8] sm:$0xff]
    %v269 = vld [vmem:[%s176 + $0x2e0] sm:$0xff]
    %v270 = vld [vmem:[%s176 + $0x2e8] sm:$0xff]
    %v271 = vld [vmem:[%s176 + $0x2f0] sm:$0xff]
    %v272 = vld [vmem:[%s176 + $0x2f8] sm:$0xff]
    %v273 = vld [vmem:[%s176 + $0x300] sm:$0xff]
    %v274 = vld [vmem:[%s176 + $0x308] sm:$0xff]
    %v275 = vld [vmem:[%s176 + $0x310] sm:$0xff]
    %v276 = vld [vmem:[%s176 + $0x318] sm:$0xff]
    %v277 = vld [vmem:[%s176 + $0x320] sm:$0xff]
    %v278 = vld [vmem:[%s176 + $0x328] sm:$0xff]
    %v279 = vld [vmem:[%s176 + $0x330] sm:$0xff]
    %v280 = vld [vmem:[%s176 + $0x338] sm:$0xff]
    %v281 = vld [vmem:[%s176 + $0x340] sm:$0xff]
    %v282 = vld [vmem:[%s176 + $0x348] sm:$0xff]
    %v283 = vld [vmem:[%s176 + $0x350] sm:$0xff]
    %v284 = vld [vmem:[%s176 + $0x358] sm:$0xff]
    %v285 = vld [vmem:[%s176 + $0x360] sm:$0xff]
    %v286 = vld [vmem:[%s176 + $0x368] sm:$0xff]
    %v287 = vld [vmem:[%s176 + $0x370] sm:$0xff]
    %v288 = vld [vmem:[%s176 + $0x378] sm:$0xff]
    %v289 = vld [vmem:[%s176 + $0x380] sm:$0xff]
    %v290 = vld [vmem:[%s176 + $0x388] sm:$0xff]
    %v291 = vld [vmem:[%s176 + $0x390] sm:$0xff]
    %v292 = vld [vmem:[%s176 + $0x398] sm:$0xff]
    %v293 = vld [vmem:[%s176 + $0x3a0] sm:$0xff]
    %v294 = vld [vmem:[%s176 + $0x3a8] sm:$0xff]
    %v295 = vld [vmem:[%s176 + $0x3b0] sm:$0xff]
    %v296 = vld [vmem:[%s176 + $0x3b8] sm:$0xff]
    %v297 = vld [vmem:[%s176 + $0x3c0] sm:$0xff]
    %v298 = vld [vmem:[%s176 + $0x3c8] sm:$0xff]
    %v299 = vld [vmem:[%s176 + $0x3d0] sm:$0xff]
    %v300 = vld [vmem:[%s176 + $0x3d8] sm:$0xff]
    %v301 = vld [vmem:[%s176 + $0x3e0] sm:$0xff]
    %v302 = vld [vmem:[%s176 + $0x3e8] sm:$0xff]
    %v303 = vld [vmem:[%s176 + $0x3f0] sm:$0xff]
    %v304 = vld [vmem:[%s176 + $0x3f8] sm:$0xff]
    %v305 = vld [vmem:[%s2] sm:$0xf]
    %s306 = scalar_lea.vmem %s2, 4
    %v307 = vld [vmem:[%s306] sm:$0xf]
    %v308 = vld [vmem:[%s0] sm:$0xff]
    %v310 = vlaneseq
    %v311 = vshrl.u32 %v310, 7
    %v312 = vsub.s32 0, %v311
    %v313 = vrot.slane %v305, %v312
    %v314 = vlaneseq
    %v315 = vshrl.u32 %v314, 7
    %v316 = vsub.s32 1, %v315
    %v317 = vrot.slane %v305, %v316
    %v318 = vlaneseq
    %v319 = vshrl.u32 %v318, 7
    %v320 = vsub.s32 2, %v319
    %v321 = vrot.slane %v305, %v320
    %v322 = vlaneseq
    %v323 = vshrl.u32 %v322, 7
    %v324 = vsub.s32 3, %v323
    %v325 = vrot.slane %v305, %v324
    %330 = vmatprep.subr.mxu0 %v49
    %331 = vmatpush1.msra.mxu0 %v48
    %332 = vmatprep.subr.mxu0 %v53
    %333 = vmatpush1.msra.mxu0 %v52
    %334 = vmatprep.subr.mxu0 %v57
    %335 = vmatpush1.msra.mxu0 %v56
    %336 = vmatprep.subr.mxu0 %v61
    %337 = vmatpush1.msra.mxu0 %v60
    %338 = vmatprep.subr.mxu0 %v65
    %339 = vmatpush1.msra.mxu0 %v64
    %340 = vmatprep.subr.mxu0 %v69
    %341 = vmatpush1.msra.mxu0 %v68
    %342 = vmatprep.subr.mxu0 %v73
    %343 = vmatpush1.msra.mxu0 %v72
    %344 = vmatprep.subr.mxu0 %v77
    %345 = vmatpush1.msra.mxu0 %v76
    %346 = vmatprep.subr.mxu0 %v81
    %347 = vmatpush1.msra.mxu0 %v80
    %348 = vmatprep.subr.mxu0 %v85
    %349 = vmatpush1.msra.mxu0 %v84
    %350 = vmatprep.subr.mxu0 %v89
    %351 = vmatpush1.msra.mxu0 %v88
    %352 = vmatprep.subr.mxu0 %v93
    %353 = vmatpush1.msra.mxu0 %v92
    %354 = vmatprep.subr.mxu0 %v97
    %355 = vmatpush1.msra.mxu0 %v96
    %356 = vmatprep.subr.mxu0 %v101
    %357 = vmatpush1.msra.mxu0 %v100
    %358 = vmatprep.subr.mxu0 %v105
    %359 = vmatpush1.msra.mxu0 %v104
    %360 = vmatprep.subr.mxu0 %v109
    %361 = vmatpush1.msra.mxu0 %v108
    %362 = vmatprep.subr.mxu0 %v113
    %363 = vmatpush1.msra.mxu0 %v112
    %364 = vmatprep.subr.mxu0 %v117
    %365 = vmatpush1.msra.mxu0 %v116
    %366 = vmatprep.subr.mxu0 %v121
    %367 = vmatpush1.msra.mxu0 %v120
    %368 = vmatprep.subr.mxu0 %v125
    %369 = vmatpush1.msra.mxu0 %v124
    %370 = vmatprep.subr.mxu0 %v129
    %371 = vmatpush1.msra.mxu0 %v128
    %372 = vmatprep.subr.mxu0 %v133
    %373 = vmatpush1.msra.mxu0 %v132
    %374 = vmatprep.subr.mxu0 %v137
    %375 = vmatpush1.msra.mxu0 %v136
    %376 = vmatprep.subr.mxu0 %v141
    %377 = vmatpush1.msra.mxu0 %v140
    %378 = vmatprep.subr.mxu0 %v145
    %379 = vmatpush1.msra.mxu0 %v144
    %380 = vmatprep.subr.mxu0 %v149
    %381 = vmatpush1.msra.mxu0 %v148
    %382 = vmatprep.subr.mxu0 %v153
    %383 = vmatpush1.msra.mxu0 %v152
    %384 = vmatprep.subr.mxu0 %v157
    %385 = vmatpush1.msra.mxu0 %v156
    %386 = vmatprep.subr.mxu0 %v161
    %387 = vmatpush1.msra.mxu0 %v160
    %388 = vmatprep.subr.mxu0 %v165
    %389 = vmatpush1.msra.mxu0 %v164
    %390 = vmatprep.subr.mxu0 %v169
    %391 = vmatpush1.msra.mxu0 %v168
    %392 = vmatprep.subr.mxu0 %v173
    %393 = vmatpush1.msra.mxu0 %v172
    %394 = vmatprep.mubr.f32.mxu0 0.0
    %395 = vmatmul.mubr.f32.gmra.mrb[0].mxu0 %v308
    %v396 = vpop.f32.mrb[0].mxu0
    %v397 = vadd.f32 %v313, %v396
    %v398 = vpop.f32.mrb[0].mxu0
    %v399 = vadd.f32 %v317, %v398
    %400 = vdwg.mxu0
    %401 = vmatprep.subr.mxu0 %v51
    %402 = vmatpush1.msra.mxu0 %v50
    %403 = vmatprep.subr.mxu0 %v55
    %404 = vmatpush1.msra.mxu0 %v54
    %405 = vmatprep.subr.mxu0 %v59
    %406 = vmatpush1.msra.mxu0 %v58
    %407 = vmatprep.subr.mxu0 %v63
    %408 = vmatpush1.msra.mxu0 %v62
    %409 = vmatprep.subr.mxu0 %v67
    %410 = vmatpush1.msra.mxu0 %v66
    %411 = vmatprep.subr.mxu0 %v71
    %412 = vmatpush1.msra.mxu0 %v70
    %413 = vmatprep.subr.mxu0 %v75
    %414 = vmatpush1.msra.mxu0 %v74
    %415 = vmatprep.subr.mxu0 %v79
    %416 = vmatpush1.msra.mxu0 %v78
    %417 = vmatprep.subr.mxu0 %v83
    %418 = vmatpush1.msra.mxu0 %v82
    %419 = vmatprep.subr.mxu0 %v87
    %420 = vmatpush1.msra.mxu0 %v86
    %421 = vmatprep.subr.mxu0 %v91
    %422 = vmatpush1.msra.mxu0 %v90
    %423 = vmatprep.subr.mxu0 %v95
    %424 = vmatpush1.msra.mxu0 %v94
    %425 = vmatprep.subr.mxu0 %v99
    %426 = vmatpush1.msra.mxu0 %v98
    %427 = vmatprep.subr.mxu0 %v103
    %428 = vmatpush1.msra.mxu0 %v102
    %429 = vmatprep.subr.mxu0 %v107
    %430 = vmatpush1.msra.mxu0 %v106
    %431 = vmatprep.subr.mxu0 %v111
    %432 = vmatpush1.msra.mxu0 %v110
    %433 = vmatprep.subr.mxu0 %v115
    %434 = vmatpush1.msra.mxu0 %v114
    %435 = vmatprep.subr.mxu0 %v119
    %436 = vmatpush1.msra.mxu0 %v118
    %437 = vmatprep.subr.mxu0 %v123
    %438 = vmatpush1.msra.mxu0 %v122
    %439 = vmatprep.subr.mxu0 %v127
    %440 = vmatpush1.msra.mxu0 %v126
    %441 = vmatprep.subr.mxu0 %v131
    %442 = vmatpush1.msra.mxu0 %v130
    %443 = vmatprep.subr.mxu0 %v135
    %444 = vmatpush1.msra.mxu0 %v134
    %445 = vmatprep.subr.mxu0 %v139
    %446 = vmatpush1.msra.mxu0 %v138
    %447 = vmatprep.subr.mxu0 %v143
    %448 = vmatpush1.msra.mxu0 %v142
    %449 = vmatprep.subr.mxu0 %v147
    %450 = vmatpush1.msra.mxu0 %v146
    %451 = vmatprep.subr.mxu0 %v151
    %452 = vmatpush1.msra.mxu0 %v150
    %453 = vmatprep.subr.mxu0 %v155
    %454 = vmatpush1.msra.mxu0 %v154
    %455 = vmatprep.subr.mxu0 %v159
    %456 = vmatpush1.msra.mxu0 %v158
    %457 = vmatprep.subr.mxu0 %v163
    %458 = vmatpush1.msra.mxu0 %v162
    %459 = vmatprep.subr.mxu0 %v167
    %460 = vmatpush1.msra.mxu0 %v166
    %461 = vmatprep.subr.mxu0 %v171
    %462 = vmatpush1.msra.mxu0 %v170
    %463 = vmatprep.subr.mxu0 %v175
    %464 = vmatpush1.msra.mxu0 %v174
    %465 = vmatprep.mubr.f32.mxu0 0.0
    %466 = vmatmul.mubr.f32.gmra.mrb[0].mxu0 %v308
    %v467 = vpop.f32.mrb[0].mxu0
    %v468 = vadd.f32 %v321, %v467
    %v469 = vpop.f32.mrb[0].mxu0
    %v470 = vadd.f32 %v325, %v469
    %471 = vdwg.mxu0
    %v472 = vxor.u32 %v397, 2147483648
    %v473 = vmul.f32 %v472, 1.442695
    %v474 = vpow.pop %v473
    %v475 = vadd.f32 %v474, 1.0
    %v476 = vrcp.pop %v475
    %v477 = vmul.f32 1.0, %v476
    %v478 = vxor.u32 %v399, 2147483648
    %v479 = vmul.f32 %v478, 1.442695
    %v480 = vpow.pop %v479
    %v481 = vadd.f32 %v480, 1.0
    %v482 = vrcp.pop %v481
    %v483 = vmul.f32 1.0, %v482
    %v484 = vtanh.pop %v468
    %v485 = vxor.u32 %v470, 2147483648
    %v486 = vmul.f32 %v485, 1.442695
    %v487 = vpow.pop %v486
    %v488 = vadd.f32 %v487, 1.0
    %v489 = vrcp.pop %v488
    %v490 = vmul.f32 1.0, %v489
    %v491 = vmul.f32 %v483, 0.0
    %v492 = vmul.f32 %v477, %v484
    %v493 = vadd.f32 %v491, %v492
    %v494 = vtanh.pop %v493
    %v495 = vmul.f32 %v490, %v494
    %v497 = vlaneseq
    %v498 = vshrl.u32 %v497, 7
    %v499 = vsub.s32 0, %v498
    %v500 = vrot.slane %v307, %v499
    %v501 = vlaneseq
    %v502 = vshrl.u32 %v501, 7
    %v503 = vsub.s32 1, %v502
    %v504 = vrot.slane %v307, %v503
    %v505 = vlaneseq
    %v506 = vshrl.u32 %v505, 7
    %v507 = vsub.s32 2, %v506
    %v508 = vrot.slane %v307, %v507
    %v509 = vlaneseq
    %v510 = vshrl.u32 %v509, 7
    %v511 = vsub.s32 3, %v510
    %v512 = vrot.slane %v307, %v511
    %517 = vmatprep.subr.mxu0 %v178
    %518 = vmatpush1.msra.mxu0 %v177
    %519 = vmatprep.subr.mxu0 %v182
    %520 = vmatpush1.msra.mxu0 %v181
    %521 = vmatprep.subr.mxu0 %v186
    %522 = vmatpush1.msra.mxu0 %v185
    %523 = vmatprep.subr.mxu0 %v190
    %524 = vmatpush1.msra.mxu0 %v189
    %525 = vmatprep.subr.mxu0 %v194
    %526 = vmatpush1.msra.mxu0 %v193
    %527 = vmatprep.subr.mxu0 %v198
    %528 = vmatpush1.msra.mxu0 %v197
    %529 = vmatprep.subr.mxu0 %v202
    %530 = vmatpush1.msra.mxu0 %v201
    %531 = vmatprep.subr.mxu0 %v206
    %532 = vmatpush1.msra.mxu0 %v205
    %533 = vmatprep.subr.mxu0 %v210
    %534 = vmatpush1.msra.mxu0 %v209
    %535 = vmatprep.subr.mxu0 %v214
    %536 = vmatpush1.msra.mxu0 %v213
    %537 = vmatprep.subr.mxu0 %v218
    %538 = vmatpush1.msra.mxu0 %v217
    %539 = vmatprep.subr.mxu0 %v222
    %540 = vmatpush1.msra.mxu0 %v221
    %541 = vmatprep.subr.mxu0 %v226
    %542 = vmatpush1.msra.mxu0 %v225
    %543 = vmatprep.subr.mxu0 %v230
    %544 = vmatpush1.msra.mxu0 %v229
    %545 = vmatprep.subr.mxu0 %v234
    %546 = vmatpush1.msra.mxu0 %v233
    %547 = vmatprep.subr.mxu0 %v238
    %548 = vmatpush1.msra.mxu0 %v237
    %549 = vmatprep.subr.mxu0 %v242
    %550 = vmatpush1.msra.mxu0 %v241
    %551 = vmatprep.subr.mxu0 %v246
    %552 = vmatpush1.msra.mxu0 %v245
    %553 = vmatprep.subr.mxu0 %v250
    %554 = vmatpush1.msra.mxu0 %v249
    %555 = vmatprep.subr.mxu0 %v254
    %556 = vmatpush1.msra.mxu0 %v253
    %557 = vmatprep.subr.mxu0 %v258
    %558 = vmatpush1.msra.mxu0 %v257
    %559 = vmatprep.subr.mxu0 %v262
    %560 = vmatpush1.msra.mxu0 %v261
    %561 = vmatprep.subr.mxu0 %v266
    %562 = vmatpush1.msra.mxu0 %v265
    %563 = vmatprep.subr.mxu0 %v270
    %564 = vmatpush1.msra.mxu0 %v269
    %565 = vmatprep.subr.mxu0 %v274
    %566 = vmatpush1.msra.mxu0 %v273
    %567 = vmatprep.subr.mxu0 %v278
    %568 = vmatpush1.msra.mxu0 %v277
    %569 = vmatprep.subr.mxu0 %v282
    %570 = vmatpush1.msra.mxu0 %v281
    %571 = vmatprep.subr.mxu0 %v286
    %572 = vmatpush1.msra.mxu0 %v285
    %573 = vmatprep.subr.mxu0 %v290
    %574 = vmatpush1.msra.mxu0 %v289
    %575 = vmatprep.subr.mxu0 %v294
    %576 = vmatpush1.msra.mxu0 %v293
    %577 = vmatprep.subr.mxu0 %v298
    %578 = vmatpush1.msra.mxu0 %v297
    %579 = vmatprep.subr.mxu0 %v302
    %580 = vmatpush1.msra.mxu0 %v301
    %581 = vmatprep.mubr.f32.mxu0 0.0
    %582 = vmatmul.mubr.f32.gmra.mrb[0].mxu0 %v495
    %v583 = vpop.f32.mrb[0].mxu0
    %v584 = vadd.f32 %v500, %v583
    %v585 = vpop.f32.mrb[0].mxu0
    %v586 = vadd.f32 %v504, %v585
    %587 = vdwg.mxu0
    %588 = vmatprep.subr.mxu0 %v180
    %589 = vmatpush1.msra.mxu0 %v179
    %590 = vmatprep.subr.mxu0 %v184
    %591 = vmatpush1.msra.mxu0 %v183
    %592 = vmatprep.subr.mxu0 %v188
    %593 = vmatpush1.msra.mxu0 %v187
    %594 = vmatprep.subr.mxu0 %v192
    %595 = vmatpush1.msra.mxu0 %v191
    %596 = vmatprep.subr.mxu0 %v196
    %597 = vmatpush1.msra.mxu0 %v195
    %598 = vmatprep.subr.mxu0 %v200
    %599 = vmatpush1.msra.mxu0 %v199
    %600 = vmatprep.subr.mxu0 %v204
    %601 = vmatpush1.msra.mxu0 %v203
    %602 = vmatprep.subr.mxu0 %v208
    %603 = vmatpush1.msra.mxu0 %v207
    %604 = vmatprep.subr.mxu0 %v212
    %605 = vmatpush1.msra.mxu0 %v211
    %606 = vmatprep.subr.mxu0 %v216
    %607 = vmatpush1.msra.mxu0 %v215
    %608 = vmatprep.subr.mxu0 %v220
    %609 = vmatpush1.msra.mxu0 %v219
    %610 = vmatprep.subr.mxu0 %v224
    %611 = vmatpush1.msra.mxu0 %v223
    %612 = vmatprep.subr.mxu0 %v228
    %613 = vmatpush1.msra.mxu0 %v227
    %614 = vmatprep.subr.mxu0 %v232
    %615 = vmatpush1.msra.mxu0 %v231
    %616 = vmatprep.subr.mxu0 %v236
    %617 = vmatpush1.msra.mxu0 %v235
    %618 = vmatprep.subr.mxu0 %v240
    %619 = vmatpush1.msra.mxu0 %v239
    %620 = vmatprep.subr.mxu0 %v244
    %621 = vmatpush1.msra.mxu0 %v243
    %622 = vmatprep.subr.mxu0 %v248
    %623 = vmatpush1.msra.mxu0 %v247
    %624 = vmatprep.subr.mxu0 %v252
    %625 = vmatpush1.msra.mxu0 %v251
    %626 = vmatprep.subr.mxu0 %v256
    %627 = vmatpush1.msra.mxu0 %v255
    %628 = vmatprep.subr.mxu0 %v260
    %629 = vmatpush1.msra.mxu0 %v259
    %630 = vmatprep.subr.mxu0 %v264
    %631 = vmatpush1.msra.mxu0 %v263
    %632 = vmatprep.subr.mxu0 %v268
    %633 = vmatpush1.msra.mxu0 %v267
    %634 = vmatprep.subr.mxu0 %v272
    %635 = vmatpush1.msra.mxu0 %v271
    %636 = vmatprep.subr.mxu0 %v276
    %637 = vmatpush1.msra.mxu0 %v275
    %638 = vmatprep.subr.mxu0 %v280
    %639 = vmatpush1.msra.mxu0 %v279
    %640 = vmatprep.subr.mxu0 %v284
    %641 = vmatpush1.msra.mxu0 %v283
    %642 = vmatprep.subr.mxu0 %v288
    %643 = vmatpush1.msra.mxu0 %v287
    %644 = vmatprep.subr.mxu0 %v292
    %645 = vmatpush1.msra.mxu0 %v291
    %646 = vmatprep.subr.mxu0 %v296
    %647 = vmatpush1.msra.mxu0 %v295
    %648 = vmatprep.subr.mxu0 %v300
    %649 = vmatpush1.msra.mxu0 %v299
    %650 = vmatprep.subr.mxu0 %v304
    %651 = vmatpush1.msra.mxu0 %v303
    %652 = vmatprep.mubr.f32.mxu0 0.0
    %653 = vmatmul.mubr.f32.gmra.mrb[0].mxu0 %v495
    %v654 = vpop.f32.mrb[0].mxu0
    %v655 = vadd.f32 %v508, %v654
    %v656 = vpop.f32.mrb[0].mxu0
    %v657 = vadd.f32 %v512, %v656
    %658 = vdwg.mxu0
    %v659 = vxor.u32 %v584, 2147483648
    %v660 = vmul.f32 %v659, 1.442695
    %v661 = vpow.pop %v660
    %v662 = vadd.f32 %v661, 1.0
    %v663 = vrcp.pop %v662
    %v664 = vmul.f32 1.0, %v663
    %v665 = vxor.u32 %v586, 2147483648
    %v666 = vmul.f32 %v665, 1.442695
    %v667 = vpow.pop %v666
    %v668 = vadd.f32 %v667, 1.0
    %v669 = vrcp.pop %v668
    %v670 = vmul.f32 1.0, %v669
    %v671 = vtanh.pop %v655
    %v672 = vxor.u32 %v657, 2147483648
    %v673 = vmul.f32 %v672, 1.442695
    %v674 = vpow.pop %v673
    %v675 = vadd.f32 %v674, 1.0
    %v676 = vrcp.pop %v675
    %v677 = vmul.f32 1.0, %v676
    %v678 = vmul.f32 %v670, 0.0
    %v679 = vmul.f32 %v664, %v671
    %v680 = vadd.f32 %v678, %v679
    %v681 = vtanh.pop %v680
    %v682 = vmul.f32 %v677, %v681
    %s683 = scalar_lea.vmem %s0, 8
    %v684 = vld [vmem:[%s683] sm:$0xff]
    %685 = vmatprep.subr.mxu0 %v49
    %686 = vmatpush1.msra.mxu0 %v48
    %687 = vmatprep.subr.mxu0 %v53
    %688 = vmatpush1.msra.mxu0 %v52
    %689 = vmatprep.subr.mxu0 %v57
    %690 = vmatpush1.msra.mxu0 %v56
    %691 = vmatprep.subr.mxu0 %v61
    %692 = vmatpush1.msra.mxu0 %v60
    %693 = vmatprep.subr.mxu0 %v65
    %694 = vmatpush1.msra.mxu0 %v64
    %695 = vmatprep.subr.mxu0 %v69
    %696 = vmatpush1.msra.mxu0 %v68
    %697 = vmatprep.subr.mxu0 %v73
    %698 = vmatpush1.msra.mxu0 %v72
    %699 = vmatprep.subr.mxu0 %v77
    %700 = vmatpush1.msra.mxu0 %v76
    %701 = vmatprep.subr.mxu0 %v81
    %702 = vmatpush1.msra.mxu0 %v80
    %703 = vmatprep.subr.mxu0 %v85
    %704 = vmatpush1.msra.mxu0 %v84
    %705 = vmatprep.subr.mxu0 %v89
    %706 = vmatpush1.msra.mxu0 %v88
    %707 = vmatprep.subr.mxu0 %v93
    %708 = vmatpush1.msra.mxu0 %v92
    %709 = vmatprep.subr.mxu0 %v97
    %710 = vmatpush1.msra.mxu0 %v96
    %711 = vmatprep.subr.mxu0 %v101
    %712 = vmatpush1.msra.mxu0 %v100
    %713 = vmatprep.subr.mxu0 %v105
    %714 = vmatpush1.msra.mxu0 %v104
    %715 = vmatprep.subr.mxu0 %v109
    %716 = vmatpush1.msra.mxu0 %v108
    %717 = vmatprep.subr.mxu0 %v113
    %718 = vmatpush1.msra.mxu0 %v112
    %719 = vmatprep.subr.mxu0 %v117
    %720 = vmatpush1.msra.mxu0 %v116
    %721 = vmatprep.subr.mxu0 %v121
    %722 = vmatpush1.msra.mxu0 %v120
    %723 = vmatprep.subr.mxu0 %v125
    %724 = vmatpush1.msra.mxu0 %v124
    %725 = vmatprep.subr.mxu0 %v129
    %726 = vmatpush1.msra.mxu0 %v128
    %727 = vmatprep.subr.mxu0 %v133
    %728 = vmatpush1.msra.mxu0 %v132
    %729 = vmatprep.subr.mxu0 %v137
    %730 = vmatpush1.msra.mxu0 %v136
    %731 = vmatprep.subr.mxu0 %v141
    %732 = vmatpush1.msra.mxu0 %v140
    %733 = vmatprep.subr.mxu0 %v145
    %734 = vmatpush1.msra.mxu0 %v144
    %735 = vmatprep.subr.mxu0 %v149
    %736 = vmatpush1.msra.mxu0 %v148
    %737 = vmatprep.subr.mxu0 %v153
    %738 = vmatpush1.msra.mxu0 %v152
    %739 = vmatprep.subr.mxu0 %v157
    %740 = vmatpush1.msra.mxu0 %v156
    %741 = vmatprep.subr.mxu0 %v161
    %742 = vmatpush1.msra.mxu0 %v160
    %743 = vmatprep.subr.mxu0 %v165
    %744 = vmatpush1.msra.mxu0 %v164
    %745 = vmatprep.subr.mxu0 %v169
    %746 = vmatpush1.msra.mxu0 %v168
    %747 = vmatprep.subr.mxu0 %v173
    %748 = vmatpush1.msra.mxu0 %v172
    %749 = vmatprep.mubr.f32.mxu0 %v495
    %750 = vmatmul.mubr.f32.gmra.mrb[0].mxu0 %v684
    %v751 = vpop.f32.mrb[0].mxu0
    %v752 = vadd.f32 %v313, %v751
    %v753 = vpop.f32.mrb[0].mxu0
    %v754 = vadd.f32 %v317, %v753
    %755 = vdwg.mxu0
    %756 = vmatprep.subr.mxu0 %v51
    %757 = vmatpush1.msra.mxu0 %v50
    %758 = vmatprep.subr.mxu0 %v55
    %759 = vmatpush1.msra.mxu0 %v54
    %760 = vmatprep.subr.mxu0 %v59
    %761 = vmatpush1.msra.mxu0 %v58
    %762 = vmatprep.subr.mxu0 %v63
    %763 = vmatpush1.msra.mxu0 %v62
    %764 = vmatprep.subr.mxu0 %v67
    %765 = vmatpush1.msra.mxu0 %v66
    %766 = vmatprep.subr.mxu0 %v71
    %767 = vmatpush1.msra.mxu0 %v70
    %768 = vmatprep.subr.mxu0 %v75
    %769 = vmatpush1.msra.mxu0 %v74
    %770 = vmatprep.subr.mxu0 %v79
    %771 = vmatpush1.msra.mxu0 %v78
    %772 = vmatprep.subr.mxu0 %v83
    %773 = vmatpush1.msra.mxu0 %v82
    %774 = vmatprep.subr.mxu0 %v87
    %775 = vmatpush1.msra.mxu0 %v86
    %776 = vmatprep.subr.mxu0 %v91
    %777 = vmatpush1.msra.mxu0 %v90
    %778 = vmatprep.subr.mxu0 %v95
    %779 = vmatpush1.msra.mxu0 %v94
    %780 = vmatprep.subr.mxu0 %v99
    %781 = vmatpush1.msra.mxu0 %v98
    %782 = vmatprep.subr.mxu0 %v103
    %783 = vmatpush1.msra.mxu0 %v102
    %784 = vmatprep.subr.mxu0 %v107
    %785 = vmatpush1.msra.mxu0 %v106
    %786 = vmatprep.subr.mxu0 %v111
    %787 = vmatpush1.msra.mxu0 %v110
    %788 = vmatprep.subr.mxu0 %v115
    %789 = vmatpush1.msra.mxu0 %v114
    %790 = vmatprep.subr.mxu0 %v119
    %791 = vmatpush1.msra.mxu0 %v118
    %792 = vmatprep.subr.mxu0 %v123
    %793 = vmatpush1.msra.mxu0 %v122
    %794 = vmatprep.subr.mxu0 %v127
    %795 = vmatpush1.msra.mxu0 %v126
    %796 = vmatprep.subr.mxu0 %v131
    %797 = vmatpush1.msra.mxu0 %v130
    %798 = vmatprep.subr.mxu0 %v135
    %799 = vmatpush1.msra.mxu0 %v134
    %800 = vmatprep.subr.mxu0 %v139
    %801 = vmatpush1.msra.mxu0 %v138
    %802 = vmatprep.subr.mxu0 %v143
    %803 = vmatpush1.msra.mxu0 %v142
    %804 = vmatprep.subr.mxu0 %v147
    %805 = vmatpush1.msra.mxu0 %v146
    %806 = vmatprep.subr.mxu0 %v151
    %807 = vmatpush1.msra.mxu0 %v150
    %808 = vmatprep.subr.mxu0 %v155
    %809 = vmatpush1.msra.mxu0 %v154
    %810 = vmatprep.subr.mxu0 %v159
    %811 = vmatpush1.msra.mxu0 %v158
    %812 = vmatprep.subr.mxu0 %v163
    %813 = vmatpush1.msra.mxu0 %v162
    %814 = vmatprep.subr.mxu0 %v167
    %815 = vmatpush1.msra.mxu0 %v166
    %816 = vmatprep.subr.mxu0 %v171
    %817 = vmatpush1.msra.mxu0 %v170
    %818 = vmatprep.subr.mxu0 %v175
    %819 = vmatpush1.msra.mxu0 %v174
    %820 = vmatprep.mubr.f32.mxu0 %v495
    %821 = vmatmul.mubr.f32.gmra.mrb[0].mxu0 %v684
    %v822 = vpop.f32.mrb[0].mxu0
    %v823 = vadd.f32 %v321, %v822
    %v824 = vpop.f32.mrb[0].mxu0
    %v825 = vadd.f32 %v325, %v824
    %826 = vdwg.mxu0
    %v827 = vxor.u32 %v752, 2147483648
    %v828 = vmul.f32 %v827, 1.442695
    %v829 = vpow.pop %v828
    %v830 = vadd.f32 %v829, 1.0
    %v831 = vrcp.pop %v830
    %v832 = vmul.f32 1.0, %v831
    %v833 = vxor.u32 %v754, 2147483648
    %v834 = vmul.f32 %v833, 1.442695
    %v835 = vpow.pop %v834
    %v836 = vadd.f32 %v835, 1.0
    %v837 = vrcp.pop %v836
    %v838 = vmul.f32 1.0, %v837
    %v839 = vtanh.pop %v823
    %v840 = vxor.u32 %v825, 2147483648
    %v841 = vmul.f32 %v840, 1.442695
    %v842 = vpow.pop %v841
    %v843 = vadd.f32 %v842, 1.0
    %v844 = vrcp.pop %v843
    %v845 = vmul.f32 1.0, %v844
    %v846 = vmul.f32 %v838, %v493
    %v847 = vmul.f32 %v832, %v839
    %v848 = vadd.f32 %v846, %v847
    %v849 = vtanh.pop %v848
    %v850 = vmul.f32 %v845, %v849
    %851 = vmatprep.subr.mxu0 %v178
    %852 = vmatpush1.msra.mxu0 %v177
    %853 = vmatprep.subr.mxu0 %v182
    %854 = vmatpush1.msra.mxu0 %v181
    %855 = vmatprep.subr.mxu0 %v186
    %856 = vmatpush1.msra.mxu0 %v185
    %857 = vmatprep.subr.mxu0 %v190
    %858 = vmatpush1.msra.mxu0 %v189
    %859 = vmatprep.subr.mxu0 %v194
    %860 = vmatpush1.msra.mxu0 %v193
    %861 = vmatprep.subr.mxu0 %v198
    %862 = vmatpush1.msra.mxu0 %v197
    %863 = vmatprep.subr.mxu0 %v202
    %864 = vmatpush1.msra.mxu0 %v201
    %865 = vmatprep.subr.mxu0 %v206
    %866 = vmatpush1.msra.mxu0 %v205
    %867 = vmatprep.subr.mxu0 %v210
    %868 = vmatpush1.msra.mxu0 %v209
    %869 = vmatprep.subr.mxu0 %v214
    %870 = vmatpush1.msra.mxu0 %v213
    %871 = vmatprep.subr.mxu0 %v218
    %872 = vmatpush1.msra.mxu0 %v217
    %873 = vmatprep.subr.mxu0 %v222
    %874 = vmatpush1.msra.mxu0 %v221
    %875 = vmatprep.subr.mxu0 %v226
    %876 = vmatpush1.msra.mxu0 %v225
    %877 = vmatprep.subr.mxu0 %v230
    %878 = vmatpush1.msra.mxu0 %v229
    %879 = vmatprep.subr.mxu0 %v234
    %880 = vmatpush1.msra.mxu0 %v233
    %881 = vmatprep.subr.mxu0 %v238
    %882 = vmatpush1.msra.mxu0 %v237
    %883 = vmatprep.subr.mxu0 %v242
    %884 = vmatpush1.msra.mxu0 %v241
    %885 = vmatprep.subr.mxu0 %v246
    %886 = vmatpush1.msra.mxu0 %v245
    %887 = vmatprep.subr.mxu0 %v250
    %888 = vmatpush1.msra.mxu0 %v249
    %889 = vmatprep.subr.mxu0 %v254
    %890 = vmatpush1.msra.mxu0 %v253
    %891 = vmatprep.subr.mxu0 %v258
    %892 = vmatpush1.msra.mxu0 %v257
    %893 = vmatprep.subr.mxu0 %v262
    %894 = vmatpush1.msra.mxu0 %v261
    %895 = vmatprep.subr.mxu0 %v266
    %896 = vmatpush1.msra.mxu0 %v265
    %897 = vmatprep.subr.mxu0 %v270
    %898 = vmatpush1.msra.mxu0 %v269
    %899 = vmatprep.subr.mxu0 %v274
    %900 = vmatpush1.msra.mxu0 %v273
    %901 = vmatprep.subr.mxu0 %v278
    %902 = vmatpush1.msra.mxu0 %v277
    %903 = vmatprep.subr.mxu0 %v282
    %904 = vmatpush1.msra.mxu0 %v281
    %905 = vmatprep.subr.mxu0 %v286
    %906 = vmatpush1.msra.mxu0 %v285
    %907 = vmatprep.subr.mxu0 %v290
    %908 = vmatpush1.msra.mxu0 %v289
    %909 = vmatprep.subr.mxu0 %v294
    %910 = vmatpush1.msra.mxu0 %v293
    %911 = vmatprep.subr.mxu0 %v298
    %912 = vmatpush1.msra.mxu0 %v297
    %913 = vmatprep.subr.mxu0 %v302
    %914 = vmatpush1.msra.mxu0 %v301
    %915 = vmatprep.mubr.f32.mxu0 %v682
    %916 = vmatmul.mubr.f32.gmra.mrb[0].mxu0 %v850
    %v917 = vpop.f32.mrb[0].mxu0
    %v918 = vadd.f32 %v500, %v917
    %v919 = vpop.f32.mrb[0].mxu0
    %v920 = vadd.f32 %v504, %v919
    %921 = vdwg.mxu0
    %922 = vmatprep.subr.mxu0 %v180
    %923 = vmatpush1.msra.mxu0 %v179
    %924 = vmatprep.subr.mxu0 %v184
    %925 = vmatpush1.msra.mxu0 %v183
    %926 = vmatprep.subr.mxu0 %v188
    %927 = vmatpush1.msra.mxu0 %v187
    %928 = vmatprep.subr.mxu0 %v192
    %929 = vmatpush1.msra.mxu0 %v191
    %930 = vmatprep.subr.mxu0 %v196
    %931 = vmatpush1.msra.mxu0 %v195
    %932 = vmatprep.subr.mxu0 %v200
    %933 = vmatpush1.msra.mxu0 %v199
    %934 = vmatprep.subr.mxu0 %v204
    %935 = vmatpush1.msra.mxu0 %v203
    %936 = vmatprep.subr.mxu0 %v208
    %937 = vmatpush1.msra.mxu0 %v207
    %938 = vmatprep.subr.mxu0 %v212
    %939 = vmatpush1.msra.mxu0 %v211
    %940 = vmatprep.subr.mxu0 %v216
    %941 = vmatpush1.msra.mxu0 %v215
    %942 = vmatprep.subr.mxu0 %v220
    %943 = vmatpush1.msra.mxu0 %v219
    %944 = vmatprep.subr.mxu0 %v224
    %945 = vmatpush1.msra.mxu0 %v223
    %946 = vmatprep.subr.mxu0 %v228
    %947 = vmatpush1.msra.mxu0 %v227
    %948 = vmatprep.subr.mxu0 %v232
    %949 = vmatpush1.msra.mxu0 %v231
    %950 = vmatprep.subr.mxu0 %v236
    %951 = vmatpush1.msra.mxu0 %v235
    %952 = vmatprep.subr.mxu0 %v240
    %953 = vmatpush1.msra.mxu0 %v239
    %954 = vmatprep.subr.mxu0 %v244
    %955 = vmatpush1.msra.mxu0 %v243
    %956 = vmatprep.subr.mxu0 %v248
    %957 = vmatpush1.msra.mxu0 %v247
    %958 = vmatprep.subr.mxu0 %v252
    %959 = vmatpush1.msra.mxu0 %v251
    %960 = vmatprep.subr.mxu0 %v256
    %961 = vmatpush1.msra.mxu0 %v255
    %962 = vmatprep.subr.mxu0 %v260
    %963 = vmatpush1.msra.mxu0 %v259
    %964 = vmatprep.subr.mxu0 %v264
    %965 = vmatpush1.msra.mxu0 %v263
    %966 = vmatprep.subr.mxu0 %v268
    %967 = vmatpush1.msra.mxu0 %v267
    %968 = vmatprep.subr.mxu0 %v272
    %969 = vmatpush1.msra.mxu0 %v271
    %970 = vmatprep.subr.mxu0 %v276
    %971 = vmatpush1.msra.mxu0 %v275
    %972 = vmatprep.subr.mxu0 %v280
    %973 = vmatpush1.msra.mxu0 %v279
    %974 = vmatprep.subr.mxu0 %v284
    %975 = vmatpush1.msra.mxu0 %v283
    %976 = vmatprep.subr.mxu0 %v288
    %977 = vmatpush1.msra.mxu0 %v287
    %978 = vmatprep.subr.mxu0 %v292
    %979 = vmatpush1.msra.mxu0 %v291
    %980 = vmatprep.subr.mxu0 %v296
    %981 = vmatpush1.msra.mxu0 %v295
    %982 = vmatprep.subr.mxu0 %v300
    %983 = vmatpush1.msra.mxu0 %v299
    %984 = vmatprep.subr.mxu0 %v304
    %985 = vmatpush1.msra.mxu0 %v303
    %986 = vmatprep.mubr.f32.mxu0 %v682
    %987 = vmatmul.mubr.f32.gmra.mrb[0].mxu0 %v850
    %v988 = vpop.f32.mrb[0].mxu0
    %v989 = vadd.f32 %v508, %v988
    %v990 = vpop.f32.mrb[0].mxu0
    %v991 = vadd.f32 %v512, %v990
    %992 = vdwg.mxu0
    %v993 = vxor.u32 %v918, 2147483648
    %v994 = vmul.f32 %v993, 1.442695
    %v995 = vpow.pop %v994
    %v996 = vadd.f32 %v995, 1.0
    %v997 = vrcp.pop %v996
    %v998 = vmul.f32 1.0, %v997
    %v999 = vxor.u32 %v920, 2147483648
    %v1000 = vmul.f32 %v999, 1.442695
    %v1001 = vpow.pop %v1000
    %v1002 = vadd.f32 %v1001, 1.0
    %v1003 = vrcp.pop %v1002
    %v1004 = vmul.f32 1.0, %v1003
    %v1005 = vtanh.pop %v989
    %v1006 = vxor.u32 %v991, 2147483648
    %v1007 = vmul.f32 %v1006, 1.442695
    %v1008 = vpow.pop %v1007
    %v1009 = vadd.f32 %v1008, 1.0
    %v1010 = vrcp.pop %v1009
    %v1011 = vmul.f32 1.0, %v1010
    %v1012 = vmul.f32 %v1004, %v680
    %v1013 = vmul.f32 %v998, %v1005
    %v1014 = vadd.f32 %v1012, %v1013
    %v1015 = vtanh.pop %v1014
    %v1016 = vmul.f32 %v1011, %v1015
    %s1017 = scalar_lea.vmem %s0, 16
    %v1018 = vld [vmem:[%s1017] sm:$0xff]
    %1019 = vmatprep.subr.mxu0 %v49
    %1020 = vmatpush1.msra.mxu0 %v48
    %1021 = vmatprep.subr.mxu0 %v53
    %1022 = vmatpush1.msra.mxu0 %v52
    %1023 = vmatprep.subr.mxu0 %v57
    %1024 = vmatpush1.msra.mxu0 %v56
    %1025 = vmatprep.subr.mxu0 %v61
    %1026 = vmatpush1.msra.mxu0 %v60
    %1027 = vmatprep.subr.mxu0 %v65
    %1028 = vmatpush1.msra.mxu0 %v64
    %1029 = vmatprep.subr.mxu0 %v69
    %1030 = vmatpush1.msra.mxu0 %v68
    %1031 = vmatprep.subr.mxu0 %v73
    %1032 = vmatpush1.msra.mxu0 %v72
    %1033 = vmatprep.subr.mxu0 %v77
    %1034 = vmatpush1.msra.mxu0 %v76
    %1035 = vmatprep.subr.mxu0 %v81
    %1036 = vmatpush1.msra.mxu0 %v80
    %1037 = vmatprep.subr.mxu0 %v85
    %1038 = vmatpush1.msra.mxu0 %v84
    %1039 = vmatprep.subr.mxu0 %v89
    %1040 = vmatpush1.msra.mxu0 %v88
    %1041 = vmatprep.subr.mxu0 %v93
    %1042 = vmatpush1.msra.mxu0 %v92
    %1043 = vmatprep.subr.mxu0 %v97
    %1044 = vmatpush1.msra.mxu0 %v96
    %1045 = vmatprep.subr.mxu0 %v101
    %1046 = vmatpush1.msra.mxu0 %v100
    %1047 = vmatprep.subr.mxu0 %v105
    %1048 = vmatpush1.msra.mxu0 %v104
    %1049 = vmatprep.subr.mxu0 %v109
    %1050 = vmatpush1.msra.mxu0 %v108
    %1051 = vmatprep.subr.mxu0 %v113
    %1052 = vmatpush1.msra.mxu0 %v112
    %1053 = vmatprep.subr.mxu0 %v117
    %1054 = vmatpush1.msra.mxu0 %v116
    %1055 = vmatprep.subr.mxu0 %v121
    %1056 = vmatpush1.msra.mxu0 %v120
    %1057 = vmatprep.subr.mxu0 %v125
    %1058 = vmatpush1.msra.mxu0 %v124
    %1059 = vmatprep.subr.mxu0 %v129
    %1060 = vmatpush1.msra.mxu0 %v128
    %1061 = vmatprep.subr.mxu0 %v133
    %1062 = vmatpush1.msra.mxu0 %v132
    %1063 = vmatprep.subr.mxu0 %v137
    %1064 = vmatpush1.msra.mxu0 %v136
    %1065 = vmatprep.subr.mxu0 %v141
    %1066 = vmatpush1.msra.mxu0 %v140
    %1067 = vmatprep.subr.mxu0 %v145
    %1068 = vmatpush1.msra.mxu0 %v144
    %1069 = vmatprep.subr.mxu0 %v149
    %1070 = vmatpush1.msra.mxu0 %v148
    %1071 = vmatprep.subr.mxu0 %v153
    %1072 = vmatpush1.msra.mxu0 %v152
    %1073 = vmatprep.subr.mxu0 %v157
    %1074 = vmatpush1.msra.mxu0 %v156
    %1075 = vmatprep.subr.mxu0 %v161
    %1076 = vmatpush1.msra.mxu0 %v160
    %1077 = vmatprep.subr.mxu0 %v165
    %1078 = vmatpush1.msra.mxu0 %v164
    %1079 = vmatprep.subr.mxu0 %v169
    %1080 = vmatpush1.msra.mxu0 %v168
    %1081 = vmatprep.subr.mxu0 %v173
    %1082 = vmatpush1.msra.mxu0 %v172
    %1083 = vmatprep.mubr.f32.mxu0 %v850
    %1084 = vmatmul.mubr.f32.gmra.mrb[0].mxu0 %v1018
    %v1085 = vpop.f32.mrb[0].mxu0
    %v1086 = vadd.f32 %v313, %v1085
    %v1087 = vpop.f32.mrb[0].mxu0
    %v1088 = vadd.f32 %v317, %v1087
    %1089 = vdwg.mxu0
    %1090 = vmatprep.subr.mxu0 %v51
    %1091 = vmatpush1.msra.mxu0 %v50
    %1092 = vmatprep.subr.mxu0 %v55
    %1093 = vmatpush1.msra.mxu0 %v54
    %1094 = vmatprep.subr.mxu0 %v59
    %1095 = vmatpush1.msra.mxu0 %v58
    %1096 = vmatprep.subr.mxu0 %v63
    %1097 = vmatpush1.msra.mxu0 %v62
    %1098 = vmatprep.subr.mxu0 %v67
    %1099 = vmatpush1.msra.mxu0 %v66
    %1100 = vmatprep.subr.mxu0 %v71
    %1101 = vmatpush1.msra.mxu0 %v70
    %1102 = vmatprep.subr.mxu0 %v75
    %1103 = vmatpush1.msra.mxu0 %v74
    %1104 = vmatprep.subr.mxu0 %v79
    %1105 = vmatpush1.msra.mxu0 %v78
    %1106 = vmatprep.subr.mxu0 %v83
    %1107 = vmatpush1.msra.mxu0 %v82
    %1108 = vmatprep.subr.mxu0 %v87
    %1109 = vmatpush1.msra.mxu0 %v86
    %1110 = vmatprep.subr.mxu0 %v91
    %1111 = vmatpush1.msra.mxu0 %v90
    %1112 = vmatprep.subr.mxu0 %v95
    %1113 = vmatpush1.msra.mxu0 %v94
    %1114 = vmatprep.subr.mxu0 %v99
    %1115 = vmatpush1.msra.mxu0 %v98
    %1116 = vmatprep.subr.mxu0 %v103
    %1117 = vmatpush1.msra.mxu0 %v102
    %1118 = vmatprep.subr.mxu0 %v107
    %1119 = vmatpush1.msra.mxu0 %v106
    %1120 = vmatprep.subr.mxu0 %v111
    %1121 = vmatpush1.msra.mxu0 %v110
    %1122 = vmatprep.subr.mxu0 %v115
    %1123 = vmatpush1.msra.mxu0 %v114
    %1124 = vmatprep.subr.mxu0 %v119
    %1125 = vmatpush1.msra.mxu0 %v118
    %1126 = vmatprep.subr.mxu0 %v123
    %1127 = vmatpush1.msra.mxu0 %v122
    %1128 = vmatprep.subr.mxu0 %v127
    %1129 = vmatpush1.msra.mxu0 %v126
    %1130 = vmatprep.subr.mxu0 %v131
    %1131 = vmatpush1.msra.mxu0 %v130
    %1132 = vmatprep.subr.mxu0 %v135
    %1133 = vmatpush1.msra.mxu0 %v134
    %1134 = vmatprep.subr.mxu0 %v139
    %1135 = vmatpush1.msra.mxu0 %v138
    %1136 = vmatprep.subr.mxu0 %v143
    %1137 = vmatpush1.msra.mxu0 %v142
    %1138 = vmatprep.subr.mxu0 %v147
    %1139 = vmatpush1.msra.mxu0 %v146
    %1140 = vmatprep.subr.mxu0 %v151
    %1141 = vmatpush1.msra.mxu0 %v150
    %1142 = vmatprep.subr.mxu0 %v155
    %1143 = vmatpush1.msra.mxu0 %v154
    %1144 = vmatprep.subr.mxu0 %v159
    %1145 = vmatpush1.msra.mxu0 %v158
    %1146 = vmatprep.subr.mxu0 %v163
    %1147 = vmatpush1.msra.mxu0 %v162
    %1148 = vmatprep.subr.mxu0 %v167
    %1149 = vmatpush1.msra.mxu0 %v166
    %1150 = vmatprep.subr.mxu0 %v171
    %1151 = vmatpush1.msra.mxu0 %v170
    %1152 = vmatprep.subr.mxu0 %v175
    %1153 = vmatpush1.msra.mxu0 %v174
    %1154 = vmatprep.mubr.f32.mxu0 %v850
    %1155 = vmatmul.mubr.f32.gmra.mrb[0].mxu0 %v1018
    %v1156 = vpop.f32.mrb[0].mxu0
    %v1157 = vadd.f32 %v321, %v1156
    %v1158 = vpop.f32.mrb[0].mxu0
    %v1159 = vadd.f32 %v325, %v1158
    %1160 = vdwg.mxu0
    %v1161 = vxor.u32 %v1086, 2147483648
    %v1162 = vmul.f32 %v1161, 1.442695
    %v1163 = vpow.pop %v1162
    %v1164 = vadd.f32 %v1163, 1.0
    %v1165 = vrcp.pop %v1164
    %v1166 = vmul.f32 1.0, %v1165
    %v1167 = vxor.u32 %v1088, 2147483648
    %v1168 = vmul.f32 %v1167, 1.442695
    %v1169 = vpow.pop %v1168
    %v1170 = vadd.f32 %v1169, 1.0
    %v1171 = vrcp.pop %v1170
    %v1172 = vmul.f32 1.0, %v1171
    %v1173 = vtanh.pop %v1157
    %v1174 = vxor.u32 %v1159, 2147483648
    %v1175 = vmul.f32 %v1174, 1.442695
    %v1176 = vpow.pop %v1175
    %v1177 = vadd.f32 %v1176, 1.0
    %v1178 = vrcp.pop %v1177
    %v1179 = vmul.f32 1.0, %v1178
    %v1180 = vmul.f32 %v1172, %v848
    %v1181 = vmul.f32 %v1166, %v1173
    %v1182 = vadd.f32 %v1180, %v1181
    %v1183 = vtanh.pop %v1182
    %v1184 = vmul.f32 %v1179, %v1183
    %1185 = vmatprep.subr.mxu0 %v178
    %1186 = vmatpush1.msra.mxu0 %v177
    %1187 = vmatprep.subr.mxu0 %v182
    %1188 = vmatpush1.msra.mxu0 %v181
    %1189 = vmatprep.subr.mxu0 %v186
    %1190 = vmatpush1.msra.mxu0 %v185
    %1191 = vmatprep.subr.mxu0 %v190
    %1192 = vmatpush1.msra.mxu0 %v189
    %1193 = vmatprep.subr.mxu0 %v194
    %1194 = vmatpush1.msra.mxu0 %v193
    %1195 = vmatprep.subr.mxu0 %v198
    %1196 = vmatpush1.msra.mxu0 %v197
    %1197 = vmatprep.subr.mxu0 %v202
    %1198 = vmatpush1.msra.mxu0 %v201
    %1199 = vmatprep.subr.mxu0 %v206
    %1200 = vmatpush1.msra.mxu0 %v205
    %1201 = vmatprep.subr.mxu0 %v210
    %1202 = vmatpush1.msra.mxu0 %v209
    %1203 = vmatprep.subr.mxu0 %v214
    %1204 = vmatpush1.msra.mxu0 %v213
    %1205 = vmatprep.subr.mxu0 %v218
    %1206 = vmatpush1.msra.mxu0 %v217
    %1207 = vmatprep.subr.mxu0 %v222
    %1208 = vmatpush1.msra.mxu0 %v221
    %1209 = vmatprep.subr.mxu0 %v226
    %1210 = vmatpush1.msra.mxu0 %v225
    %1211 = vmatprep.subr.mxu0 %v230
    %1212 = vmatpush1.msra.mxu0 %v229
    %1213 = vmatprep.subr.mxu0 %v234
    %1214 = vmatpush1.msra.mxu0 %v233
    %1215 = vmatprep.subr.mxu0 %v238
    %1216 = vmatpush1.msra.mxu0 %v237
    %1217 = vmatprep.subr.mxu0 %v242
    %1218 = vmatpush1.msra.mxu0 %v241
    %1219 = vmatprep.subr.mxu0 %v246
    %1220 = vmatpush1.msra.mxu0 %v245
    %1221 = vmatprep.subr.mxu0 %v250
    %1222 = vmatpush1.msra.mxu0 %v249
    %1223 = vmatprep.subr.mxu0 %v254
    %1224 = vmatpush1.msra.mxu0 %v253
    %1225 = vmatprep.subr.mxu0 %v258
    %1226 = vmatpush1.msra.mxu0 %v257
    %1227 = vmatprep.subr.mxu0 %v262
    %1228 = vmatpush1.msra.mxu0 %v261
    %1229 = vmatprep.subr.mxu0 %v266
    %1230 = vmatpush1.msra.mxu0 %v265
    %1231 = vmatprep.subr.mxu0 %v270
    %1232 = vmatpush1.msra.mxu0 %v269
    %1233 = vmatprep.subr.mxu0 %v274
    %1234 = vmatpush1.msra.mxu0 %v273
    %1235 = vmatprep.subr.mxu0 %v278
    %1236 = vmatpush1.msra.mxu0 %v277
    %1237 = vmatprep.subr.mxu0 %v282
    %1238 = vmatpush1.msra.mxu0 %v281
    %1239 = vmatprep.subr.mxu0 %v286
    %1240 = vmatpush1.msra.mxu0 %v285
    %1241 = vmatprep.subr.mxu0 %v290
    %1242 = vmatpush1.msra.mxu0 %v289
    %1243 = vmatprep.subr.mxu0 %v294
    %1244 = vmatpush1.msra.mxu0 %v293
    %1245 = vmatprep.subr.mxu0 %v298
    %1246 = vmatpush1.msra.mxu0 %v297
    %1247 = vmatprep.subr.mxu0 %v302
    %1248 = vmatpush1.msra.mxu0 %v301
    %1249 = vmatprep.mubr.f32.mxu0 %v1016
    %1250 = vmatmul.mubr.f32.gmra.mrb[0].mxu0 %v1184
    %v1251 = vpop.f32.mrb[0].mxu0
    %v1252 = vadd.f32 %v500, %v1251
    %v1253 = vpop.f32.mrb[0].mxu0
    %v1254 = vadd.f32 %v504, %v1253
    %1255 = vdwg.mxu0
    %1256 = vmatprep.subr.mxu0 %v180
    %1257 = vmatpush1.msra.mxu0 %v179
    %1258 = vmatprep.subr.mxu0 %v184
    %1259 = vmatpush1.msra.mxu0 %v183
    %1260 = vmatprep.subr.mxu0 %v188
    %1261 = vmatpush1.msra.mxu0 %v187
    %1262 = vmatprep.subr.mxu0 %v192
    %1263 = vmatpush1.msra.mxu0 %v191
    %1264 = vmatprep.subr.mxu0 %v196
    %1265 = vmatpush1.msra.mxu0 %v195
    %1266 = vmatprep.subr.mxu0 %v200
    %1267 = vmatpush1.msra.mxu0 %v199
    %1268 = vmatprep.subr.mxu0 %v204
    %1269 = vmatpush1.msra.mxu0 %v203
    %1270 = vmatprep.subr.mxu0 %v208
    %1271 = vmatpush1.msra.mxu0 %v207
    %1272 = vmatprep.subr.mxu0 %v212
    %1273 = vmatpush1.msra.mxu0 %v211
    %1274 = vmatprep.subr.mxu0 %v216
    %1275 = vmatpush1.msra.mxu0 %v215
    %1276 = vmatprep.subr.mxu0 %v220
    %1277 = vmatpush1.msra.mxu0 %v219
    %1278 = vmatprep.subr.mxu0 %v224
    %1279 = vmatpush1.msra.mxu0 %v223
    %1280 = vmatprep.subr.mxu0 %v228
    %1281 = vmatpush1.msra.mxu0 %v227
    %1282 = vmatprep.subr.mxu0 %v232
    %1283 = vmatpush1.msra.mxu0 %v231
    %1284 = vmatprep.subr.mxu0 %v236
    %1285 = vmatpush1.msra.mxu0 %v235
    %1286 = vmatprep.subr.mxu0 %v240
    %1287 = vmatpush1.msra.mxu0 %v239
    %1288 = vmatprep.subr.mxu0 %v244
    %1289 = vmatpush1.msra.mxu0 %v243
    %1290 = vmatprep.subr.mxu0 %v248
    %1291 = vmatpush1.msra.mxu0 %v247
    %1292 = vmatprep.subr.mxu0 %v252
    %1293 = vmatpush1.msra.mxu0 %v251
    %1294 = vmatprep.subr.mxu0 %v256
    %1295 = vmatpush1.msra.mxu0 %v255
    %1296 = vmatprep.subr.mxu0 %v260
    %1297 = vmatpush1.msra.mxu0 %v259
    %1298 = vmatprep.subr.mxu0 %v264
    %1299 = vmatpush1.msra.mxu0 %v263
    %1300 = vmatprep.subr.mxu0 %v268
    %1301 = vmatpush1.msra.mxu0 %v267
    %1302 = vmatprep.subr.mxu0 %v272
    %1303 = vmatpush1.msra.mxu0 %v271
    %1304 = vmatprep.subr.mxu0 %v276
    %1305 = vmatpush1.msra.mxu0 %v275
    %1306 = vmatprep.subr.mxu0 %v280
    %1307 = vmatpush1.msra.mxu0 %v279
    %1308 = vmatprep.subr.mxu0 %v284
    %1309 = vmatpush1.msra.mxu0 %v283
    %1310 = vmatprep.subr.mxu0 %v288
    %1311 = vmatpush1.msra.mxu0 %v287
    %1312 = vmatprep.subr.mxu0 %v292
    %1313 = vmatpush1.msra.mxu0 %v291
    %1314 = vmatprep.subr.mxu0 %v296
    %1315 = vmatpush1.msra.mxu0 %v295
    %1316 = vmatprep.subr.mxu0 %v300
    %1317 = vmatpush1.msra.mxu0 %v299
    %1318 = vmatprep.subr.mxu0 %v304
    %1319 = vmatpush1.msra.mxu0 %v303
    %1320 = vmatprep.mubr.f32.mxu0 %v1016
    %1321 = vmatmul.mubr.f32.gmra.mrb[0].mxu0 %v1184
    %v1322 = vpop.f32.mrb[0].mxu0
    %v1323 = vadd.f32 %v508, %v1322
    %v1324 = vpop.f32.mrb[0].mxu0
    %v1325 = vadd.f32 %v512, %v1324
    %1326 = vdwg.mxu0
    %v1327 = vxor.u32 %v1252, 2147483648
    %v1328 = vmul.f32 %v1327, 1.442695
    %v1329 = vpow.pop %v1328
    %v1330 = vadd.f32 %v1329, 1.0
    %v1331 = vrcp.pop %v1330
    %v1332 = vmul.f32 1.0, %v1331
    %v1333 = vxor.u32 %v1254, 2147483648
    %v1334 = vmul.f32 %v1333, 1.442695
    %v1335 = vpow.pop %v1334
    %v1336 = vadd.f32 %v1335, 1.0
    %v1337 = vrcp.pop %v1336
    %v1338 = vmul.f32 1.0, %v1337
    %v1339 = vtanh.pop %v1323
    %v1340 = vxor.u32 %v1325, 2147483648
    %v1341 = vmul.f32 %v1340, 1.442695
    %v1342 = vpow.pop %v1341
    %v1343 = vadd.f32 %v1342, 1.0
    %v1344 = vrcp.pop %v1343
    %v1345 = vmul.f32 1.0, %v1344
    %v1346 = vmul.f32 %v1338, %v1014
    %v1347 = vmul.f32 %v1332, %v1339
    %v1348 = vadd.f32 %v1346, %v1347
    %v1349 = vtanh.pop %v1348
    %v1350 = vmul.f32 %v1345, %v1349
    %s1351 = scalar_lea.vmem %s0, 24
    %v1352 = vld [vmem:[%s1351] sm:$0xff]
    %1353 = vmatprep.subr.mxu0 %v49
    %1354 = vmatpush1.msra.mxu0 %v48
    %1355 = vmatprep.subr.mxu0 %v53
    %1356 = vmatpush1.msra.mxu0 %v52
    %1357 = vmatprep.subr.mxu0 %v57
    %1358 = vmatpush1.msra.mxu0 %v56
    %1359 = vmatprep.subr.mxu0 %v61
    %1360 = vmatpush1.msra.mxu0 %v60
    %1361 = vmatprep.subr.mxu0 %v65
    %1362 = vmatpush1.msra.mxu0 %v64
    %1363 = vmatprep.subr.mxu0 %v69
    %1364 = vmatpush1.msra.mxu0 %v68
    %1365 = vmatprep.subr.mxu0 %v73
    %1366 = vmatpush1.msra.mxu0 %v72
    %1367 = vmatprep.subr.mxu0 %v77
    %1368 = vmatpush1.msra.mxu0 %v76
    %1369 = vmatprep.subr.mxu0 %v81
    %1370 = vmatpush1.msra.mxu0 %v80
    %1371 = vmatprep.subr.mxu0 %v85
    %1372 = vmatpush1.msra.mxu0 %v84
    %1373 = vmatprep.subr.mxu0 %v89
    %1374 = vmatpush1.msra.mxu0 %v88
    %1375 = vmatprep.subr.mxu0 %v93
    %1376 = vmatpush1.msra.mxu0 %v92
    %1377 = vmatprep.subr.mxu0 %v97
    %1378 = vmatpush1.msra.mxu0 %v96
    %1379 = vmatprep.subr.mxu0 %v101
    %1380 = vmatpush1.msra.mxu0 %v100
    %1381 = vmatprep.subr.mxu0 %v105
    %1382 = vmatpush1.msra.mxu0 %v104
    %1383 = vmatprep.subr.mxu0 %v109
    %1384 = vmatpush1.msra.mxu0 %v108
    %1385 = vmatprep.subr.mxu0 %v113
    %1386 = vmatpush1.msra.mxu0 %v112
    %1387 = vmatprep.subr.mxu0 %v117
    %1388 = vmatpush1.msra.mxu0 %v116
    %1389 = vmatprep.subr.mxu0 %v121
    %1390 = vmatpush1.msra.mxu0 %v120
    %1391 = vmatprep.subr.mxu0 %v125
    %1392 = vmatpush1.msra.mxu0 %v124
    %1393 = vmatprep.subr.mxu0 %v129
    %1394 = vmatpush1.msra.mxu0 %v128
    %1395 = vmatprep.subr.mxu0 %v133
    %1396 = vmatpush1.msra.mxu0 %v132
    %1397 = vmatprep.subr.mxu0 %v137
    %1398 = vmatpush1.msra.mxu0 %v136
    %1399 = vmatprep.subr.mxu0 %v141
    %1400 = vmatpush1.msra.mxu0 %v140
    %1401 = vmatprep.subr.mxu0 %v145
    %1402 = vmatpush1.msra.mxu0 %v144
    %1403 = vmatprep.subr.mxu0 %v149
    %1404 = vmatpush1.msra.mxu0 %v148
    %1405 = vmatprep.subr.mxu0 %v153
    %1406 = vmatpush1.msra.mxu0 %v152
    %1407 = vmatprep.subr.mxu0 %v157
    %1408 = vmatpush1.msra.mxu0 %v156
    %1409 = vmatprep.subr.mxu0 %v161
    %1410 = vmatpush1.msra.mxu0 %v160
    %1411 = vmatprep.subr.mxu0 %v165
    %1412 = vmatpush1.msra.mxu0 %v164
    %1413 = vmatprep.subr.mxu0 %v169
    %1414 = vmatpush1.msra.mxu0 %v168
    %1415 = vmatprep.subr.mxu0 %v173
    %1416 = vmatpush1.msra.mxu0 %v172
    %1417 = vmatprep.mubr.f32.mxu0 %v1184
    %1418 = vmatmul.mubr.f32.gmra.mrb[0].mxu0 %v1352
    %v1419 = vpop.f32.mrb[0].mxu0
    %v1420 = vadd.f32 %v313, %v1419
    %v1421 = vpop.f32.mrb[0].mxu0
    %v1422 = vadd.f32 %v317, %v1421
    %1423 = vdwg.mxu0
    %1424 = vmatprep.subr.mxu0 %v51
    %1425 = vmatpush1.msra.mxu0 %v50
    %1426 = vmatprep.subr.mxu0 %v55
    %1427 = vmatpush1.msra.mxu0 %v54
    %1428 = vmatprep.subr.mxu0 %v59
    %1429 = vmatpush1.msra.mxu0 %v58
    %1430 = vmatprep.subr.mxu0 %v63
    %1431 = vmatpush1.msra.mxu0 %v62
    %1432 = vmatprep.subr.mxu0 %v67
    %1433 = vmatpush1.msra.mxu0 %v66
    %1434 = vmatprep.subr.mxu0 %v71
    %1435 = vmatpush1.msra.mxu0 %v70
    %1436 = vmatprep.subr.mxu0 %v75
    %1437 = vmatpush1.msra.mxu0 %v74
    %1438 = vmatprep.subr.mxu0 %v79
    %1439 = vmatpush1.msra.mxu0 %v78
    %1440 = vmatprep.subr.mxu0 %v83
    %1441 = vmatpush1.msra.mxu0 %v82
    %1442 = vmatprep.subr.mxu0 %v87
    %1443 = vmatpush1.msra.mxu0 %v86
    %1444 = vmatprep.subr.mxu0 %v91
    %1445 = vmatpush1.msra.mxu0 %v90
    %1446 = vmatprep.subr.mxu0 %v95
    %1447 = vmatpush1.msra.mxu0 %v94
    %1448 = vmatprep.subr.mxu0 %v99
    %1449 = vmatpush1.msra.mxu0 %v98
    %1450 = vmatprep.subr.mxu0 %v103
    %1451 = vmatpush1.msra.mxu0 %v102
    %1452 = vmatprep.subr.mxu0 %v107
    %1453 = vmatpush1.msra.mxu0 %v106
    %1454 = vmatprep.subr.mxu0 %v111
    %1455 = vmatpush1.msra.mxu0 %v110
    %1456 = vmatprep.subr.mxu0 %v115
    %1457 = vmatpush1.msra.mxu0 %v114
    %1458 = vmatprep.subr.mxu0 %v119
    %1459 = vmatpush1.msra.mxu0 %v118
    %1460 = vmatprep.subr.mxu0 %v123
    %1461 = vmatpush1.msra.mxu0 %v122
    %1462 = vmatprep.subr.mxu0 %v127
    %1463 = vmatpush1.msra.mxu0 %v126
    %1464 = vmatprep.subr.mxu0 %v131
    %1465 = vmatpush1.msra.mxu0 %v130
    %1466 = vmatprep.subr.mxu0 %v135
    %1467 = vmatpush1.msra.mxu0 %v134
    %1468 = vmatprep.subr.mxu0 %v139
    %1469 = vmatpush1.msra.mxu0 %v138
    %1470 = vmatprep.subr.mxu0 %v143
    %1471 = vmatpush1.msra.mxu0 %v142
    %1472 = vmatprep.subr.mxu0 %v147
    %1473 = vmatpush1.msra.mxu0 %v146
    %1474 = vmatprep.subr.mxu0 %v151
    %1475 = vmatpush1.msra.mxu0 %v150
    %1476 = vmatprep.subr.mxu0 %v155
    %1477 = vmatpush1.msra.mxu0 %v154
    %1478 = vmatprep.subr.mxu0 %v159
    %1479 = vmatpush1.msra.mxu0 %v158
    %1480 = vmatprep.subr.mxu0 %v163
    %1481 = vmatpush1.msra.mxu0 %v162
    %1482 = vmatprep.subr.mxu0 %v167
    %1483 = vmatpush1.msra.mxu0 %v166
    %1484 = vmatprep.subr.mxu0 %v171
    %1485 = vmatpush1.msra.mxu0 %v170
    %1486 = vmatprep.subr.mxu0 %v175
    %1487 = vmatpush1.msra.mxu0 %v174
    %1488 = vmatprep.mubr.f32.mxu0 %v1184
    %1489 = vmatmul.mubr.f32.gmra.mrb[0].mxu0 %v1352
    %v1490 = vpop.f32.mrb[0].mxu0
    %v1491 = vadd.f32 %v321, %v1490
    %v1492 = vpop.f32.mrb[0].mxu0
    %v1493 = vadd.f32 %v325, %v1492
    %1494 = vdwg.mxu0
    %v1495 = vxor.u32 %v1420, 2147483648
    %v1496 = vmul.f32 %v1495, 1.442695
    %v1497 = vpow.pop %v1496
    %v1498 = vadd.f32 %v1497, 1.0
    %v1499 = vrcp.pop %v1498
    %v1500 = vmul.f32 1.0, %v1499
    %v1501 = vxor.u32 %v1422, 2147483648
    %v1502 = vmul.f32 %v1501, 1.442695
    %v1503 = vpow.pop %v1502
    %v1504 = vadd.f32 %v1503, 1.0
    %v1505 = vrcp.pop %v1504
    %v1506 = vmul.f32 1.0, %v1505
    %v1507 = vtanh.pop %v1491
    %v1508 = vxor.u32 %v1493, 2147483648
    %v1509 = vmul.f32 %v1508, 1.442695
    %v1510 = vpow.pop %v1509
    %v1511 = vadd.f32 %v1510, 1.0
    %v1512 = vrcp.pop %v1511
    %v1513 = vmul.f32 1.0, %v1512
    %v1514 = vmul.f32 %v1506, %v1182
    %v1515 = vmul.f32 %v1500, %v1507
    %v1516 = vadd.f32 %v1514, %v1515
    %v1517 = vtanh.pop %v1516
    %v1518 = vmul.f32 %v1513, %v1517
    %1519 = vmatprep.subr.mxu0 %v178
    %1520 = vmatpush1.msra.mxu0 %v177
    %1521 = vmatprep.subr.mxu0 %v182
    %1522 = vmatpush1.msra.mxu0 %v181
    %1523 = vmatprep.subr.mxu0 %v186
    %1524 = vmatpush1.msra.mxu0 %v185
    %1525 = vmatprep.subr.mxu0 %v190
    %1526 = vmatpush1.msra.mxu0 %v189
    %1527 = vmatprep.subr.mxu0 %v194
    %1528 = vmatpush1.msra.mxu0 %v193
    %1529 = vmatprep.subr.mxu0 %v198
    %1530 = vmatpush1.msra.mxu0 %v197
    %1531 = vmatprep.subr.mxu0 %v202
    %1532 = vmatpush1.msra.mxu0 %v201
    %1533 = vmatprep.subr.mxu0 %v206
    %1534 = vmatpush1.msra.mxu0 %v205
    %1535 = vmatprep.subr.mxu0 %v210
    %1536 = vmatpush1.msra.mxu0 %v209
    %1537 = vmatprep.subr.mxu0 %v214
    %1538 = vmatpush1.msra.mxu0 %v213
    %1539 = vmatprep.subr.mxu0 %v218
    %1540 = vmatpush1.msra.mxu0 %v217
    %1541 = vmatprep.subr.mxu0 %v222
    %1542 = vmatpush1.msra.mxu0 %v221
    %1543 = vmatprep.subr.mxu0 %v226
    %1544 = vmatpush1.msra.mxu0 %v225
    %1545 = vmatprep.subr.mxu0 %v230
    %1546 = vmatpush1.msra.mxu0 %v229
    %1547 = vmatprep.subr.mxu0 %v234
    %1548 = vmatpush1.msra.mxu0 %v233
    %1549 = vmatprep.subr.mxu0 %v238
    %1550 = vmatpush1.msra.mxu0 %v237
    %1551 = vmatprep.subr.mxu0 %v242
    %1552 = vmatpush1.msra.mxu0 %v241
    %1553 = vmatprep.subr.mxu0 %v246
    %1554 = vmatpush1.msra.mxu0 %v245
    %1555 = vmatprep.subr.mxu0 %v250
    %1556 = vmatpush1.msra.mxu0 %v249
    %1557 = vmatprep.subr.mxu0 %v254
    %1558 = vmatpush1.msra.mxu0 %v253
    %1559 = vmatprep.subr.mxu0 %v258
    %1560 = vmatpush1.msra.mxu0 %v257
    %1561 = vmatprep.subr.mxu0 %v262
    %1562 = vmatpush1.msra.mxu0 %v261
    %1563 = vmatprep.subr.mxu0 %v266
    %1564 = vmatpush1.msra.mxu0 %v265
    %1565 = vmatprep.subr.mxu0 %v270
    %1566 = vmatpush1.msra.mxu0 %v269
    %1567 = vmatprep.subr.mxu0 %v274
    %1568 = vmatpush1.msra.mxu0 %v273
    %1569 = vmatprep.subr.mxu0 %v278
    %1570 = vmatpush1.msra.mxu0 %v277
    %1571 = vmatprep.subr.mxu0 %v282
    %1572 = vmatpush1.msra.mxu0 %v281
    %1573 = vmatprep.subr.mxu0 %v286
    %1574 = vmatpush1.msra.mxu0 %v285
    %1575 = vmatprep.subr.mxu0 %v290
    %1576 = vmatpush1.msra.mxu0 %v289
    %1577 = vmatprep.subr.mxu0 %v294
    %1578 = vmatpush1.msra.mxu0 %v293
    %1579 = vmatprep.subr.mxu0 %v298
    %1580 = vmatpush1.msra.mxu0 %v297
    %1581 = vmatprep.subr.mxu0 %v302
    %1582 = vmatpush1.msra.mxu0 %v301
    %1583 = vmatprep.mubr.f32.mxu0 %v1350
    %1584 = vmatmul.mubr.f32.gmra.mrb[0].mxu0 %v1518
    %v1585 = vpop.f32.mrb[0].mxu0
    %v1586 = vadd.f32 %v500, %v1585
    %v1587 = vpop.f32.mrb[0].mxu0
    %v1588 = vadd.f32 %v504, %v1587
    %1589 = vdwg.mxu0
    %1590 = vmatprep.subr.mxu0 %v180
    %1591 = vmatpush1.msra.mxu0 %v179
    %1592 = vmatprep.subr.mxu0 %v184
    %1593 = vmatpush1.msra.mxu0 %v183
    %1594 = vmatprep.subr.mxu0 %v188
    %1595 = vmatpush1.msra.mxu0 %v187
    %1596 = vmatprep.subr.mxu0 %v192
    %1597 = vmatpush1.msra.mxu0 %v191
    %1598 = vmatprep.subr.mxu0 %v196
    %1599 = vmatpush1.msra.mxu0 %v195
    %1600 = vmatprep.subr.mxu0 %v200
    %1601 = vmatpush1.msra.mxu0 %v199
    %1602 = vmatprep.subr.mxu0 %v204
    %1603 = vmatpush1.msra.mxu0 %v203
    %1604 = vmatprep.subr.mxu0 %v208
    %1605 = vmatpush1.msra.mxu0 %v207
    %1606 = vmatprep.subr.mxu0 %v212
    %1607 = vmatpush1.msra.mxu0 %v211
    %1608 = vmatprep.subr.mxu0 %v216
    %1609 = vmatpush1.msra.mxu0 %v215
    %1610 = vmatprep.subr.mxu0 %v220
    %1611 = vmatpush1.msra.mxu0 %v219
    %1612 = vmatprep.subr.mxu0 %v224
    %1613 = vmatpush1.msra.mxu0 %v223
    %1614 = vmatprep.subr.mxu0 %v228
    %1615 = vmatpush1.msra.mxu0 %v227
    %1616 = vmatprep.subr.mxu0 %v232
    %1617 = vmatpush1.msra.mxu0 %v231
    %1618 = vmatprep.subr.mxu0 %v236
    %1619 = vmatpush1.msra.mxu0 %v235
    %1620 = vmatprep.subr.mxu0 %v240
    %1621 = vmatpush1.msra.mxu0 %v239
    %1622 = vmatprep.subr.mxu0 %v244
    %1623 = vmatpush1.msra.mxu0 %v243
    %1624 = vmatprep.subr.mxu0 %v248
    %1625 = vmatpush1.msra.mxu0 %v247
    %1626 = vmatprep.subr.mxu0 %v252
    %1627 = vmatpush1.msra.mxu0 %v251
    %1628 = vmatprep.subr.mxu0 %v256
    %1629 = vmatpush1.msra.mxu0 %v255
    %1630 = vmatprep.subr.mxu0 %v260
    %1631 = vmatpush1.msra.mxu0 %v259
    %1632 = vmatprep.subr.mxu0 %v264
    %1633 = vmatpush1.msra.mxu0 %v263
    %1634 = vmatprep.subr.mxu0 %v268
    %1635 = vmatpush1.msra.mxu0 %v267
    %1636 = vmatprep.subr.mxu0 %v272
    %1637 = vmatpush1.msra.mxu0 %v271
    %1638 = vmatprep.subr.mxu0 %v276
    %1639 = vmatpush1.msra.mxu0 %v275
    %1640 = vmatprep.subr.mxu0 %v280
    %1641 = vmatpush1.msra.mxu0 %v279
    %1642 = vmatprep.subr.mxu0 %v284
    %1643 = vmatpush1.msra.mxu0 %v283
    %1644 = vmatprep.subr.mxu0 %v288
    %1645 = vmatpush1.msra.mxu0 %v287
    %1646 = vmatprep.subr.mxu0 %v292
    %1647 = vmatpush1.msra.mxu0 %v291
    %1648 = vmatprep.subr.mxu0 %v296
    %1649 = vmatpush1.msra.mxu0 %v295
    %1650 = vmatprep.subr.mxu0 %v300
    %1651 = vmatpush1.msra.mxu0 %v299
    %1652 = vmatprep.subr.mxu0 %v304
    %1653 = vmatpush1.msra.mxu0 %v303
    %1654 = vmatprep.mubr.f32.mxu0 %v1350
    %1655 = vmatmul.mubr.f32.gmra.mrb[0].mxu0 %v1518
    %v1656 = vpop.f32.mrb[0].mxu0
    %v1657 = vadd.f32 %v508, %v1656
    %v1658 = vpop.f32.mrb[0].mxu0
    %v1659 = vadd.f32 %v512, %v1658
    %1660 = vdwg.mxu0
    %v1661 = vxor.u32 %v1586, 2147483648
    %v1662 = vmul.f32 %v1661, 1.442695
    %v1663 = vpow.pop %v1662
    %v1664 = vadd.f32 %v1663, 1.0
    %v1665 = vrcp.pop %v1664
    %v1666 = vmul.f32 1.0, %v1665
    %v1667 = vxor.u32 %v1588, 2147483648
    %v1668 = vmul.f32 %v1667, 1.442695
    %v1669 = vpow.pop %v1668
    %v1670 = vadd.f32 %v1669, 1.0
    %v1671 = vrcp.pop %v1670
    %v1672 = vmul.f32 1.0, %v1671
    %v1673 = vtanh.pop %v1657
    %v1674 = vxor.u32 %v1659, 2147483648
    %v1675 = vmul.f32 %v1674, 1.442695
    %v1676 = vpow.pop %v1675
    %v1677 = vadd.f32 %v1676, 1.0
    %v1678 = vrcp.pop %v1677
    %v1679 = vmul.f32 1.0, %v1678
    %v1680 = vmul.f32 %v1672, %v1348
    %v1681 = vmul.f32 %v1666, %v1673
    %v1682 = vadd.f32 %v1680, %v1681
    %v1683 = vtanh.pop %v1682
    %v1684 = vmul.f32 %v1679, %v1683
    %s1685 = scalar_lea.vmem %s0, 32
    %v1686 = vld [vmem:[%s1685] sm:$0xff]
    %1687 = vmatprep.subr.mxu0 %v49
    %1688 = vmatpush1.msra.mxu0 %v48
    %1689 = vmatprep.subr.mxu0 %v53
    %1690 = vmatpush1.msra.mxu0 %v52
    %1691 = vmatprep.subr.mxu0 %v57
    %1692 = vmatpush1.msra.mxu0 %v56
    %1693 = vmatprep.subr.mxu0 %v61
    %1694 = vmatpush1.msra.mxu0 %v60
    %1695 = vmatprep.subr.mxu0 %v65
    %1696 = vmatpush1.msra.mxu0 %v64
    %1697 = vmatprep.subr.mxu0 %v69
    %1698 = vmatpush1.msra.mxu0 %v68
    %1699 = vmatprep.subr.mxu0 %v73
    %1700 = vmatpush1.msra.mxu0 %v72
    %1701 = vmatprep.subr.mxu0 %v77
    %1702 = vmatpush1.msra.mxu0 %v76
    %1703 = vmatprep.subr.mxu0 %v81
    %1704 = vmatpush1.msra.mxu0 %v80
    %1705 = vmatprep.subr.mxu0 %v85
    %1706 = vmatpush1.msra.mxu0 %v84
    %1707 = vmatprep.subr.mxu0 %v89
    %1708 = vmatpush1.msra.mxu0 %v88
    %1709 = vmatprep.subr.mxu0 %v93
    %1710 = vmatpush1.msra.mxu0 %v92
    %1711 = vmatprep.subr.mxu0 %v97
    %1712 = vmatpush1.msra.mxu0 %v96
    %1713 = vmatprep.subr.mxu0 %v101
    %1714 = vmatpush1.msra.mxu0 %v100
    %1715 = vmatprep.subr.mxu0 %v105
    %1716 = vmatpush1.msra.mxu0 %v104
    %1717 = vmatprep.subr.mxu0 %v109
    %1718 = vmatpush1.msra.mxu0 %v108
    %1719 = vmatprep.subr.mxu0 %v113
    %1720 = vmatpush1.msra.mxu0 %v112
    %1721 = vmatprep.subr.mxu0 %v117
    %1722 = vmatpush1.msra.mxu0 %v116
    %1723 = vmatprep.subr.mxu0 %v121
    %1724 = vmatpush1.msra.mxu0 %v120
    %1725 = vmatprep.subr.mxu0 %v125
    %1726 = vmatpush1.msra.mxu0 %v124
    %1727 = vmatprep.subr.mxu0 %v129
    %1728 = vmatpush1.msra.mxu0 %v128
    %1729 = vmatprep.subr.mxu0 %v133
    %1730 = vmatpush1.msra.mxu0 %v132
    %1731 = vmatprep.subr.mxu0 %v137
    %1732 = vmatpush1.msra.mxu0 %v136
    %1733 = vmatprep.subr.mxu0 %v141
    %1734 = vmatpush1.msra.mxu0 %v140
    %1735 = vmatprep.subr.mxu0 %v145
    %1736 = vmatpush1.msra.mxu0 %v144
    %1737 = vmatprep.subr.mxu0 %v149
    %1738 = vmatpush1.msra.mxu0 %v148
    %1739 = vmatprep.subr.mxu0 %v153
    %1740 = vmatpush1.msra.mxu0 %v152
    %1741 = vmatprep.subr.mxu0 %v157
    %1742 = vmatpush1.msra.mxu0 %v156
    %1743 = vmatprep.subr.mxu0 %v161
    %1744 = vmatpush1.msra.mxu0 %v160
    %1745 = vmatprep.subr.mxu0 %v165
    %1746 = vmatpush1.msra.mxu0 %v164
    %1747 = vmatprep.subr.mxu0 %v169
    %1748 = vmatpush1.msra.mxu0 %v168
    %1749 = vmatprep.subr.mxu0 %v173
    %1750 = vmatpush1.msra.mxu0 %v172
    %1751 = vmatprep.mubr.f32.mxu0 %v1518
    %1752 = vmatmul.mubr.f32.gmra.mrb[0].mxu0 %v1686
    %v1753 = vpop.f32.mrb[0].mxu0
    %v1754 = vadd.f32 %v313, %v1753
    %v1755 = vpop.f32.mrb[0].mxu0
    %v1756 = vadd.f32 %v317, %v1755
    %1757 = vdwg.mxu0
    %1758 = vmatprep.subr.mxu0 %v51
    %1759 = vmatpush1.msra.mxu0 %v50
    %1760 = vmatprep.subr.mxu0 %v55
    %1761 = vmatpush1.msra.mxu0 %v54
    %1762 = vmatprep.subr.mxu0 %v59
    %1763 = vmatpush1.msra.mxu0 %v58
    %1764 = vmatprep.subr.mxu0 %v63
    %1765 = vmatpush1.msra.mxu0 %v62
    %1766 = vmatprep.subr.mxu0 %v67
    %1767 = vmatpush1.msra.mxu0 %v66
    %1768 = vmatprep.subr.mxu0 %v71
    %1769 = vmatpush1.msra.mxu0 %v70
    %1770 = vmatprep.subr.mxu0 %v75
    %1771 = vmatpush1.msra.mxu0 %v74
    %1772 = vmatprep.subr.mxu0 %v79
    %1773 = vmatpush1.msra.mxu0 %v78
    %1774 = vmatprep.subr.mxu0 %v83
    %1775 = vmatpush1.msra.mxu0 %v82
    %1776 = vmatprep.subr.mxu0 %v87
    %1777 = vmatpush1.msra.mxu0 %v86
    %1778 = vmatprep.subr.mxu0 %v91
    %1779 = vmatpush1.msra.mxu0 %v90
    %1780 = vmatprep.subr.mxu0 %v95
    %1781 = vmatpush1.msra.mxu0 %v94
    %1782 = vmatprep.subr.mxu0 %v99
    %1783 = vmatpush1.msra.mxu0 %v98
    %1784 = vmatprep.subr.mxu0 %v103
    %1785 = vmatpush1.msra.mxu0 %v102
    %1786 = vmatprep.subr.mxu0 %v107
    %1787 = vmatpush1.msra.mxu0 %v106
    %1788 = vmatprep.subr.mxu0 %v111
    %1789 = vmatpush1.msra.mxu0 %v110
    %1790 = vmatprep.subr.mxu0 %v115
    %1791 = vmatpush1.msra.mxu0 %v114
    %1792 = vmatprep.subr.mxu0 %v119
    %1793 = vmatpush1.msra.mxu0 %v118
    %1794 = vmatprep.subr.mxu0 %v123
    %1795 = vmatpush1.msra.mxu0 %v122
    %1796 = vmatprep.subr.mxu0 %v127
    %1797 = vmatpush1.msra.mxu0 %v126
    %1798 = vmatprep.subr.mxu0 %v131
    %1799 = vmatpush1.msra.mxu0 %v130
    %1800 = vmatprep.subr.mxu0 %v135
    %1801 = vmatpush1.msra.mxu0 %v134
    %1802 = vmatprep.subr.mxu0 %v139
    %1803 = vmatpush1.msra.mxu0 %v138
    %1804 = vmatprep.subr.mxu0 %v143
    %1805 = vmatpush1.msra.mxu0 %v142
    %1806 = vmatprep.subr.mxu0 %v147
    %1807 = vmatpush1.msra.mxu0 %v146
    %1808 = vmatprep.subr.mxu0 %v151
    %1809 = vmatpush1.msra.mxu0 %v150
    %1810 = vmatprep.subr.mxu0 %v155
    %1811 = vmatpush1.msra.mxu0 %v154
    %1812 = vmatprep.subr.mxu0 %v159
    %1813 = vmatpush1.msra.mxu0 %v158
    %1814 = vmatprep.subr.mxu0 %v163
    %1815 = vmatpush1.msra.mxu0 %v162
    %1816 = vmatprep.subr.mxu0 %v167
    %1817 = vmatpush1.msra.mxu0 %v166
    %1818 = vmatprep.subr.mxu0 %v171
    %1819 = vmatpush1.msra.mxu0 %v170
    %1820 = vmatprep.subr.mxu0 %v175
    %1821 = vmatpush1.msra.mxu0 %v174
    %1822 = vmatprep.mubr.f32.mxu0 %v1518
    %1823 = vmatmul.mubr.f32.gmra.mrb[0].mxu0 %v1686
    %v1824 = vpop.f32.mrb[0].mxu0
    %v1825 = vadd.f32 %v321, %v1824
    %v1826 = vpop.f32.mrb[0].mxu0
    %v1827 = vadd.f32 %v325, %v1826
    %1828 = vdwg.mxu0
    %v1829 = vxor.u32 %v1754, 2147483648
    %v1830 = vmul.f32 %v1829, 1.442695
    %v1831 = vpow.pop %v1830
    %v1832 = vadd.f32 %v1831, 1.0
    %v1833 = vrcp.pop %v1832
    %v1834 = vmul.f32 1.0, %v1833
    %v1835 = vxor.u32 %v1756, 2147483648
    %v1836 = vmul.f32 %v1835, 1.442695
    %v1837 = vpow.pop %v1836
    %v1838 = vadd.f32 %v1837, 1.0
    %v1839 = vrcp.pop %v1838
    %v1840 = vmul.f32 1.0, %v1839
    %v1841 = vtanh.pop %v1825
    %v1842 = vxor.u32 %v1827, 2147483648
    %v1843 = vmul.f32 %v1842, 1.442695
    %v1844 = vpow.pop %v1843
    %v1845 = vadd.f32 %v1844, 1.0
    %v1846 = vrcp.pop %v1845
    %v1847 = vmul.f32 1.0, %v1846
    %v1848 = vmul.f32 %v1840, %v1516
    %v1849 = vmul.f32 %v1834, %v1841
    %v1850 = vadd.f32 %v1848, %v1849
    %v1851 = vtanh.pop %v1850
    %v1852 = vmul.f32 %v1847, %v1851
    %1853 = vmatprep.subr.mxu0 %v178
    %1854 = vmatpush1.msra.mxu0 %v177
    %1855 = vmatprep.subr.mxu0 %v182
    %1856 = vmatpush1.msra.mxu0 %v181
    %1857 = vmatprep.subr.mxu0 %v186
    %1858 = vmatpush1.msra.mxu0 %v185
    %1859 = vmatprep.subr.mxu0 %v190
    %1860 = vmatpush1.msra.mxu0 %v189
    %1861 = vmatprep.subr.mxu0 %v194
    %1862 = vmatpush1.msra.mxu0 %v193
    %1863 = vmatprep.subr.mxu0 %v198
    %1864 = vmatpush1.msra.mxu0 %v197
    %1865 = vmatprep.subr.mxu0 %v202
    %1866 = vmatpush1.msra.mxu0 %v201
    %1867 = vmatprep.subr.mxu0 %v206
    %1868 = vmatpush1.msra.mxu0 %v205
    %1869 = vmatprep.subr.mxu0 %v210
    %1870 = vmatpush1.msra.mxu0 %v209
    %1871 = vmatprep.subr.mxu0 %v214
    %1872 = vmatpush1.msra.mxu0 %v213
    %1873 = vmatprep.subr.mxu0 %v218
    %1874 = vmatpush1.msra.mxu0 %v217
    %1875 = vmatprep.subr.mxu0 %v222
    %1876 = vmatpush1.msra.mxu0 %v221
    %1877 = vmatprep.subr.mxu0 %v226
    %1878 = vmatpush1.msra.mxu0 %v225
    %1879 = vmatprep.subr.mxu0 %v230
    %1880 = vmatpush1.msra.mxu0 %v229
    %1881 = vmatprep.subr.mxu0 %v234
    %1882 = vmatpush1.msra.mxu0 %v233
    %1883 = vmatprep.subr.mxu0 %v238
    %1884 = vmatpush1.msra.mxu0 %v237
    %1885 = vmatprep.subr.mxu0 %v242
    %1886 = vmatpush1.msra.mxu0 %v241
    %1887 = vmatprep.subr.mxu0 %v246
    %1888 = vmatpush1.msra.mxu0 %v245
    %1889 = vmatprep.subr.mxu0 %v250
    %1890 = vmatpush1.msra.mxu0 %v249
    %1891 = vmatprep.subr.mxu0 %v254
    %1892 = vmatpush1.msra.mxu0 %v253
    %1893 = vmatprep.subr.mxu0 %v258
    %1894 = vmatpush1.msra.mxu0 %v257
    %1895 = vmatprep.subr.mxu0 %v262
    %1896 = vmatpush1.msra.mxu0 %v261
    %1897 = vmatprep.subr.mxu0 %v266
    %1898 = vmatpush1.msra.mxu0 %v265
    %1899 = vmatprep.subr.mxu0 %v270
    %1900 = vmatpush1.msra.mxu0 %v269
    %1901 = vmatprep.subr.mxu0 %v274
    %1902 = vmatpush1.msra.mxu0 %v273
    %1903 = vmatprep.subr.mxu0 %v278
    %1904 = vmatpush1.msra.mxu0 %v277
    %1905 = vmatprep.subr.mxu0 %v282
    %1906 = vmatpush1.msra.mxu0 %v281
    %1907 = vmatprep.subr.mxu0 %v286
    %1908 = vmatpush1.msra.mxu0 %v285
    %1909 = vmatprep.subr.mxu0 %v290
    %1910 = vmatpush1.msra.mxu0 %v289
    %1911 = vmatprep.subr.mxu0 %v294
    %1912 = vmatpush1.msra.mxu0 %v293
    %1913 = vmatprep.subr.mxu0 %v298
    %1914 = vmatpush1.msra.mxu0 %v297
    %1915 = vmatprep.subr.mxu0 %v302
    %1916 = vmatpush1.msra.mxu0 %v301
    %1917 = vmatprep.mubr.f32.mxu0 %v1684
    %1918 = vmatmul.mubr.f32.gmra.mrb[0].mxu0 %v1852
    %v1919 = vpop.f32.mrb[0].mxu0
    %v1920 = vadd.f32 %v500, %v1919
    %v1921 = vpop.f32.mrb[0].mxu0
    %v1922 = vadd.f32 %v504, %v1921
    %1923 = vdwg.mxu0
    %1924 = vmatprep.subr.mxu0 %v180
    %1925 = vmatpush1.msra.mxu0 %v179
    %1926 = vmatprep.subr.mxu0 %v184
    %1927 = vmatpush1.msra.mxu0 %v183
    %1928 = vmatprep.subr.mxu0 %v188
    %1929 = vmatpush1.msra.mxu0 %v187
    %1930 = vmatprep.subr.mxu0 %v192
    %1931 = vmatpush1.msra.mxu0 %v191
    %1932 = vmatprep.subr.mxu0 %v196
    %1933 = vmatpush1.msra.mxu0 %v195
    %1934 = vmatprep.subr.mxu0 %v200
    %1935 = vmatpush1.msra.mxu0 %v199
    %1936 = vmatprep.subr.mxu0 %v204
    %1937 = vmatpush1.msra.mxu0 %v203
    %1938 = vmatprep.subr.mxu0 %v208
    %1939 = vmatpush1.msra.mxu0 %v207
    %1940 = vmatprep.subr.mxu0 %v212
    %1941 = vmatpush1.msra.mxu0 %v211
    %1942 = vmatprep.subr.mxu0 %v216
    %1943 = vmatpush1.msra.mxu0 %v215
    %1944 = vmatprep.subr.mxu0 %v220
    %1945 = vmatpush1.msra.mxu0 %v219
    %1946 = vmatprep.subr.mxu0 %v224
    %1947 = vmatpush1.msra.mxu0 %v223
    %1948 = vmatprep.subr.mxu0 %v228
    %1949 = vmatpush1.msra.mxu0 %v227
    %1950 = vmatprep.subr.mxu0 %v232
    %1951 = vmatpush1.msra.mxu0 %v231
    %1952 = vmatprep.subr.mxu0 %v236
    %1953 = vmatpush1.msra.mxu0 %v235
    %1954 = vmatprep.subr.mxu0 %v240
    %1955 = vmatpush1.msra.mxu0 %v239
    %1956 = vmatprep.subr.mxu0 %v244
    %1957 = vmatpush1.msra.mxu0 %v243
    %1958 = vmatprep.subr.mxu0 %v248
    %1959 = vmatpush1.msra.mxu0 %v247
    %1960 = vmatprep.subr.mxu0 %v252
    %1961 = vmatpush1.msra.mxu0 %v251
    %1962 = vmatprep.subr.mxu0 %v256
    %1963 = vmatpush1.msra.mxu0 %v255
    %1964 = vmatprep.subr.mxu0 %v260
    %1965 = vmatpush1.msra.mxu0 %v259
    %1966 = vmatprep.subr.mxu0 %v264
    %1967 = vmatpush1.msra.mxu0 %v263
    %1968 = vmatprep.subr.mxu0 %v268
    %1969 = vmatpush1.msra.mxu0 %v267
    %1970 = vmatprep.subr.mxu0 %v272
    %1971 = vmatpush1.msra.mxu0 %v271
    %1972 = vmatprep.subr.mxu0 %v276
    %1973 = vmatpush1.msra.mxu0 %v275
    %1974 = vmatprep.subr.mxu0 %v280
    %1975 = vmatpush1.msra.mxu0 %v279
    %1976 = vmatprep.subr.mxu0 %v284
    %1977 = vmatpush1.msra.mxu0 %v283
    %1978 = vmatprep.subr.mxu0 %v288
    %1979 = vmatpush1.msra.mxu0 %v287
    %1980 = vmatprep.subr.mxu0 %v292
    %1981 = vmatpush1.msra.mxu0 %v291
    %1982 = vmatprep.subr.mxu0 %v296
    %1983 = vmatpush1.msra.mxu0 %v295
    %1984 = vmatprep.subr.mxu0 %v300
    %1985 = vmatpush1.msra.mxu0 %v299
    %1986 = vmatprep.subr.mxu0 %v304
    %1987 = vmatpush1.msra.mxu0 %v303
    %1988 = vmatprep.mubr.f32.mxu0 %v1684
    %1989 = vmatmul.mubr.f32.gmra.mrb[0].mxu0 %v1852
    %v1990 = vpop.f32.mrb[0].mxu0
    %v1991 = vadd.f32 %v508, %v1990
    %v1992 = vpop.f32.mrb[0].mxu0
    %v1993 = vadd.f32 %v512, %v1992
    %1994 = vdwg.mxu0
    %v1995 = vxor.u32 %v1920, 2147483648
    %v1996 = vmul.f32 %v1995, 1.442695
    %v1997 = vpow.pop %v1996
    %v1998 = vadd.f32 %v1997, 1.0
    %v1999 = vrcp.pop %v1998
    %v2000 = vmul.f32 1.0, %v1999
    %v2001 = vxor.u32 %v1922, 2147483648
    %v2002 = vmul.f32 %v2001, 1.442695
    %v2003 = vpow.pop %v2002
    %v2004 = vadd.f32 %v2003, 1.0
    %v2005 = vrcp.pop %v2004
    %v2006 = vmul.f32 1.0, %v2005
    %v2007 = vtanh.pop %v1991
    %v2008 = vxor.u32 %v1993, 2147483648
    %v2009 = vmul.f32 %v2008, 1.442695
    %v2010 = vpow.pop %v2009
    %v2011 = vadd.f32 %v2010, 1.0
    %v2012 = vrcp.pop %v2011
    %v2013 = vmul.f32 1.0, %v2012
    %v2014 = vmul.f32 %v2006, %v1682
    %v2015 = vmul.f32 %v2000, %v2007
    %v2016 = vadd.f32 %v2014, %v2015
    %v2017 = vtanh.pop %v2016
    %v2018 = vmul.f32 %v2013, %v2017
    %s2019 = scalar_lea.vmem %s0, 40
    %v2020 = vld [vmem:[%s2019] sm:$0xff]
    %2021 = vmatprep.subr.mxu0 %v49
    %2022 = vmatpush1.msra.mxu0 %v48
    %2023 = vmatprep.subr.mxu0 %v53
    %2024 = vmatpush1.msra.mxu0 %v52
    %2025 = vmatprep.subr.mxu0 %v57
    %2026 = vmatpush1.msra.mxu0 %v56
    %2027 = vmatprep.subr.mxu0 %v61
    %2028 = vmatpush1.msra.mxu0 %v60
    %2029 = vmatprep.subr.mxu0 %v65
    %2030 = vmatpush1.msra.mxu0 %v64
    %2031 = vmatprep.subr.mxu0 %v69
    %2032 = vmatpush1.msra.mxu0 %v68
    %2033 = vmatprep.subr.mxu0 %v73
    %2034 = vmatpush1.msra.mxu0 %v72
    %2035 = vmatprep.subr.mxu0 %v77
    %2036 = vmatpush1.msra.mxu0 %v76
    %2037 = vmatprep.subr.mxu0 %v81
    %2038 = vmatpush1.msra.mxu0 %v80
    %2039 = vmatprep.subr.mxu0 %v85
    %2040 = vmatpush1.msra.mxu0 %v84
    %2041 = vmatprep.subr.mxu0 %v89
    %2042 = vmatpush1.msra.mxu0 %v88
    %2043 = vmatprep.subr.mxu0 %v93
    %2044 = vmatpush1.msra.mxu0 %v92
    %2045 = vmatprep.subr.mxu0 %v97
    %2046 = vmatpush1.msra.mxu0 %v96
    %2047 = vmatprep.subr.mxu0 %v101
    %2048 = vmatpush1.msra.mxu0 %v100
    %2049 = vmatprep.subr.mxu0 %v105
    %2050 = vmatpush1.msra.mxu0 %v104
    %2051 = vmatprep.subr.mxu0 %v109
    %2052 = vmatpush1.msra.mxu0 %v108
    %2053 = vmatprep.subr.mxu0 %v113
    %2054 = vmatpush1.msra.mxu0 %v112
    %2055 = vmatprep.subr.mxu0 %v117
    %2056 = vmatpush1.msra.mxu0 %v116
    %2057 = vmatprep.subr.mxu0 %v121
    %2058 = vmatpush1.msra.mxu0 %v120
    %2059 = vmatprep.subr.mxu0 %v125
    %2060 = vmatpush1.msra.mxu0 %v124
    %2061 = vmatprep.subr.mxu0 %v129
    %2062 = vmatpush1.msra.mxu0 %v128
    %2063 = vmatprep.subr.mxu0 %v133
    %2064 = vmatpush1.msra.mxu0 %v132
    %2065 = vmatprep.subr.mxu0 %v137
    %2066 = vmatpush1.msra.mxu0 %v136
    %2067 = vmatprep.subr.mxu0 %v141
    %2068 = vmatpush1.msra.mxu0 %v140
    %2069 = vmatprep.subr.mxu0 %v145
    %2070 = vmatpush1.msra.mxu0 %v144
    %2071 = vmatprep.subr.mxu0 %v149
    %2072 = vmatpush1.msra.mxu0 %v148
    %2073 = vmatprep.subr.mxu0 %v153
    %2074 = vmatpush1.msra.mxu0 %v152
    %2075 = vmatprep.subr.mxu0 %v157
    %2076 = vmatpush1.msra.mxu0 %v156
    %2077 = vmatprep.subr.mxu0 %v161
    %2078 = vmatpush1.msra.mxu0 %v160
    %2079 = vmatprep.subr.mxu0 %v165
    %2080 = vmatpush1.msra.mxu0 %v164
    %2081 = vmatprep.subr.mxu0 %v169
    %2082 = vmatpush1.msra.mxu0 %v168
    %2083 = vmatprep.subr.mxu0 %v173
    %2084 = vmatpush1.msra.mxu0 %v172
    %2085 = vmatprep.mubr.f32.mxu0 %v1852
    %2086 = vmatmul.mubr.f32.gmra.mrb[0].mxu0 %v2020
    %v2087 = vpop.f32.mrb[0].mxu0
    %v2088 = vadd.f32 %v313, %v2087
    %v2089 = vpop.f32.mrb[0].mxu0
    %v2090 = vadd.f32 %v317, %v2089
    %2091 = vdwg.mxu0
    %2092 = vmatprep.subr.mxu0 %v51
    %2093 = vmatpush1.msra.mxu0 %v50
    %2094 = vmatprep.subr.mxu0 %v55
    %2095 = vmatpush1.msra.mxu0 %v54
    %2096 = vmatprep.subr.mxu0 %v59
    %2097 = vmatpush1.msra.mxu0 %v58
    %2098 = vmatprep.subr.mxu0 %v63
    %2099 = vmatpush1.msra.mxu0 %v62
    %2100 = vmatprep.subr.mxu0 %v67
    %2101 = vmatpush1.msra.mxu0 %v66
    %2102 = vmatprep.subr.mxu0 %v71
    %2103 = vmatpush1.msra.mxu0 %v70
    %2104 = vmatprep.subr.mxu0 %v75
    %2105 = vmatpush1.msra.mxu0 %v74
    %2106 = vmatprep.subr.mxu0 %v79
    %2107 = vmatpush1.msra.mxu0 %v78
    %2108 = vmatprep.subr.mxu0 %v83
    %2109 = vmatpush1.msra.mxu0 %v82
    %2110 = vmatprep.subr.mxu0 %v87
    %2111 = vmatpush1.msra.mxu0 %v86
    %2112 = vmatprep.subr.mxu0 %v91
    %2113 = vmatpush1.msra.mxu0 %v90
    %2114 = vmatprep.subr.mxu0 %v95
    %2115 = vmatpush1.msra.mxu0 %v94
    %2116 = vmatprep.subr.mxu0 %v99
    %2117 = vmatpush1.msra.mxu0 %v98
    %2118 = vmatprep.subr.mxu0 %v103
    %2119 = vmatpush1.msra.mxu0 %v102
    %2120 = vmatprep.subr.mxu0 %v107
    %2121 = vmatpush1.msra.mxu0 %v106
    %2122 = vmatprep.subr.mxu0 %v111
    %2123 = vmatpush1.msra.mxu0 %v110
    %2124 = vmatprep.subr.mxu0 %v115
    %2125 = vmatpush1.msra.mxu0 %v114
    %2126 = vmatprep.subr.mxu0 %v119
    %2127 = vmatpush1.msra.mxu0 %v118
    %2128 = vmatprep.subr.mxu0 %v123
    %2129 = vmatpush1.msra.mxu0 %v122
    %2130 = vmatprep.subr.mxu0 %v127
    %2131 = vmatpush1.msra.mxu0 %v126
    %2132 = vmatprep.subr.mxu0 %v131
    %2133 = vmatpush1.msra.mxu0 %v130
    %2134 = vmatprep.subr.mxu0 %v135
    %2135 = vmatpush1.msra.mxu0 %v134
    %2136 = vmatprep.subr.mxu0 %v139
    %2137 = vmatpush1.msra.mxu0 %v138
    %2138 = vmatprep.subr.mxu0 %v143
    %2139 = vmatpush1.msra.mxu0 %v142
    %2140 = vmatprep.subr.mxu0 %v147
    %2141 = vmatpush1.msra.mxu0 %v146
    %2142 = vmatprep.subr.mxu0 %v151
    %2143 = vmatpush1.msra.mxu0 %v150
    %2144 = vmatprep.subr.mxu0 %v155
    %2145 = vmatpush1.msra.mxu0 %v154
    %2146 = vmatprep.subr.mxu0 %v159
    %2147 = vmatpush1.msra.mxu0 %v158
    %2148 = vmatprep.subr.mxu0 %v163
    %2149 = vmatpush1.msra.mxu0 %v162
    %2150 = vmatprep.subr.mxu0 %v167
    %2151 = vmatpush1.msra.mxu0 %v166
    %2152 = vmatprep.subr.mxu0 %v171
    %2153 = vmatpush1.msra.mxu0 %v170
    %2154 = vmatprep.subr.mxu0 %v175
    %2155 = vmatpush1.msra.mxu0 %v174
    %2156 = vmatprep.mubr.f32.mxu0 %v1852
    %2157 = vmatmul.mubr.f32.gmra.mrb[0].mxu0 %v2020
    %v2158 = vpop.f32.mrb[0].mxu0
    %v2159 = vadd.f32 %v321, %v2158
    %v2160 = vpop.f32.mrb[0].mxu0
    %v2161 = vadd.f32 %v325, %v2160
    %2162 = vdwg.mxu0
    %v2163 = vxor.u32 %v2088, 2147483648
    %v2164 = vmul.f32 %v2163, 1.442695
    %v2165 = vpow.pop %v2164
    %v2166 = vadd.f32 %v2165, 1.0
    %v2167 = vrcp.pop %v2166
    %v2168 = vmul.f32 1.0, %v2167
    %v2169 = vxor.u32 %v2090, 2147483648
    %v2170 = vmul.f32 %v2169, 1.442695
    %v2171 = vpow.pop %v2170
    %v2172 = vadd.f32 %v2171, 1.0
    %v2173 = vrcp.pop %v2172
    %v2174 = vmul.f32 1.0, %v2173
    %v2175 = vtanh.pop %v2159
    %v2176 = vxor.u32 %v2161, 2147483648
    %v2177 = vmul.f32 %v2176, 1.442695
    %v2178 = vpow.pop %v2177
    %v2179 = vadd.f32 %v2178, 1.0
    %v2180 = vrcp.pop %v2179
    %v2181 = vmul.f32 1.0, %v2180
    %v2182 = vmul.f32 %v2174, %v1850
    %v2183 = vmul.f32 %v2168, %v2175
    %v2184 = vadd.f32 %v2182, %v2183
    %v2185 = vtanh.pop %v2184
    %v2186 = vmul.f32 %v2181, %v2185
    %2187 = vmatprep.subr.mxu0 %v178
    %2188 = vmatpush1.msra.mxu0 %v177
    %2189 = vmatprep.subr.mxu0 %v182
    %2190 = vmatpush1.msra.mxu0 %v181
    %2191 = vmatprep.subr.mxu0 %v186
    %2192 = vmatpush1.msra.mxu0 %v185
    %2193 = vmatprep.subr.mxu0 %v190
    %2194 = vmatpush1.msra.mxu0 %v189
    %2195 = vmatprep.subr.mxu0 %v194
    %2196 = vmatpush1.msra.mxu0 %v193
    %2197 = vmatprep.subr.mxu0 %v198
    %2198 = vmatpush1.msra.mxu0 %v197
    %2199 = vmatprep.subr.mxu0 %v202
    %2200 = vmatpush1.msra.mxu0 %v201
    %2201 = vmatprep.subr.mxu0 %v206
    %2202 = vmatpush1.msra.mxu0 %v205
    %2203 = vmatprep.subr.mxu0 %v210
    %2204 = vmatpush1.msra.mxu0 %v209
    %2205 = vmatprep.subr.mxu0 %v214
    %2206 = vmatpush1.msra.mxu0 %v213
    %2207 = vmatprep.subr.mxu0 %v218
    %2208 = vmatpush1.msra.mxu0 %v217
    %2209 = vmatprep.subr.mxu0 %v222
    %2210 = vmatpush1.msra.mxu0 %v221
    %2211 = vmatprep.subr.mxu0 %v226
    %2212 = vmatpush1.msra.mxu0 %v225
    %2213 = vmatprep.subr.mxu0 %v230
    %2214 = vmatpush1.msra.mxu0 %v229
    %2215 = vmatprep.subr.mxu0 %v234
    %2216 = vmatpush1.msra.mxu0 %v233
    %2217 = vmatprep.subr.mxu0 %v238
    %2218 = vmatpush1.msra.mxu0 %v237
    %2219 = vmatprep.subr.mxu0 %v242
    %2220 = vmatpush1.msra.mxu0 %v241
    %2221 = vmatprep.subr.mxu0 %v246
    %2222 = vmatpush1.msra.mxu0 %v245
    %2223 = vmatprep.subr.mxu0 %v250
    %2224 = vmatpush1.msra.mxu0 %v249
    %2225 = vmatprep.subr.mxu0 %v254
    %2226 = vmatpush1.msra.mxu0 %v253
    %2227 = vmatprep.subr.mxu0 %v258
    %2228 = vmatpush1.msra.mxu0 %v257
    %2229 = vmatprep.subr.mxu0 %v262
    %2230 = vmatpush1.msra.mxu0 %v261
    %2231 = vmatprep.subr.mxu0 %v266
    %2232 = vmatpush1.msra.mxu0 %v265
    %2233 = vmatprep.subr.mxu0 %v270
    %2234 = vmatpush1.msra.mxu0 %v269
    %2235 = vmatprep.subr.mxu0 %v274
    %2236 = vmatpush1.msra.mxu0 %v273
    %2237 = vmatprep.subr.mxu0 %v278
    %2238 = vmatpush1.msra.mxu0 %v277
    %2239 = vmatprep.subr.mxu0 %v282
    %2240 = vmatpush1.msra.mxu0 %v281
    %2241 = vmatprep.subr.mxu0 %v286
    %2242 = vmatpush1.msra.mxu0 %v285
    %2243 = vmatprep.subr.mxu0 %v290
    %2244 = vmatpush1.msra.mxu0 %v289
    %2245 = vmatprep.subr.mxu0 %v294
    %2246 = vmatpush1.msra.mxu0 %v293
    %2247 = vmatprep.subr.mxu0 %v298
    %2248 = vmatpush1.msra.mxu0 %v297
    %2249 = vmatprep.subr.mxu0 %v302
    %2250 = vmatpush1.msra.mxu0 %v301
    %2251 = vmatprep.mubr.f32.mxu0 %v2018
    %2252 = vmatmul.mubr.f32.gmra.mrb[0].mxu0 %v2186
    %v2253 = vpop.f32.mrb[0].mxu0
    %v2254 = vadd.f32 %v500, %v2253
    %v2255 = vpop.f32.mrb[0].mxu0
    %v2256 = vadd.f32 %v504, %v2255
    %2257 = vdwg.mxu0
    %2258 = vmatprep.subr.mxu0 %v180
    %2259 = vmatpush1.msra.mxu0 %v179
    %2260 = vmatprep.subr.mxu0 %v184
    %2261 = vmatpush1.msra.mxu0 %v183
    %2262 = vmatprep.subr.mxu0 %v188
    %2263 = vmatpush1.msra.mxu0 %v187
    %2264 = vmatprep.subr.mxu0 %v192
    %2265 = vmatpush1.msra.mxu0 %v191
    %2266 = vmatprep.subr.mxu0 %v196
    %2267 = vmatpush1.msra.mxu0 %v195
    %2268 = vmatprep.subr.mxu0 %v200
    %2269 = vmatpush1.msra.mxu0 %v199
    %2270 = vmatprep.subr.mxu0 %v204
    %2271 = vmatpush1.msra.mxu0 %v203
    %2272 = vmatprep.subr.mxu0 %v208
    %2273 = vmatpush1.msra.mxu0 %v207
    %2274 = vmatprep.subr.mxu0 %v212
    %2275 = vmatpush1.msra.mxu0 %v211
    %2276 = vmatprep.subr.mxu0 %v216
    %2277 = vmatpush1.msra.mxu0 %v215
    %2278 = vmatprep.subr.mxu0 %v220
    %2279 = vmatpush1.msra.mxu0 %v219
    %2280 = vmatprep.subr.mxu0 %v224
    %2281 = vmatpush1.msra.mxu0 %v223
    %2282 = vmatprep.subr.mxu0 %v228
    %2283 = vmatpush1.msra.mxu0 %v227
    %2284 = vmatprep.subr.mxu0 %v232
    %2285 = vmatpush1.msra.mxu0 %v231
    %2286 = vmatprep.subr.mxu0 %v236
    %2287 = vmatpush1.msra.mxu0 %v235
    %2288 = vmatprep.subr.mxu0 %v240
    %2289 = vmatpush1.msra.mxu0 %v239
    %2290 = vmatprep.subr.mxu0 %v244
    %2291 = vmatpush1.msra.mxu0 %v243
    %2292 = vmatprep.subr.mxu0 %v248
    %2293 = vmatpush1.msra.mxu0 %v247
    %2294 = vmatprep.subr.mxu0 %v252
    %2295 = vmatpush1.msra.mxu0 %v251
    %2296 = vmatprep.subr.mxu0 %v256
    %2297 = vmatpush1.msra.mxu0 %v255
    %2298 = vmatprep.subr.mxu0 %v260
    %2299 = vmatpush1.msra.mxu0 %v259
    %2300 = vmatprep.subr.mxu0 %v264
    %2301 = vmatpush1.msra.mxu0 %v263
    %2302 = vmatprep.subr.mxu0 %v268
    %2303 = vmatpush1.msra.mxu0 %v267
    %2304 = vmatprep.subr.mxu0 %v272
    %2305 = vmatpush1.msra.mxu0 %v271
    %2306 = vmatprep.subr.mxu0 %v276
    %2307 = vmatpush1.msra.mxu0 %v275
    %2308 = vmatprep.subr.mxu0 %v280
    %2309 = vmatpush1.msra.mxu0 %v279
    %2310 = vmatprep.subr.mxu0 %v284
    %2311 = vmatpush1.msra.mxu0 %v283
    %2312 = vmatprep.subr.mxu0 %v288
    %2313 = vmatpush1.msra.mxu0 %v287
    %2314 = vmatprep.subr.mxu0 %v292
    %2315 = vmatpush1.msra.mxu0 %v291
    %2316 = vmatprep.subr.mxu0 %v296
    %2317 = vmatpush1.msra.mxu0 %v295
    %2318 = vmatprep.subr.mxu0 %v300
    %2319 = vmatpush1.msra.mxu0 %v299
    %2320 = vmatprep.subr.mxu0 %v304
    %2321 = vmatpush1.msra.mxu0 %v303
    %2322 = vmatprep.mubr.f32.mxu0 %v2018
    %2323 = vmatmul.mubr.f32.gmra.mrb[0].mxu0 %v2186
    %v2324 = vpop.f32.mrb[0].mxu0
    %v2325 = vadd.f32 %v508, %v2324
    %v2326 = vpop.f32.mrb[0].mxu0
    %v2327 = vadd.f32 %v512, %v2326
    %2328 = vdwg.mxu0
    %v2329 = vxor.u32 %v2254, 2147483648
    %v2330 = vmul.f32 %v2329, 1.442695
    %v2331 = vpow.pop %v2330
    %v2332 = vadd.f32 %v2331, 1.0
    %v2333 = vrcp.pop %v2332
    %v2334 = vmul.f32 1.0, %v2333
    %v2335 = vxor.u32 %v2256, 2147483648
    %v2336 = vmul.f32 %v2335, 1.442695
    %v2337 = vpow.pop %v2336
    %v2338 = vadd.f32 %v2337, 1.0
    %v2339 = vrcp.pop %v2338
    %v2340 = vmul.f32 1.0, %v2339
    %v2341 = vtanh.pop %v2325
    %v2342 = vxor.u32 %v2327, 2147483648
    %v2343 = vmul.f32 %v2342, 1.442695
    %v2344 = vpow.pop %v2343
    %v2345 = vadd.f32 %v2344, 1.0
    %v2346 = vrcp.pop %v2345
    %v2347 = vmul.f32 1.0, %v2346
    %v2348 = vmul.f32 %v2340, %v2016
    %v2349 = vmul.f32 %v2334, %v2341
    %v2350 = vadd.f32 %v2348, %v2349
    %v2351 = vtanh.pop %v2350
    %v2352 = vmul.f32 %v2347, %v2351
    %s2353 = scalar_lea.vmem %s0, 48
    %v2354 = vld [vmem:[%s2353] sm:$0xff]
    %2355 = vmatprep.subr.mxu0 %v49
    %2356 = vmatpush1.msra.mxu0 %v48
    %2357 = vmatprep.subr.mxu0 %v53
    %2358 = vmatpush1.msra.mxu0 %v52
    %2359 = vmatprep.subr.mxu0 %v57
    %2360 = vmatpush1.msra.mxu0 %v56
    %2361 = vmatprep.subr.mxu0 %v61
    %2362 = vmatpush1.msra.mxu0 %v60
    %2363 = vmatprep.subr.mxu0 %v65
    %2364 = vmatpush1.msra.mxu0 %v64
    %2365 = vmatprep.subr.mxu0 %v69
    %2366 = vmatpush1.msra.mxu0 %v68
    %2367 = vmatprep.subr.mxu0 %v73
    %2368 = vmatpush1.msra.mxu0 %v72
    %2369 = vmatprep.subr.mxu0 %v77
    %2370 = vmatpush1.msra.mxu0 %v76
    %2371 = vmatprep.subr.mxu0 %v81
    %2372 = vmatpush1.msra.mxu0 %v80
    %2373 = vmatprep.subr.mxu0 %v85
    %2374 = vmatpush1.msra.mxu0 %v84
    %2375 = vmatprep.subr.mxu0 %v89
    %2376 = vmatpush1.msra.mxu0 %v88
    %2377 = vmatprep.subr.mxu0 %v93
    %2378 = vmatpush1.msra.mxu0 %v92
    %2379 = vmatprep.subr.mxu0 %v97
    %2380 = vmatpush1.msra.mxu0 %v96
    %2381 = vmatprep.subr.mxu0 %v101
    %2382 = vmatpush1.msra.mxu0 %v100
    %2383 = vmatprep.subr.mxu0 %v105
    %2384 = vmatpush1.msra.mxu0 %v104
    %2385 = vmatprep.subr.mxu0 %v109
    %2386 = vmatpush1.msra.mxu0 %v108
    %2387 = vmatprep.subr.mxu0 %v113
    %2388 = vmatpush1.msra.mxu0 %v112
    %2389 = vmatprep.subr.mxu0 %v117
    %2390 = vmatpush1.msra.mxu0 %v116
    %2391 = vmatprep.subr.mxu0 %v121
    %2392 = vmatpush1.msra.mxu0 %v120
    %2393 = vmatprep.subr.mxu0 %v125
    %2394 = vmatpush1.msra.mxu0 %v124
    %2395 = vmatprep.subr.mxu0 %v129
    %2396 = vmatpush1.msra.mxu0 %v128
    %2397 = vmatprep.subr.mxu0 %v133
    %2398 = vmatpush1.msra.mxu0 %v132
    %2399 = vmatprep.subr.mxu0 %v137
    %2400 = vmatpush1.msra.mxu0 %v136
    %2401 = vmatprep.subr.mxu0 %v141
    %2402 = vmatpush1.msra.mxu0 %v140
    %2403 = vmatprep.subr.mxu0 %v145
    %2404 = vmatpush1.msra.mxu0 %v144
    %2405 = vmatprep.subr.mxu0 %v149
    %2406 = vmatpush1.msra.mxu0 %v148
    %2407 = vmatprep.subr.mxu0 %v153
    %2408 = vmatpush1.msra.mxu0 %v152
    %2409 = vmatprep.subr.mxu0 %v157
    %2410 = vmatpush1.msra.mxu0 %v156
    %2411 = vmatprep.subr.mxu0 %v161
    %2412 = vmatpush1.msra.mxu0 %v160
    %2413 = vmatprep.subr.mxu0 %v165
    %2414 = vmatpush1.msra.mxu0 %v164
    %2415 = vmatprep.subr.mxu0 %v169
    %2416 = vmatpush1.msra.mxu0 %v168
    %2417 = vmatprep.subr.mxu0 %v173
    %2418 = vmatpush1.msra.mxu0 %v172
    %2419 = vmatprep.mubr.f32.mxu0 %v2186
    %2420 = vmatmul.mubr.f32.gmra.mrb[0].mxu0 %v2354
    %v2421 = vpop.f32.mrb[0].mxu0
    %v2422 = vadd.f32 %v313, %v2421
    %v2423 = vpop.f32.mrb[0].mxu0
    %v2424 = vadd.f32 %v317, %v2423
    %2425 = vdwg.mxu0
    %2426 = vmatprep.subr.mxu0 %v51
    %2427 = vmatpush1.msra.mxu0 %v50
    %2428 = vmatprep.subr.mxu0 %v55
    %2429 = vmatpush1.msra.mxu0 %v54
    %2430 = vmatprep.subr.mxu0 %v59
    %2431 = vmatpush1.msra.mxu0 %v58
    %2432 = vmatprep.subr.mxu0 %v63
    %2433 = vmatpush1.msra.mxu0 %v62
    %2434 = vmatprep.subr.mxu0 %v67
    %2435 = vmatpush1.msra.mxu0 %v66
    %2436 = vmatprep.subr.mxu0 %v71
    %2437 = vmatpush1.msra.mxu0 %v70
    %2438 = vmatprep.subr.mxu0 %v75
    %2439 = vmatpush1.msra.mxu0 %v74
    %2440 = vmatprep.subr.mxu0 %v79
    %2441 = vmatpush1.msra.mxu0 %v78
    %2442 = vmatprep.subr.mxu0 %v83
    %2443 = vmatpush1.msra.mxu0 %v82
    %2444 = vmatprep.subr.mxu0 %v87
    %2445 = vmatpush1.msra.mxu0 %v86
    %2446 = vmatprep.subr.mxu0 %v91
    %2447 = vmatpush1.msra.mxu0 %v90
    %2448 = vmatprep.subr.mxu0 %v95
    %2449 = vmatpush1.msra.mxu0 %v94
    %2450 = vmatprep.subr.mxu0 %v99
    %2451 = vmatpush1.msra.mxu0 %v98
    %2452 = vmatprep.subr.mxu0 %v103
    %2453 = vmatpush1.msra.mxu0 %v102
    %2454 = vmatprep.subr.mxu0 %v107
    %2455 = vmatpush1.msra.mxu0 %v106
    %2456 = vmatprep.subr.mxu0 %v111
    %2457 = vmatpush1.msra.mxu0 %v110
    %2458 = vmatprep.subr.mxu0 %v115
    %2459 = vmatpush1.msra.mxu0 %v114
    %2460 = vmatprep.subr.mxu0 %v119
    %2461 = vmatpush1.msra.mxu0 %v118
    %2462 = vmatprep.subr.mxu0 %v123
    %2463 = vmatpush1.msra.mxu0 %v122
    %2464 = vmatprep.subr.mxu0 %v127
    %2465 = vmatpush1.msra.mxu0 %v126
    %2466 = vmatprep.subr.mxu0 %v131
    %2467 = vmatpush1.msra.mxu0 %v130
    %2468 = vmatprep.subr.mxu0 %v135
    %2469 = vmatpush1.msra.mxu0 %v134
    %2470 = vmatprep.subr.mxu0 %v139
    %2471 = vmatpush1.msra.mxu0 %v138
    %2472 = vmatprep.subr.mxu0 %v143
    %2473 = vmatpush1.msra.mxu0 %v142
    %2474 = vmatprep.subr.mxu0 %v147
    %2475 = vmatpush1.msra.mxu0 %v146
    %2476 = vmatprep.subr.mxu0 %v151
    %2477 = vmatpush1.msra.mxu0 %v150
    %2478 = vmatprep.subr.mxu0 %v155
    %2479 = vmatpush1.msra.mxu0 %v154
    %2480 = vmatprep.subr.mxu0 %v159
    %2481 = vmatpush1.msra.mxu0 %v158
    %2482 = vmatprep.subr.mxu0 %v163
    %2483 = vmatpush1.msra.mxu0 %v162
    %2484 = vmatprep.subr.mxu0 %v167
    %2485 = vmatpush1.msra.mxu0 %v166
    %2486 = vmatprep.subr.mxu0 %v171
    %2487 = vmatpush1.msra.mxu0 %v170
    %2488 = vmatprep.subr.mxu0 %v175
    %2489 = vmatpush1.msra.mxu0 %v174
    %2490 = vmatprep.mubr.f32.mxu0 %v2186
    %2491 = vmatmul.mubr.f32.gmra.mrb[0].mxu0 %v2354
    %v2492 = vpop.f32.mrb[0].mxu0
    %v2493 = vadd.f32 %v321, %v2492
    %v2494 = vpop.f32.mrb[0].mxu0
    %v2495 = vadd.f32 %v325, %v2494
    %2496 = vdwg.mxu0
    %v2497 = vxor.u32 %v2422, 2147483648
    %v2498 = vmul.f32 %v2497, 1.442695
    %v2499 = vpow.pop %v2498
    %v2500 = vadd.f32 %v2499, 1.0
    %v2501 = vrcp.pop %v2500
    %v2502 = vmul.f32 1.0, %v2501
    %v2503 = vxor.u32 %v2424, 2147483648
    %v2504 = vmul.f32 %v2503, 1.442695
    %v2505 = vpow.pop %v2504
    %v2506 = vadd.f32 %v2505, 1.0
    %v2507 = vrcp.pop %v2506
    %v2508 = vmul.f32 1.0, %v2507
    %v2509 = vtanh.pop %v2493
    %v2510 = vxor.u32 %v2495, 2147483648
    %v2511 = vmul.f32 %v2510, 1.442695
    %v2512 = vpow.pop %v2511
    %v2513 = vadd.f32 %v2512, 1.0
    %v2514 = vrcp.pop %v2513
    %v2515 = vmul.f32 1.0, %v2514
    %v2516 = vmul.f32 %v2508, %v2184
    %v2517 = vmul.f32 %v2502, %v2509
    %v2518 = vadd.f32 %v2516, %v2517
    %v2519 = vtanh.pop %v2518
    %v2520 = vmul.f32 %v2515, %v2519
    %2521 = vmatprep.subr.mxu0 %v178
    %2522 = vmatpush1.msra.mxu0 %v177
    %2523 = vmatprep.subr.mxu0 %v182
    %2524 = vmatpush1.msra.mxu0 %v181
    %2525 = vmatprep.subr.mxu0 %v186
    %2526 = vmatpush1.msra.mxu0 %v185
    %2527 = vmatprep.subr.mxu0 %v190
    %2528 = vmatpush1.msra.mxu0 %v189
    %2529 = vmatprep.subr.mxu0 %v194
    %2530 = vmatpush1.msra.mxu0 %v193
    %2531 = vmatprep.subr.mxu0 %v198
    %2532 = vmatpush1.msra.mxu0 %v197
    %2533 = vmatprep.subr.mxu0 %v202
    %2534 = vmatpush1.msra.mxu0 %v201
    %2535 = vmatprep.subr.mxu0 %v206
    %2536 = vmatpush1.msra.mxu0 %v205
    %2537 = vmatprep.subr.mxu0 %v210
    %2538 = vmatpush1.msra.mxu0 %v209
    %2539 = vmatprep.subr.mxu0 %v214
    %2540 = vmatpush1.msra.mxu0 %v213
    %2541 = vmatprep.subr.mxu0 %v218
    %2542 = vmatpush1.msra.mxu0 %v217
    %2543 = vmatprep.subr.mxu0 %v222
    %2544 = vmatpush1.msra.mxu0 %v221
    %2545 = vmatprep.subr.mxu0 %v226
    %2546 = vmatpush1.msra.mxu0 %v225
    %2547 = vmatprep.subr.mxu0 %v230
    %2548 = vmatpush1.msra.mxu0 %v229
    %2549 = vmatprep.subr.mxu0 %v234
    %2550 = vmatpush1.msra.mxu0 %v233
    %2551 = vmatprep.subr.mxu0 %v238
    %2552 = vmatpush1.msra.mxu0 %v237
    %2553 = vmatprep.subr.mxu0 %v242
    %2554 = vmatpush1.msra.mxu0 %v241
    %2555 = vmatprep.subr.mxu0 %v246
    %2556 = vmatpush1.msra.mxu0 %v245
    %2557 = vmatprep.subr.mxu0 %v250
    %2558 = vmatpush1.msra.mxu0 %v249
    %2559 = vmatprep.subr.mxu0 %v254
    %2560 = vmatpush1.msra.mxu0 %v253
    %2561 = vmatprep.subr.mxu0 %v258
    %2562 = vmatpush1.msra.mxu0 %v257
    %2563 = vmatprep.subr.mxu0 %v262
    %2564 = vmatpush1.msra.mxu0 %v261
    %2565 = vmatprep.subr.mxu0 %v266
    %2566 = vmatpush1.msra.mxu0 %v265
    %2567 = vmatprep.subr.mxu0 %v270
    %2568 = vmatpush1.msra.mxu0 %v269
    %2569 = vmatprep.subr.mxu0 %v274
    %2570 = vmatpush1.msra.mxu0 %v273
    %2571 = vmatprep.subr.mxu0 %v278
    %2572 = vmatpush1.msra.mxu0 %v277
    %2573 = vmatprep.subr.mxu0 %v282
    %2574 = vmatpush1.msra.mxu0 %v281
    %2575 = vmatprep.subr.mxu0 %v286
    %2576 = vmatpush1.msra.mxu0 %v285
    %2577 = vmatprep.subr.mxu0 %v290
    %2578 = vmatpush1.msra.mxu0 %v289
    %2579 = vmatprep.subr.mxu0 %v294
    %2580 = vmatpush1.msra.mxu0 %v293
    %2581 = vmatprep.subr.mxu0 %v298
    %2582 = vmatpush1.msra.mxu0 %v297
    %2583 = vmatprep.subr.mxu0 %v302
    %2584 = vmatpush1.msra.mxu0 %v301
    %2585 = vmatprep.mubr.f32.mxu0 %v2352
    %2586 = vmatmul.mubr.f32.gmra.mrb[0].mxu0 %v2520
    %v2587 = vpop.f32.mrb[0].mxu0
    %v2588 = vadd.f32 %v500, %v2587
    %v2589 = vpop.f32.mrb[0].mxu0
    %v2590 = vadd.f32 %v504, %v2589
    %2591 = vdwg.mxu0
    %2592 = vmatprep.subr.mxu0 %v180
    %2593 = vmatpush1.msra.mxu0 %v179
    %2594 = vmatprep.subr.mxu0 %v184
    %2595 = vmatpush1.msra.mxu0 %v183
    %2596 = vmatprep.subr.mxu0 %v188
    %2597 = vmatpush1.msra.mxu0 %v187
    %2598 = vmatprep.subr.mxu0 %v192
    %2599 = vmatpush1.msra.mxu0 %v191
    %2600 = vmatprep.subr.mxu0 %v196
    %2601 = vmatpush1.msra.mxu0 %v195
    %2602 = vmatprep.subr.mxu0 %v200
    %2603 = vmatpush1.msra.mxu0 %v199
    %2604 = vmatprep.subr.mxu0 %v204
    %2605 = vmatpush1.msra.mxu0 %v203
    %2606 = vmatprep.subr.mxu0 %v208
    %2607 = vmatpush1.msra.mxu0 %v207
    %2608 = vmatprep.subr.mxu0 %v212
    %2609 = vmatpush1.msra.mxu0 %v211
    %2610 = vmatprep.subr.mxu0 %v216
    %2611 = vmatpush1.msra.mxu0 %v215
    %2612 = vmatprep.subr.mxu0 %v220
    %2613 = vmatpush1.msra.mxu0 %v219
    %2614 = vmatprep.subr.mxu0 %v224
    %2615 = vmatpush1.msra.mxu0 %v223
    %2616 = vmatprep.subr.mxu0 %v228
    %2617 = vmatpush1.msra.mxu0 %v227
    %2618 = vmatprep.subr.mxu0 %v232
    %2619 = vmatpush1.msra.mxu0 %v231
    %2620 = vmatprep.subr.mxu0 %v236
    %2621 = vmatpush1.msra.mxu0 %v235
    %2622 = vmatprep.subr.mxu0 %v240
    %2623 = vmatpush1.msra.mxu0 %v239
    %2624 = vmatprep.subr.mxu0 %v244
    %2625 = vmatpush1.msra.mxu0 %v243
    %2626 = vmatprep.subr.mxu0 %v248
    %2627 = vmatpush1.msra.mxu0 %v247
    %2628 = vmatprep.subr.mxu0 %v252
    %2629 = vmatpush1.msra.mxu0 %v251
    %2630 = vmatprep.subr.mxu0 %v256
    %2631 = vmatpush1.msra.mxu0 %v255
    %2632 = vmatprep.subr.mxu0 %v260
    %2633 = vmatpush1.msra.mxu0 %v259
    %2634 = vmatprep.subr.mxu0 %v264
    %2635 = vmatpush1.msra.mxu0 %v263
    %2636 = vmatprep.subr.mxu0 %v268
    %2637 = vmatpush1.msra.mxu0 %v267
    %2638 = vmatprep.subr.mxu0 %v272
    %2639 = vmatpush1.msra.mxu0 %v271
    %2640 = vmatprep.subr.mxu0 %v276
    %2641 = vmatpush1.msra.mxu0 %v275
    %2642 = vmatprep.subr.mxu0 %v280
    %2643 = vmatpush1.msra.mxu0 %v279
    %2644 = vmatprep.subr.mxu0 %v284
    %2645 = vmatpush1.msra.mxu0 %v283
    %2646 = vmatprep.subr.mxu0 %v288
    %2647 = vmatpush1.msra.mxu0 %v287
    %2648 = vmatprep.subr.mxu0 %v292
    %2649 = vmatpush1.msra.mxu0 %v291
    %2650 = vmatprep.subr.mxu0 %v296
    %2651 = vmatpush1.msra.mxu0 %v295
    %2652 = vmatprep.subr.mxu0 %v300
    %2653 = vmatpush1.msra.mxu0 %v299
    %2654 = vmatprep.subr.mxu0 %v304
    %2655 = vmatpush1.msra.mxu0 %v303
    %2656 = vmatprep.mubr.f32.mxu0 %v2352
    %2657 = vmatmul.mubr.f32.gmra.mrb[0].mxu0 %v2520
    %v2658 = vpop.f32.mrb[0].mxu0
    %v2659 = vadd.f32 %v508, %v2658
    %v2660 = vpop.f32.mrb[0].mxu0
    %v2661 = vadd.f32 %v512, %v2660
    %2662 = vdwg.mxu0
    %v2663 = vxor.u32 %v2588, 2147483648
    %v2664 = vmul.f32 %v2663, 1.442695
    %v2665 = vpow.pop %v2664
    %v2666 = vadd.f32 %v2665, 1.0
    %v2667 = vrcp.pop %v2666
    %v2668 = vmul.f32 1.0, %v2667
    %v2669 = vxor.u32 %v2590, 2147483648
    %v2670 = vmul.f32 %v2669, 1.442695
    %v2671 = vpow.pop %v2670
    %v2672 = vadd.f32 %v2671, 1.0
    %v2673 = vrcp.pop %v2672
    %v2674 = vmul.f32 1.0, %v2673
    %v2675 = vtanh.pop %v2659
    %v2676 = vxor.u32 %v2661, 2147483648
    %v2677 = vmul.f32 %v2676, 1.442695
    %v2678 = vpow.pop %v2677
    %v2679 = vadd.f32 %v2678, 1.0
    %v2680 = vrcp.pop %v2679
    %v2681 = vmul.f32 1.0, %v2680
    %v2682 = vmul.f32 %v2674, %v2350
    %v2683 = vmul.f32 %v2668, %v2675
    %v2684 = vadd.f32 %v2682, %v2683
    %v2685 = vtanh.pop %v2684
    %v2686 = vmul.f32 %v2681, %v2685
    %s2687 = scalar_lea.vmem %s0, 56
    %v2688 = vld [vmem:[%s2687] sm:$0xff]
    %2689 = vmatprep.subr.mxu0 %v49
    %2690 = vmatpush1.msra.mxu0 %v48
    %2691 = vmatprep.subr.mxu0 %v53
    %2692 = vmatpush1.msra.mxu0 %v52
    %2693 = vmatprep.subr.mxu0 %v57
    %2694 = vmatpush1.msra.mxu0 %v56
    %2695 = vmatprep.subr.mxu0 %v61
    %2696 = vmatpush1.msra.mxu0 %v60
    %2697 = vmatprep.subr.mxu0 %v65
    %2698 = vmatpush1.msra.mxu0 %v64
    %2699 = vmatprep.subr.mxu0 %v69
    %2700 = vmatpush1.msra.mxu0 %v68
    %2701 = vmatprep.subr.mxu0 %v73
    %2702 = vmatpush1.msra.mxu0 %v72
    %2703 = vmatprep.subr.mxu0 %v77
    %2704 = vmatpush1.msra.mxu0 %v76
    %2705 = vmatprep.subr.mxu0 %v81
    %2706 = vmatpush1.msra.mxu0 %v80
    %2707 = vmatprep.subr.mxu0 %v85
    %2708 = vmatpush1.msra.mxu0 %v84
    %2709 = vmatprep.subr.mxu0 %v89
    %2710 = vmatpush1.msra.mxu0 %v88
    %2711 = vmatprep.subr.mxu0 %v93
    %2712 = vmatpush1.msra.mxu0 %v92
    %2713 = vmatprep.subr.mxu0 %v97
    %2714 = vmatpush1.msra.mxu0 %v96
    %2715 = vmatprep.subr.mxu0 %v101
    %2716 = vmatpush1.msra.mxu0 %v100
    %2717 = vmatprep.subr.mxu0 %v105
    %2718 = vmatpush1.msra.mxu0 %v104
    %2719 = vmatprep.subr.mxu0 %v109
    %2720 = vmatpush1.msra.mxu0 %v108
    %2721 = vmatprep.subr.mxu0 %v113
    %2722 = vmatpush1.msra.mxu0 %v112
    %2723 = vmatprep.subr.mxu0 %v117
    %2724 = vmatpush1.msra.mxu0 %v116
    %2725 = vmatprep.subr.mxu0 %v121
    %2726 = vmatpush1.msra.mxu0 %v120
    %2727 = vmatprep.subr.mxu0 %v125
    %2728 = vmatpush1.msra.mxu0 %v124
    %2729 = vmatprep.subr.mxu0 %v129
    %2730 = vmatpush1.msra.mxu0 %v128
    %2731 = vmatprep.subr.mxu0 %v133
    %2732 = vmatpush1.msra.mxu0 %v132
    %2733 = vmatprep.subr.mxu0 %v137
    %2734 = vmatpush1.msra.mxu0 %v136
    %2735 = vmatprep.subr.mxu0 %v141
    %2736 = vmatpush1.msra.mxu0 %v140
    %2737 = vmatprep.subr.mxu0 %v145
    %2738 = vmatpush1.msra.mxu0 %v144
    %2739 = vmatprep.subr.mxu0 %v149
    %2740 = vmatpush1.msra.mxu0 %v148
    %2741 = vmatprep.subr.mxu0 %v153
    %2742 = vmatpush1.msra.mxu0 %v152
    %2743 = vmatprep.subr.mxu0 %v157
    %2744 = vmatpush1.msra.mxu0 %v156
    %2745 = vmatprep.subr.mxu0 %v161
    %2746 = vmatpush1.msra.mxu0 %v160
    %2747 = vmatprep.subr.mxu0 %v165
    %2748 = vmatpush1.msra.mxu0 %v164
    %2749 = vmatprep.subr.mxu0 %v169
    %2750 = vmatpush1.msra.mxu0 %v168
    %2751 = vmatprep.subr.mxu0 %v173
    %2752 = vmatpush1.msra.mxu0 %v172
    %2753 = vmatprep.mubr.f32.mxu0 %v2520
    %2754 = vmatmul.mubr.f32.gmra.mrb[0].mxu0 %v2688
    %v2755 = vpop.f32.mrb[0].mxu0
    %v2756 = vadd.f32 %v313, %v2755
    %v2757 = vpop.f32.mrb[0].mxu0
    %v2758 = vadd.f32 %v317, %v2757
    %2759 = vdwg.mxu0
    %2760 = vmatprep.subr.mxu0 %v51
    %2761 = vmatpush1.msra.mxu0 %v50
    %2762 = vmatprep.subr.mxu0 %v55
    %2763 = vmatpush1.msra.mxu0 %v54
    %2764 = vmatprep.subr.mxu0 %v59
    %2765 = vmatpush1.msra.mxu0 %v58
    %2766 = vmatprep.subr.mxu0 %v63
    %2767 = vmatpush1.msra.mxu0 %v62
    %2768 = vmatprep.subr.mxu0 %v67
    %2769 = vmatpush1.msra.mxu0 %v66
    %2770 = vmatprep.subr.mxu0 %v71
    %2771 = vmatpush1.msra.mxu0 %v70
    %2772 = vmatprep.subr.mxu0 %v75
    %2773 = vmatpush1.msra.mxu0 %v74
    %2774 = vmatprep.subr.mxu0 %v79
    %2775 = vmatpush1.msra.mxu0 %v78
    %2776 = vmatprep.subr.mxu0 %v83
    %2777 = vmatpush1.msra.mxu0 %v82
    %2778 = vmatprep.subr.mxu0 %v87
    %2779 = vmatpush1.msra.mxu0 %v86
    %2780 = vmatprep.subr.mxu0 %v91
    %2781 = vmatpush1.msra.mxu0 %v90
    %2782 = vmatprep.subr.mxu0 %v95
    %2783 = vmatpush1.msra.mxu0 %v94
    %2784 = vmatprep.subr.mxu0 %v99
    %2785 = vmatpush1.msra.mxu0 %v98
    %2786 = vmatprep.subr.mxu0 %v103
    %2787 = vmatpush1.msra.mxu0 %v102
    %2788 = vmatprep.subr.mxu0 %v107
    %2789 = vmatpush1.msra.mxu0 %v106
    %2790 = vmatprep.subr.mxu0 %v111
    %2791 = vmatpush1.msra.mxu0 %v110
    %2792 = vmatprep.subr.mxu0 %v115
    %2793 = vmatpush1.msra.mxu0 %v114
    %2794 = vmatprep.subr.mxu0 %v119
    %2795 = vmatpush1.msra.mxu0 %v118
    %2796 = vmatprep.subr.mxu0 %v123
    %2797 = vmatpush1.msra.mxu0 %v122
    %2798 = vmatprep.subr.mxu0 %v127
    %2799 = vmatpush1.msra.mxu0 %v126
    %2800 = vmatprep.subr.mxu0 %v131
    %2801 = vmatpush1.msra.mxu0 %v130
    %2802 = vmatprep.subr.mxu0 %v135
    %2803 = vmatpush1.msra.mxu0 %v134
    %2804 = vmatprep.subr.mxu0 %v139
    %2805 = vmatpush1.msra.mxu0 %v138
    %2806 = vmatprep.subr.mxu0 %v143
    %2807 = vmatpush1.msra.mxu0 %v142
    %2808 = vmatprep.subr.mxu0 %v147
    %2809 = vmatpush1.msra.mxu0 %v146
    %2810 = vmatprep.subr.mxu0 %v151
    %2811 = vmatpush1.msra.mxu0 %v150
    %2812 = vmatprep.subr.mxu0 %v155
    %2813 = vmatpush1.msra.mxu0 %v154
    %2814 = vmatprep.subr.mxu0 %v159
    %2815 = vmatpush1.msra.mxu0 %v158
    %2816 = vmatprep.subr.mxu0 %v163
    %2817 = vmatpush1.msra.mxu0 %v162
    %2818 = vmatprep.subr.mxu0 %v167
    %2819 = vmatpush1.msra.mxu0 %v166
    %2820 = vmatprep.subr.mxu0 %v171
    %2821 = vmatpush1.msra.mxu0 %v170
    %2822 = vmatprep.subr.mxu0 %v175
    %2823 = vmatpush1.msra.mxu0 %v174
    %2824 = vmatprep.mubr.f32.mxu0 %v2520
    %2825 = vmatmul.mubr.f32.gmra.mrb[0].mxu0 %v2688
    %v2826 = vpop.f32.mrb[0].mxu0
    %v2827 = vadd.f32 %v321, %v2826
    %v2828 = vpop.f32.mrb[0].mxu0
    %v2829 = vadd.f32 %v325, %v2828
    %2830 = vdwg.mxu0
    %v2831 = vxor.u32 %v2756, 2147483648
    %v2832 = vmul.f32 %v2831, 1.442695
    %v2833 = vpow.pop %v2832
    %v2834 = vadd.f32 %v2833, 1.0
    %v2835 = vrcp.pop %v2834
    %v2836 = vmul.f32 1.0, %v2835
    %v2837 = vxor.u32 %v2758, 2147483648
    %v2838 = vmul.f32 %v2837, 1.442695
    %v2839 = vpow.pop %v2838
    %v2840 = vadd.f32 %v2839, 1.0
    %v2841 = vrcp.pop %v2840
    %v2842 = vmul.f32 1.0, %v2841
    %v2843 = vtanh.pop %v2827
    %v2844 = vxor.u32 %v2829, 2147483648
    %v2845 = vmul.f32 %v2844, 1.442695
    %v2846 = vpow.pop %v2845
    %v2847 = vadd.f32 %v2846, 1.0
    %v2848 = vrcp.pop %v2847
    %v2849 = vmul.f32 1.0, %v2848
    %v2850 = vmul.f32 %v2842, %v2518
    %v2851 = vmul.f32 %v2836, %v2843
    %v2852 = vadd.f32 %v2850, %v2851
    %v2853 = vtanh.pop %v2852
    %v2854 = vmul.f32 %v2849, %v2853
    %2855 = vmatprep.subr.mxu0 %v178
    %2856 = vmatpush1.msra.mxu0 %v177
    %2857 = vmatprep.subr.mxu0 %v182
    %2858 = vmatpush1.msra.mxu0 %v181
    %2859 = vmatprep.subr.mxu0 %v186
    %2860 = vmatpush1.msra.mxu0 %v185
    %2861 = vmatprep.subr.mxu0 %v190
    %2862 = vmatpush1.msra.mxu0 %v189
    %2863 = vmatprep.subr.mxu0 %v194
    %2864 = vmatpush1.msra.mxu0 %v193
    %2865 = vmatprep.subr.mxu0 %v198
    %2866 = vmatpush1.msra.mxu0 %v197
    %2867 = vmatprep.subr.mxu0 %v202
    %2868 = vmatpush1.msra.mxu0 %v201
    %2869 = vmatprep.subr.mxu0 %v206
    %2870 = vmatpush1.msra.mxu0 %v205
    %2871 = vmatprep.subr.mxu0 %v210
    %2872 = vmatpush1.msra.mxu0 %v209
    %2873 = vmatprep.subr.mxu0 %v214
    %2874 = vmatpush1.msra.mxu0 %v213
    %2875 = vmatprep.subr.mxu0 %v218
    %2876 = vmatpush1.msra.mxu0 %v217
    %2877 = vmatprep.subr.mxu0 %v222
    %2878 = vmatpush1.msra.mxu0 %v221
    %2879 = vmatprep.subr.mxu0 %v226
    %2880 = vmatpush1.msra.mxu0 %v225
    %2881 = vmatprep.subr.mxu0 %v230
    %2882 = vmatpush1.msra.mxu0 %v229
    %2883 = vmatprep.subr.mxu0 %v234
    %2884 = vmatpush1.msra.mxu0 %v233
    %2885 = vmatprep.subr.mxu0 %v238
    %2886 = vmatpush1.msra.mxu0 %v237
    %2887 = vmatprep.subr.mxu0 %v242
    %2888 = vmatpush1.msra.mxu0 %v241
    %2889 = vmatprep.subr.mxu0 %v246
    %2890 = vmatpush1.msra.mxu0 %v245
    %2891 = vmatprep.subr.mxu0 %v250
    %2892 = vmatpush1.msra.mxu0 %v249
    %2893 = vmatprep.subr.mxu0 %v254
    %2894 = vmatpush1.msra.mxu0 %v253
    %2895 = vmatprep.subr.mxu0 %v258
    %2896 = vmatpush1.msra.mxu0 %v257
    %2897 = vmatprep.subr.mxu0 %v262
    %2898 = vmatpush1.msra.mxu0 %v261
    %2899 = vmatprep.subr.mxu0 %v266
    %2900 = vmatpush1.msra.mxu0 %v265
    %2901 = vmatprep.subr.mxu0 %v270
    %2902 = vmatpush1.msra.mxu0 %v269
    %2903 = vmatprep.subr.mxu0 %v274
    %2904 = vmatpush1.msra.mxu0 %v273
    %2905 = vmatprep.subr.mxu0 %v278
    %2906 = vmatpush1.msra.mxu0 %v277
    %2907 = vmatprep.subr.mxu0 %v282
    %2908 = vmatpush1.msra.mxu0 %v281
    %2909 = vmatprep.subr.mxu0 %v286
    %2910 = vmatpush1.msra.mxu0 %v285
    %2911 = vmatprep.subr.mxu0 %v290
    %2912 = vmatpush1.msra.mxu0 %v289
    %2913 = vmatprep.subr.mxu0 %v294
    %2914 = vmatpush1.msra.mxu0 %v293
    %2915 = vmatprep.subr.mxu0 %v298
    %2916 = vmatpush1.msra.mxu0 %v297
    %2917 = vmatprep.subr.mxu0 %v302
    %2918 = vmatpush1.msra.mxu0 %v301
    %2919 = vmatprep.mubr.f32.mxu0 %v2686
    %2920 = vmatmul.mubr.f32.gmra.mrb[0].mxu0 %v2854
    %v2921 = vpop.f32.mrb[0].mxu0
    %v2922 = vadd.f32 %v500, %v2921
    %v2923 = vpop.f32.mrb[0].mxu0
    %v2924 = vadd.f32 %v504, %v2923
    %2925 = vdwg.mxu0
    %2926 = vmatprep.subr.mxu0 %v180
    %2927 = vmatpush1.msra.mxu0 %v179
    %2928 = vmatprep.subr.mxu0 %v184
    %2929 = vmatpush1.msra.mxu0 %v183
    %2930 = vmatprep.subr.mxu0 %v188
    %2931 = vmatpush1.msra.mxu0 %v187
    %2932 = vmatprep.subr.mxu0 %v192
    %2933 = vmatpush1.msra.mxu0 %v191
    %2934 = vmatprep.subr.mxu0 %v196
    %2935 = vmatpush1.msra.mxu0 %v195
    %2936 = vmatprep.subr.mxu0 %v200
    %2937 = vmatpush1.msra.mxu0 %v199
    %2938 = vmatprep.subr.mxu0 %v204
    %2939 = vmatpush1.msra.mxu0 %v203
    %2940 = vmatprep.subr.mxu0 %v208
    %2941 = vmatpush1.msra.mxu0 %v207
    %2942 = vmatprep.subr.mxu0 %v212
    %2943 = vmatpush1.msra.mxu0 %v211
    %2944 = vmatprep.subr.mxu0 %v216
    %2945 = vmatpush1.msra.mxu0 %v215
    %2946 = vmatprep.subr.mxu0 %v220
    %2947 = vmatpush1.msra.mxu0 %v219
    %2948 = vmatprep.subr.mxu0 %v224
    %2949 = vmatpush1.msra.mxu0 %v223
    %2950 = vmatprep.subr.mxu0 %v228
    %2951 = vmatpush1.msra.mxu0 %v227
    %2952 = vmatprep.subr.mxu0 %v232
    %2953 = vmatpush1.msra.mxu0 %v231
    %2954 = vmatprep.subr.mxu0 %v236
    %2955 = vmatpush1.msra.mxu0 %v235
    %2956 = vmatprep.subr.mxu0 %v240
    %2957 = vmatpush1.msra.mxu0 %v239
    %2958 = vmatprep.subr.mxu0 %v244
    %2959 = vmatpush1.msra.mxu0 %v243
    %2960 = vmatprep.subr.mxu0 %v248
    %2961 = vmatpush1.msra.mxu0 %v247
    %2962 = vmatprep.subr.mxu0 %v252
    %2963 = vmatpush1.msra.mxu0 %v251
    %2964 = vmatprep.subr.mxu0 %v256
    %2965 = vmatpush1.msra.mxu0 %v255
    %2966 = vmatprep.subr.mxu0 %v260
    %2967 = vmatpush1.msra.mxu0 %v259
    %2968 = vmatprep.subr.mxu0 %v264
    %2969 = vmatpush1.msra.mxu0 %v263
    %2970 = vmatprep.subr.mxu0 %v268
    %2971 = vmatpush1.msra.mxu0 %v267
    %2972 = vmatprep.subr.mxu0 %v272
    %2973 = vmatpush1.msra.mxu0 %v271
    %2974 = vmatprep.subr.mxu0 %v276
    %2975 = vmatpush1.msra.mxu0 %v275
    %2976 = vmatprep.subr.mxu0 %v280
    %2977 = vmatpush1.msra.mxu0 %v279
    %2978 = vmatprep.subr.mxu0 %v284
    %2979 = vmatpush1.msra.mxu0 %v283
    %2980 = vmatprep.subr.mxu0 %v288
    %2981 = vmatpush1.msra.mxu0 %v287
    %2982 = vmatprep.subr.mxu0 %v292
    %2983 = vmatpush1.msra.mxu0 %v291
    %2984 = vmatprep.subr.mxu0 %v296
    %2985 = vmatpush1.msra.mxu0 %v295
    %2986 = vmatprep.subr.mxu0 %v300
    %2987 = vmatpush1.msra.mxu0 %v299
    %2988 = vmatprep.subr.mxu0 %v304
    %2989 = vmatpush1.msra.mxu0 %v303
    %2990 = vmatprep.mubr.f32.mxu0 %v2686
    %2991 = vmatmul.mubr.f32.gmra.mrb[0].mxu0 %v2854
    %v2992 = vpop.f32.mrb[0].mxu0
    %v2993 = vadd.f32 %v508, %v2992
    %v2994 = vpop.f32.mrb[0].mxu0
    %v2995 = vadd.f32 %v512, %v2994
    %2996 = vdwg.mxu0
    %v2997 = vxor.u32 %v2922, 2147483648
    %v2998 = vmul.f32 %v2997, 1.442695
    %v2999 = vpow.pop %v2998
    %v3000 = vadd.f32 %v2999, 1.0
    %v3001 = vrcp.pop %v3000
    %v3002 = vmul.f32 1.0, %v3001
    %v3003 = vxor.u32 %v2924, 2147483648
    %v3004 = vmul.f32 %v3003, 1.442695
    %v3005 = vpow.pop %v3004
    %v3006 = vadd.f32 %v3005, 1.0
    %v3007 = vrcp.pop %v3006
    %v3008 = vmul.f32 1.0, %v3007
    %v3009 = vtanh.pop %v2993
    %v3010 = vxor.u32 %v2995, 2147483648
    %v3011 = vmul.f32 %v3010, 1.442695
    %v3012 = vpow.pop %v3011
    %v3013 = vadd.f32 %v3012, 1.0
    %v3014 = vrcp.pop %v3013
    %v3015 = vmul.f32 1.0, %v3014
    %v3016 = vmul.f32 %v3008, %v2684
    %v3017 = vmul.f32 %v3002, %v3009
    %v3018 = vadd.f32 %v3016, %v3017
    %v3019 = vtanh.pop %v3018
    %v3020 = vmul.f32 %v3015, %v3019
    %v3021 = vld [vmem:[#allocation4] sm:$0xff]
    %v3022 = vld [vmem:[#allocation4 + $0x8] sm:$0xff]
    %v3023 = vld [vmem:[#allocation4 + $0x10] sm:$0xff]
    %v3024 = vld [vmem:[#allocation4 + $0x18] sm:$0xff]
    %v3025 = vld [vmem:[#allocation4 + $0x20] sm:$0xff]
    %v3026 = vld [vmem:[#allocation4 + $0x28] sm:$0xff]
    %v3027 = vld [vmem:[#allocation4 + $0x30] sm:$0xff]
    %v3028 = vld [vmem:[#allocation4 + $0x38] sm:$0xff]
    %v3029 = vld [vmem:[#allocation4 + $0x40] sm:$0xff]
    %v3030 = vld [vmem:[#allocation4 + $0x48] sm:$0xff]
    %v3031 = vld [vmem:[#allocation4 + $0x50] sm:$0xff]
    %v3032 = vld [vmem:[#allocation4 + $0x58] sm:$0xff]
    %v3033 = vld [vmem:[#allocation4 + $0x60] sm:$0xff]
    %v3034 = vld [vmem:[#allocation4 + $0x68] sm:$0xff]
    %v3035 = vld [vmem:[#allocation4 + $0x70] sm:$0xff]
    %v3036 = vld [vmem:[#allocation4 + $0x78] sm:$0xff]
    %v3037 = vld [vmem:[%s4] sm:$0x1]
    %v3039 = vlaneseq
    %v3040 = vshrl.u32 %v3039, 7
    %v3041 = vsub.s32 0, %v3040
    %v3042 = vrot.slane %v3037, %v3041
    %3044 = vmatprep.subr.mxu0 0.0
    %3045 = vmatpush1.msra.mxu0 %v3021
    %3046 = vmatprep.subr.mxu0 0.0
    %3047 = vmatpush1.msra.mxu0 %v3022
    %3048 = vmatprep.subr.mxu0 0.0
    %3049 = vmatpush1.msra.mxu0 %v3023
    %3050 = vmatprep.subr.mxu0 0.0
    %3051 = vmatpush1.msra.mxu0 %v3024
    %3052 = vmatprep.subr.mxu0 0.0
    %3053 = vmatpush1.msra.mxu0 %v3025
    %3054 = vmatprep.subr.mxu0 0.0
    %3055 = vmatpush1.msra.mxu0 %v3026
    %3056 = vmatprep.subr.mxu0 0.0
    %3057 = vmatpush1.msra.mxu0 %v3027
    %3058 = vmatprep.subr.mxu0 0.0
    %3059 = vmatpush1.msra.mxu0 %v3028
    %3060 = vmatprep.subr.mxu0 0.0
    %3061 = vmatpush1.msra.mxu0 %v3029
    %3062 = vmatprep.subr.mxu0 0.0
    %3063 = vmatpush1.msra.mxu0 %v3030
    %3064 = vmatprep.subr.mxu0 0.0
    %3065 = vmatpush1.msra.mxu0 %v3031
    %3066 = vmatprep.subr.mxu0 0.0
    %3067 = vmatpush1.msra.mxu0 %v3032
    %3068 = vmatprep.subr.mxu0 0.0
    %3069 = vmatpush1.msra.mxu0 %v3033
    %3070 = vmatprep.subr.mxu0 0.0
    %3071 = vmatpush1.msra.mxu0 %v3034
    %3072 = vmatprep.subr.mxu0 0.0
    %3073 = vmatpush1.msra.mxu0 %v3035
    %3074 = vmatprep.subr.mxu0 0.0
    %3075 = vmatpush1.msra.mxu0 %v3036
    %3076 = vmatprep.subr.mxu0 0.0
    %3077 = vmatpush1.msra.mxu0 0.0
    %3078 = vmatprep.subr.mxu0 0.0
    %3079 = vmatpush1.msra.mxu0 0.0
    %3080 = vmatprep.subr.mxu0 0.0
    %3081 = vmatpush1.msra.mxu0 0.0
    %3082 = vmatprep.subr.mxu0 0.0
    %3083 = vmatpush1.msra.mxu0 0.0
    %3084 = vmatprep.subr.mxu0 0.0
    %3085 = vmatpush1.msra.mxu0 0.0
    %3086 = vmatprep.subr.mxu0 0.0
    %3087 = vmatpush1.msra.mxu0 0.0
    %3088 = vmatprep.subr.mxu0 0.0
    %3089 = vmatpush1.msra.mxu0 0.0
    %3090 = vmatprep.subr.mxu0 0.0
    %3091 = vmatpush1.msra.mxu0 0.0
    %3092 = vmatprep.subr.mxu0 0.0
    %3093 = vmatpush1.msra.mxu0 0.0
    %3094 = vmatprep.subr.mxu0 0.0
    %3095 = vmatpush1.msra.mxu0 0.0
    %3096 = vmatprep.subr.mxu0 0.0
    %3097 = vmatpush1.msra.mxu0 0.0
    %3098 = vmatprep.subr.mxu0 0.0
    %3099 = vmatpush1.msra.mxu0 0.0
    %3100 = vmatprep.subr.mxu0 0.0
    %3101 = vmatpush1.msra.mxu0 0.0
    %3102 = vmatprep.subr.mxu0 0.0
    %3103 = vmatpush1.msra.mxu0 0.0
    %3104 = vmatprep.subr.mxu0 0.0
    %3105 = vmatpush1.msra.mxu0 0.0
    %3106 = vmatprep.subr.mxu0 0.0
    %3107 = vmatpush1.msra.mxu0 0.0
    %3108 = vmatprep.mubr.f32.mxu0 0.0
    %3109 = vmatmul.mubr.f32.gmra.mrb[0].mxu0 %v3020
    %v3110 = vpop.f32.mrb[0].mxu0
    %v3111 = vadd.f32 %v3042, %v3110
    %v3112 = vpop.f32.mrb[0].mxu0
    %3113 = vdwg.mxu0
    %3114 = vst [vmem:[%s5] sm:$0xff] %v3111
    // Predicated region
    $region30: #{olstm_forward.1} parent=1 // pred_check
      _
    $region31: #{olstm_forward.1} parent=1 // pred_check_branch
      %3116 = sbr.rel (0) target = $region33
    $region32: #{olstm_forward.1} parent=1 // pred_region
      _
    $region33: #{olstm_forward.1} parent=1 // pred_fallthru
      _
    // Predicated region
    $region34: #{olstm_forward.1} parent=1 // pred_check
      _
    $region35: #{olstm_forward.1} parent=1 // pred_check_branch
      %3118 = sbr.rel (0) target = $region37
    $region36: #{olstm_forward.1} parent=1 // pred_region
      _
    $region37: #{olstm_forward.1} parent=1 // pred_fallthru
      _
    %3119 = vsyncpa [#allocation3], 1
    %3120 = vsyncpa [#allocation5], 1

</llo_original>
